<compile_context>
chip_gen: v6e
topology: v6e:2x2x1
jax: 0.10.0
libtpu: 0.0.40
codegen_flags: <defaults>
</compile_context>

<pallas_src>
import math
import numpy as np
import jax
import jax.numpy as jnp
from jax.experimental import pallas as pl
from jax.experimental.pallas import tpu as pltpu

EMBED = 32          # embed_size
HEADS = 4           # heads
PER_DIM = EMBED // HEADS
FWD_EXP = 4         # forward_expansion
TIME_NUM = 288      # time_num
EPS = 1e-5          # nn.LayerNorm default eps


def _ttransformer_kernel(q_ref, dt_ref,
                         wqkv_ref, bqkv_ref, wfc_ref, wf1_ref, wf2_ref,
                         vec_ref, bf1_ref,
                         o_ref):
    G, T, C = q_ref.shape
    H, D = HEADS, PER_DIM
    M = G * T

    # x = temporal_embedding(arange(T)) + query      (dropout is identity in eval mode)
    x3 = q_ref[...] + dt_ref[...]                    # (G, T, C)
    x2 = x3.reshape(M, C)                            # layout-preserving (T % 8 == 0)

    # Fused block-diagonal Q/K/V projection; 1/sqrt(C) is folded into the Q columns.
    proj = jnp.dot(x2.astype(jnp.bfloat16), wqkv_ref[...],
                   preferred_element_type=jnp.float32) + bqkv_ref[...]     # (M, 3C)
    proj3 = proj.reshape(G, T, 3 * C)

    head_outs = []
    for h in range(H):                               # heads: static unroll (H = 4)
        qh = proj3[:, :, h * D:(h + 1) * D].astype(jnp.bfloat16)           # (G, T, D)
        kh = proj3[:, :, C + h * D:C + (h + 1) * D].astype(jnp.bfloat16)
        vh = proj3[:, :, 2 * C + h * D:2 * C + (h + 1) * D].astype(jnp.bfloat16)
        s = jnp.einsum("gqd,gkd->gqk", qh, kh,
                       preferred_element_type=jnp.float32)                 # (G, Tq, Tk)
        # NOTE: the torch code softmaxes dim=2 of (b,n,q,k,h) == the *query* axis
        # (axis=1 here), faithfully reproduced.
        s = s - jnp.max(s, axis=1, keepdims=True)
        e = jnp.exp(s)
        p = e * pl.reciprocal(jnp.sum(e, axis=1, keepdims=True), approx=True)
        head_outs.append(jnp.einsum("gqk,gkd->gqd", p.astype(jnp.bfloat16), vh,
                                    preferred_element_type=jnp.float32))   # (G, Tq, D)

    vec = vec_ref[...]                               # (6, C): bfc, g1, be1, g2, be2, bf2
    attn = jnp.concatenate(head_outs, axis=-1).reshape(M, C)
    attn = jnp.dot(attn.astype(jnp.bfloat16), wfc_ref[...],
                   preferred_element_type=jnp.float32) + vec[0:1]

    def layernorm(y, g, b):
        mu = jnp.mean(y, axis=-1, keepdims=True)
        var = jnp.mean((y - mu) ** 2, axis=-1, keepdims=True)
        return (y - mu) * jax.lax.rsqrt(var + EPS) * g + b

    m_t = layernorm(attn + x2, vec[1:2], vec[2:3])

    hid = jnp.maximum(
        jnp.dot(m_t.astype(jnp.bfloat16), wf1_ref[...],
                preferred_element_type=jnp.float32) + bf1_ref[...], 0.0)   # (M, 4C)
    ff = jnp.dot(hid.astype(jnp.bfloat16), wf2_ref[...],
                 preferred_element_type=jnp.float32) + vec[5:6]

    u_t = layernorm(m_t + ff, vec[3:4], vec[4:5])

    o_ref[...] = (u_t + x2 + m_t).reshape(G, T, C).astype(o_ref.dtype)


def _pack_params(params):
    """Fuse/pack the 16 small parameter tensors into 7 kernel inputs."""
    C, H = EMBED, HEADS
    scale = 1.0 / math.sqrt(C)                       # / embed_size ** 0.5, folded into Q

    def block_diag(w):                               # (D, D) -> (C, C), same weight per head
        return jnp.kron(jnp.eye(H, dtype=w.dtype), w)

    w_qkv = jnp.concatenate([block_diag(params["wq"]) * scale,
                             block_diag(params["wk"]),
                             block_diag(params["wv"])], axis=1).astype(jnp.bfloat16)
    b_qkv = jnp.concatenate([jnp.tile(params["bq"][0], H) * scale,
                             jnp.tile(params["bk"][0], H),
                             jnp.tile(params["bv"][0], H)])[None, :].astype(jnp.float32)
    vecs = jnp.concatenate([params["bfc"], params["g1"], params["be1"],
                            params["g2"], params["be2"], params["bf2"]], axis=0)  # (6, C)
    return (w_qkv, b_qkv,
            params["wfc"].astype(jnp.bfloat16),
            params["wf1"].astype(jnp.bfloat16),
            params["wf2"].astype(jnp.bfloat16),
            vecs, params["bf1"])


def ttransformer_forward(query, key, value, t, params, *, bn_tile=64):
    """Matches TTransformer.forward(query, key, value, t). key/value/t are unused by the
    reference forward pass (self-attention on x = query + temporal embedding)."""
    del key, value, t
    B, N, T, C = query.shape
    assert C == EMBED and C % HEADS == 0
    BN = B * N

    bn_tile = max(1, min(bn_tile, BN))
    if BN >= 16:              # keep >=2 grid steps so both v7x TensorCores get work
        bn_tile = min(bn_tile, -(-BN // 2))
    grid0 = -(-BN // bn_tile)
    BN_pad = grid0 * bn_tile

    qf = query.reshape(BN, T, C)
    if BN_pad != BN:          # pad with zero rows; rows are independent, sliced off below
        qf = jnp.concatenate([qf, jnp.zeros((BN_pad - BN, T, C), qf.dtype)], axis=0)

    d_t = params["emb"][:T]   # temporal_embedding(arange(T))
    p_args = _pack_params(params)

    def full_spec(a):
        return pl.BlockSpec(a.shape, lambda i, _nd=a.ndim: (0,) * _nd)

    tokens = BN_pad * T
    flops = (tokens * 2 * C * (3 * C + C + 2 * FWD_EXP * C)        # qkv + fc + ffn1/ffn2
             + BN_pad * HEADS * 4 * T * T * PER_DIM)               # scores + AV
    transcendentals = BN_pad * HEADS * T * T + 3 * tokens
    bytes_accessed = (2 * BN_pad * T * C * 4 + d_t.size * 4
                      + sum(int(a.size) * a.dtype.itemsize for a in p_args))

    out = pl.pallas_call(
        _ttransformer_kernel,
        out_shape=jax.ShapeDtypeStruct((BN_pad, T, C), query.dtype),
        grid=(grid0,),
        in_specs=[pl.BlockSpec((bn_tile, T, C), lambda i: (i, 0, 0)),
                  pl.BlockSpec((T, C), lambda i: (0, 0))]
                 + [full_spec(a) for a in p_args],
        out_specs=pl.BlockSpec((bn_tile, T, C), lambda i: (i, 0, 0)),
        compiler_params=pltpu.CompilerParams(
            dimension_semantics=("parallel",),
            # double-buffered (bn_tile, T, C) in+out blocks stay small (bn_tile=64 at
            # T=288 is ~9 MiB), well inside v7x's smaller scoped VMEM as well.
            vmem_limit_bytes=32 * 1024 * 1024),
        cost_estimate=pl.CostEstimate(flops=int(flops),
                                      transcendentals=int(transcendentals),
                                      bytes_accessed=int(bytes_accessed)),
    )(qf, d_t, *p_args)
    return out[:BN].reshape(B, N, T, C)


def init_params(key):
    C, D, FC = EMBED, PER_DIM, FWD_EXP * EMBED
    ks = jax.random.split(key, 13)

    def rnd(k, shape, s=0.1):
        return jax.random.normal(k, shape, jnp.float32) * s

    return {
        "emb": rnd(ks[0], (TIME_NUM, C), 1.0),            # nn.Embedding(time_num, C)
        "wq": rnd(ks[1], (D, D)), "bq": rnd(ks[2], (1, D)),
        "wk": rnd(ks[3], (D, D)), "bk": rnd(ks[4], (1, D)),
        "wv": rnd(ks[5], (D, D)), "bv": rnd(ks[6], (1, D)),
        "wfc": rnd(ks[7], (C, C)), "bfc": rnd(ks[8], (1, C)),
        "g1": jnp.ones((1, C), jnp.float32), "be1": jnp.zeros((1, C), jnp.float32),
        "g2": jnp.ones((1, C), jnp.float32), "be2": jnp.zeros((1, C), jnp.float32),
        "wf1": rnd(ks[9], (C, FC)), "bf1": rnd(ks[10], (1, FC)),
        "wf2": rnd(ks[11], (FC, C)), "bf2": rnd(ks[12], (1, C)),
    }


def reference(query, params):
    """Pure-JAX replica of the PyTorch forward (eval mode), for validation."""
    B, N, T, C = query.shape
    H, D = HEADS, PER_DIM
    hp = jax.lax.Precision.HIGHEST
    x = query + params["emb"][:T]
    xh = x.reshape(B, N, T, H, D)
    q = jnp.einsum("bnthd,de->bnthe", xh, params["wq"], precision=hp) + params["bq"][0]
    k = jnp.einsum("bnthd,de->bnthe", xh, params["wk"], precision=hp) + params["bk"][0]
    v = jnp.einsum("bnthd,de->bnthe", xh, params["wv"], precision=hp) + params["bv"][0]
    s = jnp.einsum("bnqhd,bnkhd->bnqkh", q, k, precision=hp) / math.sqrt(C)
    a = jax.nn.softmax(s, axis=2)                          # softmax over the query axis
    o = jnp.einsum("bnqkh,bnkhd->bnqhd", a, v, precision=hp).reshape(B, N, T, C)
    attn = jnp.einsum("bntc,cd->bntd", o, params["wfc"], precision=hp) + params["bfc"][0]

    def ln(y, g, b):
        mu = y.mean(-1, keepdims=True)
        var = ((y - mu) ** 2).mean(-1, keepdims=True)
        return (y - mu) / jnp.sqrt(var + EPS) * g[0] + b[0]

    m_t = ln(attn + x, params["g1"], params["be1"])
    hid = jnp.maximum(
        jnp.einsum("bntc,cf->bntf", m_t, params["wf1"], precision=hp) + params["bf1"][0], 0.0)
    ff = jnp.einsum("bntf,fc->bntc", hid, params["wf2"], precision=hp) + params["bf2"][0]
    u_t = ln(m_t + ff, params["g2"], params["be2"])
    return u_t + x + m_t


if __name__ == "__main__":
    root = jax.random.PRNGKey(0)
    kq, kp = jax.random.split(root)
    B, N, T = 2, 3, 8
    query = jax.random.normal(kq, (B, N, T, EMBED), jnp.float32)
    params = init_params(kp)
    t = 0  # unused by TTransformer.forward (only the arange(T) embedding is used)

    out = ttransformer_forward(query, query, query, t, params)
    out = jax.block_until_ready(out)

    ref = reference(query, params)
    np.testing.assert_allclose(np.asarray(out), np.asarray(ref), rtol=2e-2, atol=2e-2)
    print("KERNEL_OK")
</pallas_src>

<mosaic_0001>
module attributes {stable_mosaic.version = 11 : i64} {
  func.func @_ttransformer_kernel(%arg0: i32, %arg1: memref<6x8x32xf32, #tpu.memory_space<vmem>>, %arg2: memref<8x32xf32, #tpu.memory_space<vmem>>, %arg3: memref<32x96xbf16, #tpu.memory_space<vmem>>, %arg4: memref<1x96xf32, #tpu.memory_space<vmem>>, %arg5: memref<32x32xbf16, #tpu.memory_space<vmem>>, %arg6: memref<32x128xbf16, #tpu.memory_space<vmem>>, %arg7: memref<128x32xbf16, #tpu.memory_space<vmem>>, %arg8: memref<6x32xf32, #tpu.memory_space<vmem>>, %arg9: memref<1x128xf32, #tpu.memory_space<vmem>>, %arg10: memref<6x8x32xf32, #tpu.memory_space<vmem>>) attributes {dimension_semantics = [#tpu.dimension_semantics<parallel>], iteration_bounds = array<i64: 1>, scalar_prefetch = 0 : i64, scratch_operands = 0 : i64, tpu.core_type = #tpu.core_type<tc>, window_params = [{transform_indices = @transform_0, window_bounds = array<i64: 6, 8, 32>}, {pipeline_mode = #tpu.pipeline_mode<synchronous>, transform_indices = @transform_1, window_bounds = array<i64: 8, 32>}, {pipeline_mode = #tpu.pipeline_mode<synchronous>, transform_indices = @transform_2, window_bounds = array<i64: 32, 96>}, {pipeline_mode = #tpu.pipeline_mode<synchronous>, transform_indices = @transform_3, window_bounds = array<i64: 1, 96>}, {pipeline_mode = #tpu.pipeline_mode<synchronous>, transform_indices = @transform_4, window_bounds = array<i64: 32, 32>}, {pipeline_mode = #tpu.pipeline_mode<synchronous>, transform_indices = @transform_5, window_bounds = array<i64: 32, 128>}, {pipeline_mode = #tpu.pipeline_mode<synchronous>, transform_indices = @transform_6, window_bounds = array<i64: 128, 32>}, {pipeline_mode = #tpu.pipeline_mode<synchronous>, transform_indices = @transform_7, window_bounds = array<i64: 6, 32>}, {pipeline_mode = #tpu.pipeline_mode<synchronous>, transform_indices = @transform_8, window_bounds = array<i64: 1, 128>}, {transform_indices = @transform_9, window_bounds = array<i64: 6, 8, 32>}]} {
    %c0 = arith.constant 0 : index
    %c0_0 = arith.constant 0 : index
    %c0_1 = arith.constant 0 : index
    %0 = vector.load %arg1[%c0, %c0_0, %c0_1] : memref<6x8x32xf32, #tpu.memory_space<vmem>>, vector<6x8x32xf32>
    %c0_2 = arith.constant 0 : index
    %c0_3 = arith.constant 0 : index
    %1 = vector.load %arg2[%c0_2, %c0_3] : memref<8x32xf32, #tpu.memory_space<vmem>>, vector<8x32xf32>
    %2 = vector.shape_cast %1 : vector<8x32xf32> to vector<1x8x32xf32>
    %3 = vector.broadcast %2 : vector<1x8x32xf32> to vector<6x8x32xf32>
    %4 = arith.addf %0, %3 : vector<6x8x32xf32>
    %5 = vector.shape_cast %4 : vector<6x8x32xf32> to vector<48x32xf32>
    %6 = arith.truncf %5 : vector<48x32xf32> to vector<48x32xbf16>
    %c0_4 = arith.constant 0 : index
    %c0_5 = arith.constant 0 : index
    %7 = vector.load %arg3[%c0_4, %c0_5] : memref<32x96xbf16, #tpu.memory_space<vmem>>, vector<32x96xbf16>
    %cst = arith.constant dense<0.000000e+00> : vector<48x96xf32>
    %8 = tpu.matmul %6, %7, %cst {dimension_numbers = #tpu.dot_dimension_numbers<[1], [0], [0], [1], [0, 0, 1, 1], [], []>} : vector<48x32xbf16>, vector<32x96xbf16>, vector<48x96xf32> -> vector<48x96xf32>
    %c0_6 = arith.constant 0 : index
    %c0_7 = arith.constant 0 : index
    %9 = vector.load %arg4[%c0_6, %c0_7] : memref<1x96xf32, #tpu.memory_space<vmem>>, vector<1x96xf32>
    %10 = vector.broadcast %9 : vector<1x96xf32> to vector<48x96xf32>
    %11 = arith.addf %8, %10 : vector<48x96xf32>
    %12 = vector.shape_cast %11 : vector<48x96xf32> to vector<6x8x96xf32>
    %13 = vector.extract_strided_slice %12 {offsets = [0, 0, 0], sizes = [6, 8, 8], strides = [1, 1, 1]} : vector<6x8x96xf32> to vector<6x8x8xf32>
    %14 = arith.truncf %13 : vector<6x8x8xf32> to vector<6x8x8xbf16>
    %15 = vector.extract_strided_slice %12 {offsets = [0, 0, 32], sizes = [6, 8, 8], strides = [1, 1, 1]} : vector<6x8x96xf32> to vector<6x8x8xf32>
    %16 = arith.truncf %15 : vector<6x8x8xf32> to vector<6x8x8xbf16>
    %17 = vector.extract_strided_slice %12 {offsets = [0, 0, 64], sizes = [6, 8, 8], strides = [1, 1, 1]} : vector<6x8x96xf32> to vector<6x8x8xf32>
    %18 = arith.truncf %17 : vector<6x8x8xf32> to vector<6x8x8xbf16>
    "tpu.trace_start"() <{level = 10 : i32, message = "gqd,gkd->gqk"}> : () -> ()
    %cst_8 = arith.constant dense<0.000000e+00> : vector<6x8x8xf32>
    %19 = tpu.matmul %14, %16, %cst_8 {dimension_numbers = #tpu.dot_dimension_numbers<[2], [2], [1], [1], [0, 0, 0, 1, 1, 1], [0], [0]>} : vector<6x8x8xbf16>, vector<6x8x8xbf16>, vector<6x8x8xf32> -> vector<6x8x8xf32>
    "tpu.trace_stop"() : () -> ()
    %cst_9 = arith.constant dense<0xFF800000> : vector<6x8xf32>
    %20 = vector.multi_reduction <maximumf>, %19, %cst_9 [1] : vector<6x8x8xf32> to vector<6x8xf32>
    %21 = vector.shape_cast %20 : vector<6x8xf32> to vector<6x1x8xf32>
    %22 = vector.broadcast %21 : vector<6x1x8xf32> to vector<6x8x8xf32>
    %23 = arith.subf %19, %22 : vector<6x8x8xf32>
    %24 = math.exp %23 : vector<6x8x8xf32>
    %cst_10 = arith.constant dense<0.000000e+00> : vector<6x8xf32>
    %25 = vector.multi_reduction <add>, %24, %cst_10 [1] : vector<6x8x8xf32> to vector<6x8xf32>
    %26 = vector.shape_cast %25 : vector<6x8xf32> to vector<6x1x8xf32>
    %27 = tpu.reciprocal %26 {approx = true} : vector<6x1x8xf32> -> vector<6x1x8xf32>
    %28 = vector.broadcast %27 : vector<6x1x8xf32> to vector<6x8x8xf32>
    %29 = arith.mulf %24, %28 : vector<6x8x8xf32>
    %30 = arith.truncf %29 : vector<6x8x8xf32> to vector<6x8x8xbf16>
    "tpu.trace_start"() <{level = 10 : i32, message = "gqk,gkd->gqd"}> : () -> ()
    %cst_11 = arith.constant dense<0.000000e+00> : vector<6x8x8xf32>
    %31 = tpu.matmul %30, %18, %cst_11 {dimension_numbers = #tpu.dot_dimension_numbers<[2], [1], [1], [2], [0, 0, 0, 1, 1, 2], [0], [0]>} : vector<6x8x8xbf16>, vector<6x8x8xbf16>, vector<6x8x8xf32> -> vector<6x8x8xf32>
    "tpu.trace_stop"() : () -> ()
    %32 = vector.extract_strided_slice %12 {offsets = [0, 0, 8], sizes = [6, 8, 8], strides = [1, 1, 1]} : vector<6x8x96xf32> to vector<6x8x8xf32>
    %33 = arith.truncf %32 : vector<6x8x8xf32> to vector<6x8x8xbf16>
    %34 = vector.extract_strided_slice %12 {offsets = [0, 0, 40], sizes = [6, 8, 8], strides = [1, 1, 1]} : vector<6x8x96xf32> to vector<6x8x8xf32>
    %35 = arith.truncf %34 : vector<6x8x8xf32> to vector<6x8x8xbf16>
    %36 = vector.extract_strided_slice %12 {offsets = [0, 0, 72], sizes = [6, 8, 8], strides = [1, 1, 1]} : vector<6x8x96xf32> to vector<6x8x8xf32>
    %37 = arith.truncf %36 : vector<6x8x8xf32> to vector<6x8x8xbf16>
    "tpu.trace_start"() <{level = 10 : i32, message = "gqd,gkd->gqk"}> : () -> ()
    %cst_12 = arith.constant dense<0.000000e+00> : vector<6x8x8xf32>
    %38 = tpu.matmul %33, %35, %cst_12 {dimension_numbers = #tpu.dot_dimension_numbers<[2], [2], [1], [1], [0, 0, 0, 1, 1, 1], [0], [0]>} : vector<6x8x8xbf16>, vector<6x8x8xbf16>, vector<6x8x8xf32> -> vector<6x8x8xf32>
    "tpu.trace_stop"() : () -> ()
    %cst_13 = arith.constant dense<0xFF800000> : vector<6x8xf32>
    %39 = vector.multi_reduction <maximumf>, %38, %cst_13 [1] : vector<6x8x8xf32> to vector<6x8xf32>
    %40 = vector.shape_cast %39 : vector<6x8xf32> to vector<6x1x8xf32>
    %41 = vector.broadcast %40 : vector<6x1x8xf32> to vector<6x8x8xf32>
    %42 = arith.subf %38, %41 : vector<6x8x8xf32>
    %43 = math.exp %42 : vector<6x8x8xf32>
    %cst_14 = arith.constant dense<0.000000e+00> : vector<6x8xf32>
    %44 = vector.multi_reduction <add>, %43, %cst_14 [1] : vector<6x8x8xf32> to vector<6x8xf32>
    %45 = vector.shape_cast %44 : vector<6x8xf32> to vector<6x1x8xf32>
    %46 = tpu.reciprocal %45 {approx = true} : vector<6x1x8xf32> -> vector<6x1x8xf32>
    %47 = vector.broadcast %46 : vector<6x1x8xf32> to vector<6x8x8xf32>
    %48 = arith.mulf %43, %47 : vector<6x8x8xf32>
    %49 = arith.truncf %48 : vector<6x8x8xf32> to vector<6x8x8xbf16>
    "tpu.trace_start"() <{level = 10 : i32, message = "gqk,gkd->gqd"}> : () -> ()
    %cst_15 = arith.constant dense<0.000000e+00> : vector<6x8x8xf32>
    %50 = tpu.matmul %49, %37, %cst_15 {dimension_numbers = #tpu.dot_dimension_numbers<[2], [1], [1], [2], [0, 0, 0, 1, 1, 2], [0], [0]>} : vector<6x8x8xbf16>, vector<6x8x8xbf16>, vector<6x8x8xf32> -> vector<6x8x8xf32>
    "tpu.trace_stop"() : () -> ()
    %51 = vector.extract_strided_slice %12 {offsets = [0, 0, 16], sizes = [6, 8, 8], strides = [1, 1, 1]} : vector<6x8x96xf32> to vector<6x8x8xf32>
    %52 = arith.truncf %51 : vector<6x8x8xf32> to vector<6x8x8xbf16>
    %53 = vector.extract_strided_slice %12 {offsets = [0, 0, 48], sizes = [6, 8, 8], strides = [1, 1, 1]} : vector<6x8x96xf32> to vector<6x8x8xf32>
    %54 = arith.truncf %53 : vector<6x8x8xf32> to vector<6x8x8xbf16>
    %55 = vector.extract_strided_slice %12 {offsets = [0, 0, 80], sizes = [6, 8, 8], strides = [1, 1, 1]} : vector<6x8x96xf32> to vector<6x8x8xf32>
    %56 = arith.truncf %55 : vector<6x8x8xf32> to vector<6x8x8xbf16>
    "tpu.trace_start"() <{level = 10 : i32, message = "gqd,gkd->gqk"}> : () -> ()
    %cst_16 = arith.constant dense<0.000000e+00> : vector<6x8x8xf32>
    %57 = tpu.matmul %52, %54, %cst_16 {dimension_numbers = #tpu.dot_dimension_numbers<[2], [2], [1], [1], [0, 0, 0, 1, 1, 1], [0], [0]>} : vector<6x8x8xbf16>, vector<6x8x8xbf16>, vector<6x8x8xf32> -> vector<6x8x8xf32>
    "tpu.trace_stop"() : () -> ()
    %cst_17 = arith.constant dense<0xFF800000> : vector<6x8xf32>
    %58 = vector.multi_reduction <maximumf>, %57, %cst_17 [1] : vector<6x8x8xf32> to vector<6x8xf32>
    %59 = vector.shape_cast %58 : vector<6x8xf32> to vector<6x1x8xf32>
    %60 = vector.broadcast %59 : vector<6x1x8xf32> to vector<6x8x8xf32>
    %61 = arith.subf %57, %60 : vector<6x8x8xf32>
    %62 = math.exp %61 : vector<6x8x8xf32>
    %cst_18 = arith.constant dense<0.000000e+00> : vector<6x8xf32>
    %63 = vector.multi_reduction <add>, %62, %cst_18 [1] : vector<6x8x8xf32> to vector<6x8xf32>
    %64 = vector.shape_cast %63 : vector<6x8xf32> to vector<6x1x8xf32>
    %65 = tpu.reciprocal %64 {approx = true} : vector<6x1x8xf32> -> vector<6x1x8xf32>
    %66 = vector.broadcast %65 : vector<6x1x8xf32> to vector<6x8x8xf32>
    %67 = arith.mulf %62, %66 : vector<6x8x8xf32>
    %68 = arith.truncf %67 : vector<6x8x8xf32> to vector<6x8x8xbf16>
    "tpu.trace_start"() <{level = 10 : i32, message = "gqk,gkd->gqd"}> : () -> ()
    %cst_19 = arith.constant dense<0.000000e+00> : vector<6x8x8xf32>
    %69 = tpu.matmul %68, %56, %cst_19 {dimension_numbers = #tpu.dot_dimension_numbers<[2], [1], [1], [2], [0, 0, 0, 1, 1, 2], [0], [0]>} : vector<6x8x8xbf16>, vector<6x8x8xbf16>, vector<6x8x8xf32> -> vector<6x8x8xf32>
    "tpu.trace_stop"() : () -> ()
    %70 = vector.extract_strided_slice %12 {offsets = [0, 0, 24], sizes = [6, 8, 8], strides = [1, 1, 1]} : vector<6x8x96xf32> to vector<6x8x8xf32>
    %71 = arith.truncf %70 : vector<6x8x8xf32> to vector<6x8x8xbf16>
    %72 = vector.extract_strided_slice %12 {offsets = [0, 0, 56], sizes = [6, 8, 8], strides = [1, 1, 1]} : vector<6x8x96xf32> to vector<6x8x8xf32>
    %73 = arith.truncf %72 : vector<6x8x8xf32> to vector<6x8x8xbf16>
    %74 = vector.extract_strided_slice %12 {offsets = [0, 0, 88], sizes = [6, 8, 8], strides = [1, 1, 1]} : vector<6x8x96xf32> to vector<6x8x8xf32>
    %75 = arith.truncf %74 : vector<6x8x8xf32> to vector<6x8x8xbf16>
    "tpu.trace_start"() <{level = 10 : i32, message = "gqd,gkd->gqk"}> : () -> ()
    %cst_20 = arith.constant dense<0.000000e+00> : vector<6x8x8xf32>
    %76 = tpu.matmul %71, %73, %cst_20 {dimension_numbers = #tpu.dot_dimension_numbers<[2], [2], [1], [1], [0, 0, 0, 1, 1, 1], [0], [0]>} : vector<6x8x8xbf16>, vector<6x8x8xbf16>, vector<6x8x8xf32> -> vector<6x8x8xf32>
    "tpu.trace_stop"() : () -> ()
    %cst_21 = arith.constant dense<0xFF800000> : vector<6x8xf32>
    %77 = vector.multi_reduction <maximumf>, %76, %cst_21 [1] : vector<6x8x8xf32> to vector<6x8xf32>
    %78 = vector.shape_cast %77 : vector<6x8xf32> to vector<6x1x8xf32>
    %79 = vector.broadcast %78 : vector<6x1x8xf32> to vector<6x8x8xf32>
    %80 = arith.subf %76, %79 : vector<6x8x8xf32>
    %81 = math.exp %80 : vector<6x8x8xf32>
    %cst_22 = arith.constant dense<0.000000e+00> : vector<6x8xf32>
    %82 = vector.multi_reduction <add>, %81, %cst_22 [1] : vector<6x8x8xf32> to vector<6x8xf32>
    %83 = vector.shape_cast %82 : vector<6x8xf32> to vector<6x1x8xf32>
    %84 = tpu.reciprocal %83 {approx = true} : vector<6x1x8xf32> -> vector<6x1x8xf32>
    %85 = vector.broadcast %84 : vector<6x1x8xf32> to vector<6x8x8xf32>
    %86 = arith.mulf %81, %85 : vector<6x8x8xf32>
    %87 = arith.truncf %86 : vector<6x8x8xf32> to vector<6x8x8xbf16>
    "tpu.trace_start"() <{level = 10 : i32, message = "gqk,gkd->gqd"}> : () -> ()
    %cst_23 = arith.constant dense<0.000000e+00> : vector<6x8x8xf32>
    %88 = tpu.matmul %87, %75, %cst_23 {dimension_numbers = #tpu.dot_dimension_numbers<[2], [1], [1], [2], [0, 0, 0, 1, 1, 2], [0], [0]>} : vector<6x8x8xbf16>, vector<6x8x8xbf16>, vector<6x8x8xf32> -> vector<6x8x8xf32>
    "tpu.trace_stop"() : () -> ()
    %c0_24 = arith.constant 0 : index
    %c0_25 = arith.constant 0 : index
    %89 = vector.load %arg8[%c0_24, %c0_25] : memref<6x32xf32, #tpu.memory_space<vmem>>, vector<6x32xf32>
    %90 = tpu.concatenate %31, %50, %69, %88 in 2 : vector<6x8x8xf32>, vector<6x8x8xf32>, vector<6x8x8xf32>, vector<6x8x8xf32> -> vector<6x8x32xf32>
    %91 = vector.shape_cast %90 : vector<6x8x32xf32> to vector<48x32xf32>
    %92 = arith.truncf %91 : vector<48x32xf32> to vector<48x32xbf16>
    %c0_26 = arith.constant 0 : index
    %c0_27 = arith.constant 0 : index
    %93 = vector.load %arg5[%c0_26, %c0_27] : memref<32x32xbf16, #tpu.memory_space<vmem>>, vector<32x32xbf16>
    %cst_28 = arith.constant dense<0.000000e+00> : vector<48x32xf32>
    %94 = tpu.matmul %92, %93, %cst_28 {dimension_numbers = #tpu.dot_dimension_numbers<[1], [0], [0], [1], [0, 0, 1, 1], [], []>} : vector<48x32xbf16>, vector<32x32xbf16>, vector<48x32xf32> -> vector<48x32xf32>
    %95 = vector.extract_strided_slice %89 {offsets = [0, 0], sizes = [1, 32], strides = [1, 1]} : vector<6x32xf32> to vector<1x32xf32>
    %96 = vector.broadcast %95 : vector<1x32xf32> to vector<48x32xf32>
    %97 = arith.addf %94, %96 : vector<48x32xf32>
    %98 = arith.addf %97, %5 : vector<48x32xf32>
    %99 = vector.extract_strided_slice %89 {offsets = [1, 0], sizes = [1, 32], strides = [1, 1]} : vector<6x32xf32> to vector<1x32xf32>
    %100 = vector.extract_strided_slice %89 {offsets = [2, 0], sizes = [1, 32], strides = [1, 1]} : vector<6x32xf32> to vector<1x32xf32>
    %cst_29 = arith.constant dense<0.000000e+00> : vector<48xf32>
    %101 = vector.multi_reduction <add>, %98, %cst_29 [1] : vector<48x32xf32> to vector<48xf32>
    %102 = vector.shape_cast %101 : vector<48xf32> to vector<48x1xf32>
    %cst_30 = arith.constant 3.200000e+01 : f32
    %103 = vector.broadcast %cst_30 : f32 to vector<48x1xf32>
    %104 = arith.divf %102, %103 : vector<48x1xf32>
    %105 = vector.broadcast %104 : vector<48x1xf32> to vector<48x32xf32>
    %106 = arith.subf %98, %105 : vector<48x32xf32>
    %107 = arith.mulf %106, %106 : vector<48x32xf32>
    %cst_31 = arith.constant dense<0.000000e+00> : vector<48xf32>
    %108 = vector.multi_reduction <add>, %107, %cst_31 [1] : vector<48x32xf32> to vector<48xf32>
    %109 = vector.shape_cast %108 : vector<48xf32> to vector<48x1xf32>
    %cst_32 = arith.constant 3.200000e+01 : f32
    %110 = vector.broadcast %cst_32 : f32 to vector<48x1xf32>
    %111 = arith.divf %109, %110 : vector<48x1xf32>
    %112 = vector.broadcast %104 : vector<48x1xf32> to vector<48x32xf32>
    %113 = arith.subf %98, %112 : vector<48x32xf32>
    %cst_33 = arith.constant 9.99999974E-6 : f32
    %114 = vector.broadcast %cst_33 : f32 to vector<48x1xf32>
    %115 = arith.addf %111, %114 : vector<48x1xf32>
    %116 = math.rsqrt %115 : vector<48x1xf32>
    %117 = vector.broadcast %116 : vector<48x1xf32> to vector<48x32xf32>
    %118 = arith.mulf %113, %117 : vector<48x32xf32>
    %119 = vector.broadcast %99 : vector<1x32xf32> to vector<48x32xf32>
    %120 = arith.mulf %118, %119 : vector<48x32xf32>
    %121 = vector.broadcast %100 : vector<1x32xf32> to vector<48x32xf32>
    %122 = arith.addf %120, %121 : vector<48x32xf32>
    %123 = arith.truncf %122 : vector<48x32xf32> to vector<48x32xbf16>
    %c0_34 = arith.constant 0 : index
    %c0_35 = arith.constant 0 : index
    %124 = vector.load %arg6[%c0_34, %c0_35] : memref<32x128xbf16, #tpu.memory_space<vmem>>, vector<32x128xbf16>
    %cst_36 = arith.constant dense<0.000000e+00> : vector<48x128xf32>
    %125 = tpu.matmul %123, %124, %cst_36 {dimension_numbers = #tpu.dot_dimension_numbers<[1], [0], [0], [1], [0, 0, 1, 1], [], []>} : vector<48x32xbf16>, vector<32x128xbf16>, vector<48x128xf32> -> vector<48x128xf32>
    %c0_37 = arith.constant 0 : index
    %c0_38 = arith.constant 0 : index
    %126 = vector.load %arg9[%c0_37, %c0_38] : memref<1x128xf32, #tpu.memory_space<vmem>>, vector<1x128xf32>
    %127 = vector.broadcast %126 : vector<1x128xf32> to vector<48x128xf32>
    %128 = arith.addf %125, %127 : vector<48x128xf32>
    %cst_39 = arith.constant 0.000000e+00 : f32
    %129 = vector.broadcast %cst_39 : f32 to vector<48x128xf32>
    %130 = arith.maximumf %128, %129 : vector<48x128xf32>
    %131 = arith.truncf %130 : vector<48x128xf32> to vector<48x128xbf16>
    %c0_40 = arith.constant 0 : index
    %c0_41 = arith.constant 0 : index
    %132 = vector.load %arg7[%c0_40, %c0_41] : memref<128x32xbf16, #tpu.memory_space<vmem>>, vector<128x32xbf16>
    %cst_42 = arith.constant dense<0.000000e+00> : vector<48x32xf32>
    %133 = tpu.matmul %131, %132, %cst_42 {dimension_numbers = #tpu.dot_dimension_numbers<[1], [0], [0], [1], [0, 0, 1, 1], [], []>} : vector<48x128xbf16>, vector<128x32xbf16>, vector<48x32xf32> -> vector<48x32xf32>
    %134 = vector.extract_strided_slice %89 {offsets = [5, 0], sizes = [1, 32], strides = [1, 1]} : vector<6x32xf32> to vector<1x32xf32>
    %135 = vector.broadcast %134 : vector<1x32xf32> to vector<48x32xf32>
    %136 = arith.addf %133, %135 : vector<48x32xf32>
    %137 = arith.addf %122, %136 : vector<48x32xf32>
    %138 = vector.extract_strided_slice %89 {offsets = [3, 0], sizes = [1, 32], strides = [1, 1]} : vector<6x32xf32> to vector<1x32xf32>
    %139 = vector.extract_strided_slice %89 {offsets = [4, 0], sizes = [1, 32], strides = [1, 1]} : vector<6x32xf32> to vector<1x32xf32>
    %cst_43 = arith.constant dense<0.000000e+00> : vector<48xf32>
    %140 = vector.multi_reduction <add>, %137, %cst_43 [1] : vector<48x32xf32> to vector<48xf32>
    %141 = vector.shape_cast %140 : vector<48xf32> to vector<48x1xf32>
    %cst_44 = arith.constant 3.200000e+01 : f32
    %142 = vector.broadcast %cst_44 : f32 to vector<48x1xf32>
    %143 = arith.divf %141, %142 : vector<48x1xf32>
    %144 = vector.broadcast %143 : vector<48x1xf32> to vector<48x32xf32>
    %145 = arith.subf %137, %144 : vector<48x32xf32>
    %146 = arith.mulf %145, %145 : vector<48x32xf32>
    %cst_45 = arith.constant dense<0.000000e+00> : vector<48xf32>
    %147 = vector.multi_reduction <add>, %146, %cst_45 [1] : vector<48x32xf32> to vector<48xf32>
    %148 = vector.shape_cast %147 : vector<48xf32> to vector<48x1xf32>
    %cst_46 = arith.constant 3.200000e+01 : f32
    %149 = vector.broadcast %cst_46 : f32 to vector<48x1xf32>
    %150 = arith.divf %148, %149 : vector<48x1xf32>
    %151 = vector.broadcast %143 : vector<48x1xf32> to vector<48x32xf32>
    %152 = arith.subf %137, %151 : vector<48x32xf32>
    %cst_47 = arith.constant 9.99999974E-6 : f32
    %153 = vector.broadcast %cst_47 : f32 to vector<48x1xf32>
    %154 = arith.addf %150, %153 : vector<48x1xf32>
    %155 = math.rsqrt %154 : vector<48x1xf32>
    %156 = vector.broadcast %155 : vector<48x1xf32> to vector<48x32xf32>
    %157 = arith.mulf %152, %156 : vector<48x32xf32>
    %158 = vector.broadcast %138 : vector<1x32xf32> to vector<48x32xf32>
    %159 = arith.mulf %157, %158 : vector<48x32xf32>
    %160 = vector.broadcast %139 : vector<1x32xf32> to vector<48x32xf32>
    %161 = arith.addf %159, %160 : vector<48x32xf32>
    %162 = arith.addf %161, %5 : vector<48x32xf32>
    %163 = arith.addf %162, %122 : vector<48x32xf32>
    %164 = vector.shape_cast %163 : vector<48x32xf32> to vector<6x8x32xf32>
    %c0_48 = arith.constant 0 : index
    %c0_49 = arith.constant 0 : index
    %c0_50 = arith.constant 0 : index
    %165 = vector.load %arg10[%c0_48, %c0_49, %c0_50] : memref<6x8x32xf32, #tpu.memory_space<vmem>>, vector<6x8x32xf32>
    tpu.vector_store %arg10[%c0_48, %c0_49, %c0_50], %164 {strides = array<i32>} : memref<6x8x32xf32, #tpu.memory_space<vmem>>, vector<6x8x32xf32>,
    return
  }
  func.func @transform_0(%arg0: i32) -> (i32, i32, i32) {
    %c0_i32 = arith.constant 0 : i32
    %c0_i32_0 = arith.constant 0 : i32
    %c0_i32_1 = arith.constant 0 : i32
    return %arg0, %c0_i32, %c0_i32_0 : i32, i32, i32
  }
  func.func @transform_1(%arg0: i32) -> (i32, i32) {
    %c0_i32 = arith.constant 0 : i32
    %c0_i32_0 = arith.constant 0 : i32
    %c0_i32_1 = arith.constant 0 : i32
    return %c0_i32, %c0_i32_0 : i32, i32
  }
  func.func @transform_2(%arg0: i32) -> (i32, i32) {
    %c0_i32 = arith.constant 0 : i32
    %c0_i32_0 = arith.constant 0 : i32
    %c0_i32_1 = arith.constant 0 : i32
    return %c0_i32, %c0_i32_0 : i32, i32
  }
  func.func @transform_3(%arg0: i32) -> (i32, i32) {
    %c0_i32 = arith.constant 0 : i32
    %c0_i32_0 = arith.constant 0 : i32
    %c0_i32_1 = arith.constant 0 : i32
    return %c0_i32, %c0_i32_0 : i32, i32
  }
  func.func @transform_4(%arg0: i32) -> (i32, i32) {
    %c0_i32 = arith.constant 0 : i32
    %c0_i32_0 = arith.constant 0 : i32
    %c0_i32_1 = arith.constant 0 : i32
    return %c0_i32, %c0_i32_0 : i32, i32
  }
  func.func @transform_5(%arg0: i32) -> (i32, i32) {
    %c0_i32 = arith.constant 0 : i32
    %c0_i32_0 = arith.constant 0 : i32
    %c0_i32_1 = arith.constant 0 : i32
    return %c0_i32, %c0_i32_0 : i32, i32
  }
  func.func @transform_6(%arg0: i32) -> (i32, i32) {
    %c0_i32 = arith.constant 0 : i32
    %c0_i32_0 = arith.constant 0 : i32
    %c0_i32_1 = arith.constant 0 : i32
    return %c0_i32, %c0_i32_0 : i32, i32
  }
  func.func @transform_7(%arg0: i32) -> (i32, i32) {
    %c0_i32 = arith.constant 0 : i32
    %c0_i32_0 = arith.constant 0 : i32
    %c0_i32_1 = arith.constant 0 : i32
    return %c0_i32, %c0_i32_0 : i32, i32
  }
  func.func @transform_8(%arg0: i32) -> (i32, i32) {
    %c0_i32 = arith.constant 0 : i32
    %c0_i32_0 = arith.constant 0 : i32
    %c0_i32_1 = arith.constant 0 : i32
    return %c0_i32, %c0_i32_0 : i32, i32
  }
  func.func @transform_9(%arg0: i32) -> (i32, i32, i32) {
    %c0_i32 = arith.constant 0 : i32
    %c0_i32_0 = arith.constant 0 : i32
    %c0_i32_1 = arith.constant 0 : i32
    return %arg0, %c0_i32, %c0_i32_0 : i32, i32, i32
  }
}

</mosaic_0001>

<llo_original>
// kernel: tpu_custom_call.1
$region0: #{tpu_custom_call.1}
  #allocation0 [shape = 'u32[]', space=smem, size = 0x4, offset = 0x4, fixed_abs, tag = 'smem constant byte address 0x4 - core index']
  #allocation1 [shape = 'u32[144,128]{1,0:T(1,128)}', space=vmem, size = 0x12000, scoped, tag = 'internal scratch']
  %s0 = inlined_call_operand.vmem [shape: f32[6,8,32], index: 0, kind: input, shape index: {}]
  %s1 = inlined_call_operand.hbm [shape: f32[8,32], index: 1, kind: input, shape index: {}]
  %s2 = inlined_call_operand.vmem [shape: bf16[32,96], index: 2, kind: input, shape index: {}]
  %s3 = inlined_call_operand.vmem [shape: f32[1,96], index: 3, kind: input, shape index: {}]
  %s4 = inlined_call_operand.vmem [shape: bf16[32,32], index: 4, kind: input, shape index: {}]
  %s5 = inlined_call_operand.hbm [shape: bf16[32,128], index: 5, kind: input, shape index: {}]
  %s6 = inlined_call_operand.vmem [shape: bf16[128,32], index: 6, kind: input, shape index: {}]
  %s7 = inlined_call_operand.vmem [shape: f32[6,32], index: 7, kind: input, shape index: {}]
  %s8 = inlined_call_operand.vmem [shape: f32[1,128], index: 8, kind: input, shape index: {}]
  %s9 = inlined_call_operand.hbm [shape: f32[6,8,32], index: 9, kind: output, shape index: {}]
  %s10 = sld [smem:[#allocation0]]
  $region54: #{tpu_custom_call.1} parent=0
    _
  %s12 = ssub.s32 1, %s10
  %s13 = scalar_select 0, %s12, %s10
  $region1: #{tpu_custom_call.1} parent=0
    #allocation2 [shape = 'u8[4096]{0}', space=vmem, size = 0x1000, scoped, tag = 'input window, operand 1, single buffered']
    #allocation3 [shape = 's32[1]{0}', space=sflag, size = 0x4, scoped, tag = 'scoped memory for tpu_custom_call.1']
    #allocation4 [shape = 's32[1]{0}', space=sflag, size = 0x4, scoped, tag = 'scoped memory for tpu_custom_call.1']
    #allocation5 [shape = 'u8[8192]{0}', space=vmem, size = 0x2000, scoped, tag = 'input window, operand 5, single buffered']
    #allocation6 [shape = 's32[1]{0}', space=sflag, size = 0x4, scoped, tag = 'scoped memory for tpu_custom_call.1']
    #allocation7 [shape = 'u8[24576]{0}', space=vmem, size = 0x6000, scoped, tag = 'output window, operand 0, single buffered']
    %14 = vsyncpa [#allocation3], 0
    %15 = vsyncpa [#allocation6], 0
    %16 = vsyncpa [#allocation4], 0
    // Predicated region
    $region2: #{tpu_custom_call.1} parent=1 // pred_check
      _
    $region3: #{tpu_custom_call.1} parent=1 // pred_check_branch
      %18 = sbr.rel (0) target = $region5
    $region4: #{tpu_custom_call.1} parent=1 // pred_region
      _
    $region5: #{tpu_custom_call.1} parent=1 // pred_fallthru
      _
    // Predicated region
    $region6: #{tpu_custom_call.1} parent=1 // pred_check
      _
    $region7: #{tpu_custom_call.1} parent=1 // pred_check_branch
      %20 = sbr.rel (0) target = $region9
    $region8: #{tpu_custom_call.1} parent=1 // pred_region
      %s22 = ssub.s32 128, 128
      %23 = vsyncadd [#allocation3], %s22
      %s25 = sshll.u32 [#allocation2], 4
      %s26 = int_to_ptr.vmem [resolvable:$true] %s25
      %28 = dma.hbm_to_vmem [thread:$0]  %s1, 128, %s26, [#allocation3]
    $region9: #{tpu_custom_call.1} parent=1 // pred_fallthru
      _
    // Predicated region
    $region10: #{tpu_custom_call.1} parent=1 // pred_check
      _
    $region11: #{tpu_custom_call.1} parent=1 // pred_check_branch
      %30 = sbr.rel (0) target = $region13
    $region12: #{tpu_custom_call.1} parent=1 // pred_region
      _
    $region13: #{tpu_custom_call.1} parent=1 // pred_fallthru
      _
    // Predicated region
    $region14: #{tpu_custom_call.1} parent=1 // pred_check
      _
    $region15: #{tpu_custom_call.1} parent=1 // pred_check_branch
      %32 = sbr.rel (0) target = $region17
    $region16: #{tpu_custom_call.1} parent=1 // pred_region
      _
    $region17: #{tpu_custom_call.1} parent=1 // pred_fallthru
      _
    // Predicated region
    $region18: #{tpu_custom_call.1} parent=1 // pred_check
      _
    $region19: #{tpu_custom_call.1} parent=1 // pred_check_branch
      %34 = sbr.rel (0) target = $region21
    $region20: #{tpu_custom_call.1} parent=1 // pred_region
      _
    $region21: #{tpu_custom_call.1} parent=1 // pred_fallthru
      _
    // Predicated region
    $region22: #{tpu_custom_call.1} parent=1 // pred_check
      _
    $region23: #{tpu_custom_call.1} parent=1 // pred_check_branch
      %36 = sbr.rel (0) target = $region25
    $region24: #{tpu_custom_call.1} parent=1 // pred_region
      %s38 = ssub.s32 256, 256
      %39 = vsyncadd [#allocation6], %s38
      %s40 = sshll.u32 [#allocation5], 4
      %s41 = int_to_ptr.vmem [resolvable:$true] %s40
      %46 = dma.hbm_to_vmem [thread:$0]  %s5, 256, %s41, [#allocation6], 64, 64, 4
    $region25: #{tpu_custom_call.1} parent=1 // pred_fallthru
      _
    // Predicated region
    $region26: #{tpu_custom_call.1} parent=1 // pred_check
      _
    $region27: #{tpu_custom_call.1} parent=1 // pred_check_branch
      %48 = sbr.rel (0) target = $region29
    $region28: #{tpu_custom_call.1} parent=1 // pred_region
      _
    $region29: #{tpu_custom_call.1} parent=1 // pred_fallthru
      _
    // Predicated region
    $region30: #{tpu_custom_call.1} parent=1 // pred_check
      _
    $region31: #{tpu_custom_call.1} parent=1 // pred_check_branch
      %50 = sbr.rel (0) target = $region33
    $region32: #{tpu_custom_call.1} parent=1 // pred_region
      _
    $region33: #{tpu_custom_call.1} parent=1 // pred_fallthru
      _
    // Predicated region
    $region34: #{tpu_custom_call.1} parent=1 // pred_check
      _
    $region35: #{tpu_custom_call.1} parent=1 // pred_check_branch
      %52 = sbr.rel (0) target = $region37
    $region36: #{tpu_custom_call.1} parent=1 // pred_region
      _
    $region37: #{tpu_custom_call.1} parent=1 // pred_fallthru
      _
    // Predicated region
    $region38: #{tpu_custom_call.1} parent=1 // pred_check
      _
    $region39: #{tpu_custom_call.1} parent=1 // pred_check_branch
      %54 = sbr.rel (0) target = $region41
    $region40: #{tpu_custom_call.1} parent=1 // pred_region
      %55 = dma.done [#allocation3], 128
    $region41: #{tpu_custom_call.1} parent=1 // pred_fallthru
      _
    // Predicated region
    $region42: #{tpu_custom_call.1} parent=1 // pred_check
      _
    $region43: #{tpu_custom_call.1} parent=1 // pred_check_branch
      %57 = sbr.rel (0) target = $region45
    $region44: #{tpu_custom_call.1} parent=1 // pred_region
      %58 = dma.done [#allocation6], 256
    $region45: #{tpu_custom_call.1} parent=1 // pred_fallthru
      _
    %v60 = vld [vmem:[%s0] sm:$0xff]
    %v61 = vld [vmem:[%s0 + $0x8] sm:$0xff]
    %v62 = vld [vmem:[%s0 + $0x10] sm:$0xff]
    %v63 = vld [vmem:[%s0 + $0x18] sm:$0xff]
    %v64 = vld [vmem:[%s0 + $0x20] sm:$0xff]
    %v65 = vld [vmem:[%s0 + $0x28] sm:$0xff]
    %v66 = vld [vmem:[#allocation2] sm:$0xff]
    %v67 = vadd.f32 %v60, %v66
    %v68 = vadd.f32 %v61, %v66
    %v69 = vadd.f32 %v62, %v66
    %v70 = vadd.f32 %v63, %v66
    %v71 = vadd.f32 %v64, %v66
    %v72 = vadd.f32 %v65, %v66
    %v73 = vpack.c.bf16 %v68, %v67
    %v74 = vpack.c.bf16 %v70, %v69
    %v75 = vpack.c.bf16 %v72, %v71
    %v76 = vld [vmem:[%s2] sm:$0xf]
    %v77 = vld [vmem:[%s2 + $0x4] sm:$0xf]
    %v78 = vld [vmem:[%s2 + $0x8] sm:$0xf]
    %v79 = vld [vmem:[%s2 + $0xc] sm:$0xf]
    %v80 = vld [vmem:[%s3] sm:$0x1]
    %v82 = vlaneseq
    %v83 = vshrl.u32 %v82, 7
    %v84 = vsub.s32 0, %v83
    %v85 = vrot.slane %v80, %v84
    %v91 = vunpack.c.l.b16 %v76
    %v92 = vunpack.c.l.b16 %v77
    %v93 = vunpack.c.l.b16 %v78
    %v94 = vunpack.c.l.b16 %v79
    %v95 = vpack.c.b16 %v92, %v91
    %v96 = vpack.c.b16 %v94, %v93
    %vm99 = vcmask 261120
    %v101 = vsel %vm99, %v73, 0
    %v104 = vsel %vm99, %v74, 0
    %v107 = vsel %vm99, %v75, 0
    %109 = vmatprep.subr.bf16.mxu0 0
    %110 = vmatpush1.bf16.msra.mxu0 0
    %111 = vmatprep.subr.bf16.mxu0 0
    %112 = vmatpush1.bf16.msra.mxu0 0
    %113 = vmatprep.subr.bf16.mxu0 0
    %114 = vmatpush1.bf16.msra.mxu0 0
    %115 = vmatprep.subr.bf16.mxu0 0
    %116 = vmatpush1.bf16.msra.mxu0 0
    %117 = vmatprep.subr.bf16.mxu0 0
    %118 = vmatpush1.bf16.msra.mxu0 0
    %119 = vmatprep.subr.bf16.mxu0 0
    %120 = vmatpush1.bf16.msra.mxu0 0
    %121 = vmatprep.subr.bf16.mxu0 0
    %122 = vmatpush1.bf16.msra.mxu0 %v96
    %123 = vmatprep.subr.bf16.mxu0 0
    %124 = vmatpush1.bf16.msra.mxu0 %v95
    %125 = vmatprep.subr.bf16.mxu0 0
    %126 = vmatpush2.bf16.msra.mxu0 0
    %127 = vmatprep.subr.bf16.mxu0 0
    %128 = vmatpush2.bf16.msra.mxu0 0
    %129 = vmatprep.subr.bf16.mxu0 0
    %130 = vmatpush2.bf16.msra.mxu0 0
    %131 = vmatprep.subr.bf16.mxu0 0
    %132 = vmatpush2.bf16.msra.mxu0 0
    %133 = vmatprep.subr.bf16.mxu0 0
    %134 = vmatpush2.bf16.msra.mxu0 0
    %135 = vmatprep.subr.bf16.mxu0 0
    %136 = vmatpush2.bf16.msra.mxu0 0
    %137 = vmatprep.subr.bf16.mxu0 0
    %138 = vmatpush2.bf16.msra.mxu0 0
    %139 = vmatprep.subr.bf16.mxu0 0
    %140 = vmatpush2.bf16.msra.mxu0 0
    %141 = vmatprep.mubr.bf16.mxu0 0
    %142 = vmatmul.mubr.bf16.gmra.mxu0 %v101
    %v143 = vpop.f32.mrf.mxu0
    %v144 = vadd.f32 %v85, %v143
    %v145 = vpop.f32.mrf.mxu0
    %v146 = vpop.f32.mrf.mxu0
    %v147 = vadd.f32 %v85, %v146
    %v148 = vpop.f32.mrf.mxu0
    %149 = vmatprep.mubr.bf16.mxu0 0
    %150 = vmatmul.mubr.bf16.gmra.mxu0 %v104
    %v151 = vpop.f32.mrf.mxu0
    %v152 = vadd.f32 %v85, %v151
    %v153 = vpop.f32.mrf.mxu0
    %v154 = vpop.f32.mrf.mxu0
    %v155 = vadd.f32 %v85, %v154
    %v156 = vpop.f32.mrf.mxu0
    %157 = vmatprep.mubr.bf16.mxu0 0
    %158 = vmatmul.mubr.bf16.gmra.mxu0 %v107
    %v159 = vpop.f32.mrf.mxu0
    %v160 = vadd.f32 %v85, %v159
    %v161 = vpop.f32.mrf.mxu0
    %v162 = vpop.f32.mrf.mxu0
    %v163 = vadd.f32 %v85, %v162
    %v164 = vpop.f32.mrf.mxu0
    %165 = vdwg.mxu0
    %v166 = vpack.c.bf16 %v144, %v144
    %v167 = vpack.c.bf16 %v147, %v147
    %v168 = vpack.c.bf16 %v152, %v152
    %v169 = vpack.c.bf16 %v155, %v155
    %v170 = vpack.c.bf16 %v160, %v160
    %v171 = vpack.c.bf16 %v163, %v163
    %173 = vrot.lane.b32.xlu0 %v166, 96
    %v174 = vpop.permute.xlu0 %173
    %vm175 = vcmask 64512
    %v177 = vsel %vm175, %v166, 0
    %v180 = vsel %vm175, %v174, 0
    %182 = vmatprep.subr.bf16.mxu0 0
    %183 = vmatpush1.bf16.xpose.msra.mxu0 0
    %184 = vmatprep.subr.bf16.mxu0 0
    %185 = vmatpush1.bf16.xpose.msra.mxu0 0
    %186 = vmatprep.subr.bf16.mxu0 0
    %187 = vmatpush1.bf16.xpose.msra.mxu0 0
    %188 = vmatprep.subr.bf16.mxu0 0
    %189 = vmatpush1.bf16.xpose.msra.mxu0 0
    %190 = vmatprep.subr.bf16.mxu0 0
    %191 = vmatpush1.bf16.xpose.msra.mxu0 0
    %192 = vmatprep.subr.bf16.mxu0 0
    %193 = vmatpush1.bf16.xpose.msra.mxu0 0
    %194 = vmatprep.subr.bf16.mxu0 0
    %195 = vmatpush1.bf16.xpose.msra.mxu0 0
    %196 = vmatprep.subr.bf16.mxu0 0
    %197 = vmatpush1.bf16.xpose.msra.mxu0 %v180
    %198 = vmatprep.subr.bf16.mxu0 0
    %199 = vmatpush2.bf16.xpose.msra.mxu0 0
    %200 = vmatprep.subr.bf16.mxu0 0
    %201 = vmatpush2.bf16.xpose.msra.mxu0 0
    %202 = vmatprep.subr.bf16.mxu0 0
    %203 = vmatpush2.bf16.xpose.msra.mxu0 0
    %204 = vmatprep.subr.bf16.mxu0 0
    %205 = vmatpush2.bf16.xpose.msra.mxu0 0
    %206 = vmatprep.subr.bf16.mxu0 0
    %207 = vmatpush2.bf16.xpose.msra.mxu0 0
    %208 = vmatprep.subr.bf16.mxu0 0
    %209 = vmatpush2.bf16.xpose.msra.mxu0 0
    %210 = vmatprep.subr.bf16.mxu0 0
    %211 = vmatpush2.bf16.xpose.msra.mxu0 0
    %212 = vmatprep.subr.bf16.mxu0 0
    %213 = vmatpush2.bf16.xpose.msra.mxu0 0
    %214 = vmatprep.mubr.bf16.mxu0 0
    %215 = vmatmul.mubr.bf16.gmra.mxu0 %v177
    %v216 = vpop.f32.mrf.mxu0
    %v217 = vadd.f32 0.0, %v216
    %v218 = vpop.f32.mrf.mxu0
    %v219 = vpop.f32.mrf.mxu0
    %v220 = vpop.f32.mrf.mxu0
    %221 = vdwg.mxu0
    %223 = vrot.lane.b32.xlu0 %v167, 96
    %v224 = vpop.permute.xlu0 %223
    %v226 = vsel %vm175, %v167, 0
    %v229 = vsel %vm175, %v224, 0
    %231 = vmatprep.subr.bf16.mxu0 0
    %232 = vmatpush1.bf16.xpose.msra.mxu0 0
    %233 = vmatprep.subr.bf16.mxu0 0
    %234 = vmatpush1.bf16.xpose.msra.mxu0 0
    %235 = vmatprep.subr.bf16.mxu0 0
    %236 = vmatpush1.bf16.xpose.msra.mxu0 0
    %237 = vmatprep.subr.bf16.mxu0 0
    %238 = vmatpush1.bf16.xpose.msra.mxu0 0
    %239 = vmatprep.subr.bf16.mxu0 0
    %240 = vmatpush1.bf16.xpose.msra.mxu0 0
    %241 = vmatprep.subr.bf16.mxu0 0
    %242 = vmatpush1.bf16.xpose.msra.mxu0 0
    %243 = vmatprep.subr.bf16.mxu0 0
    %244 = vmatpush1.bf16.xpose.msra.mxu0 0
    %245 = vmatprep.subr.bf16.mxu0 0
    %246 = vmatpush1.bf16.xpose.msra.mxu0 %v229
    %247 = vmatprep.subr.bf16.mxu0 0
    %248 = vmatpush2.bf16.xpose.msra.mxu0 0
    %249 = vmatprep.subr.bf16.mxu0 0
    %250 = vmatpush2.bf16.xpose.msra.mxu0 0
    %251 = vmatprep.subr.bf16.mxu0 0
    %252 = vmatpush2.bf16.xpose.msra.mxu0 0
    %253 = vmatprep.subr.bf16.mxu0 0
    %254 = vmatpush2.bf16.xpose.msra.mxu0 0
    %255 = vmatprep.subr.bf16.mxu0 0
    %256 = vmatpush2.bf16.xpose.msra.mxu0 0
    %257 = vmatprep.subr.bf16.mxu0 0
    %258 = vmatpush2.bf16.xpose.msra.mxu0 0
    %259 = vmatprep.subr.bf16.mxu0 0
    %260 = vmatpush2.bf16.xpose.msra.mxu0 0
    %261 = vmatprep.subr.bf16.mxu0 0
    %262 = vmatpush2.bf16.xpose.msra.mxu0 0
    %263 = vmatprep.mubr.bf16.mxu0 0
    %264 = vmatmul.mubr.bf16.gmra.mxu0 %v226
    %v265 = vpop.f32.mrf.mxu0
    %v266 = vadd.f32 0.0, %v265
    %v267 = vpop.f32.mrf.mxu0
    %v268 = vpop.f32.mrf.mxu0
    %v269 = vpop.f32.mrf.mxu0
    %270 = vdwg.mxu0
    %272 = vrot.lane.b32.xlu0 %v168, 96
    %v273 = vpop.permute.xlu0 %272
    %v275 = vsel %vm175, %v168, 0
    %v278 = vsel %vm175, %v273, 0
    %280 = vmatprep.subr.bf16.mxu0 0
    %281 = vmatpush1.bf16.xpose.msra.mxu0 0
    %282 = vmatprep.subr.bf16.mxu0 0
    %283 = vmatpush1.bf16.xpose.msra.mxu0 0
    %284 = vmatprep.subr.bf16.mxu0 0
    %285 = vmatpush1.bf16.xpose.msra.mxu0 0
    %286 = vmatprep.subr.bf16.mxu0 0
    %287 = vmatpush1.bf16.xpose.msra.mxu0 0
    %288 = vmatprep.subr.bf16.mxu0 0
    %289 = vmatpush1.bf16.xpose.msra.mxu0 0
    %290 = vmatprep.subr.bf16.mxu0 0
    %291 = vmatpush1.bf16.xpose.msra.mxu0 0
    %292 = vmatprep.subr.bf16.mxu0 0
    %293 = vmatpush1.bf16.xpose.msra.mxu0 0
    %294 = vmatprep.subr.bf16.mxu0 0
    %295 = vmatpush1.bf16.xpose.msra.mxu0 %v278
    %296 = vmatprep.subr.bf16.mxu0 0
    %297 = vmatpush2.bf16.xpose.msra.mxu0 0
    %298 = vmatprep.subr.bf16.mxu0 0
    %299 = vmatpush2.bf16.xpose.msra.mxu0 0
    %300 = vmatprep.subr.bf16.mxu0 0
    %301 = vmatpush2.bf16.xpose.msra.mxu0 0
    %302 = vmatprep.subr.bf16.mxu0 0
    %303 = vmatpush2.bf16.xpose.msra.mxu0 0
    %304 = vmatprep.subr.bf16.mxu0 0
    %305 = vmatpush2.bf16.xpose.msra.mxu0 0
    %306 = vmatprep.subr.bf16.mxu0 0
    %307 = vmatpush2.bf16.xpose.msra.mxu0 0
    %308 = vmatprep.subr.bf16.mxu0 0
    %309 = vmatpush2.bf16.xpose.msra.mxu0 0
    %310 = vmatprep.subr.bf16.mxu0 0
    %311 = vmatpush2.bf16.xpose.msra.mxu0 0
    %312 = vmatprep.mubr.bf16.mxu0 0
    %313 = vmatmul.mubr.bf16.gmra.mxu0 %v275
    %v314 = vpop.f32.mrf.mxu0
    %v315 = vadd.f32 0.0, %v314
    %v316 = vpop.f32.mrf.mxu0
    %v317 = vpop.f32.mrf.mxu0
    %v318 = vpop.f32.mrf.mxu0
    %319 = vdwg.mxu0
    %321 = vrot.lane.b32.xlu0 %v169, 96
    %v322 = vpop.permute.xlu0 %321
    %v324 = vsel %vm175, %v169, 0
    %v327 = vsel %vm175, %v322, 0
    %329 = vmatprep.subr.bf16.mxu0 0
    %330 = vmatpush1.bf16.xpose.msra.mxu0 0
    %331 = vmatprep.subr.bf16.mxu0 0
    %332 = vmatpush1.bf16.xpose.msra.mxu0 0
    %333 = vmatprep.subr.bf16.mxu0 0
    %334 = vmatpush1.bf16.xpose.msra.mxu0 0
    %335 = vmatprep.subr.bf16.mxu0 0
    %336 = vmatpush1.bf16.xpose.msra.mxu0 0
    %337 = vmatprep.subr.bf16.mxu0 0
    %338 = vmatpush1.bf16.xpose.msra.mxu0 0
    %339 = vmatprep.subr.bf16.mxu0 0
    %340 = vmatpush1.bf16.xpose.msra.mxu0 0
    %341 = vmatprep.subr.bf16.mxu0 0
    %342 = vmatpush1.bf16.xpose.msra.mxu0 0
    %343 = vmatprep.subr.bf16.mxu0 0
    %344 = vmatpush1.bf16.xpose.msra.mxu0 %v327
    %345 = vmatprep.subr.bf16.mxu0 0
    %346 = vmatpush2.bf16.xpose.msra.mxu0 0
    %347 = vmatprep.subr.bf16.mxu0 0
    %348 = vmatpush2.bf16.xpose.msra.mxu0 0
    %349 = vmatprep.subr.bf16.mxu0 0
    %350 = vmatpush2.bf16.xpose.msra.mxu0 0
    %351 = vmatprep.subr.bf16.mxu0 0
    %352 = vmatpush2.bf16.xpose.msra.mxu0 0
    %353 = vmatprep.subr.bf16.mxu0 0
    %354 = vmatpush2.bf16.xpose.msra.mxu0 0
    %355 = vmatprep.subr.bf16.mxu0 0
    %356 = vmatpush2.bf16.xpose.msra.mxu0 0
    %357 = vmatprep.subr.bf16.mxu0 0
    %358 = vmatpush2.bf16.xpose.msra.mxu0 0
    %359 = vmatprep.subr.bf16.mxu0 0
    %360 = vmatpush2.bf16.xpose.msra.mxu0 0
    %361 = vmatprep.mubr.bf16.mxu0 0
    %362 = vmatmul.mubr.bf16.gmra.mxu0 %v324
    %v363 = vpop.f32.mrf.mxu0
    %v364 = vadd.f32 0.0, %v363
    %v365 = vpop.f32.mrf.mxu0
    %v366 = vpop.f32.mrf.mxu0
    %v367 = vpop.f32.mrf.mxu0
    %368 = vdwg.mxu0
    %370 = vrot.lane.b32.xlu0 %v170, 96
    %v371 = vpop.permute.xlu0 %370
    %v373 = vsel %vm175, %v170, 0
    %v376 = vsel %vm175, %v371, 0
    %378 = vmatprep.subr.bf16.mxu0 0
    %379 = vmatpush1.bf16.xpose.msra.mxu0 0
    %380 = vmatprep.subr.bf16.mxu0 0
    %381 = vmatpush1.bf16.xpose.msra.mxu0 0
    %382 = vmatprep.subr.bf16.mxu0 0
    %383 = vmatpush1.bf16.xpose.msra.mxu0 0
    %384 = vmatprep.subr.bf16.mxu0 0
    %385 = vmatpush1.bf16.xpose.msra.mxu0 0
    %386 = vmatprep.subr.bf16.mxu0 0
    %387 = vmatpush1.bf16.xpose.msra.mxu0 0
    %388 = vmatprep.subr.bf16.mxu0 0
    %389 = vmatpush1.bf16.xpose.msra.mxu0 0
    %390 = vmatprep.subr.bf16.mxu0 0
    %391 = vmatpush1.bf16.xpose.msra.mxu0 0
    %392 = vmatprep.subr.bf16.mxu0 0
    %393 = vmatpush1.bf16.xpose.msra.mxu0 %v376
    %394 = vmatprep.subr.bf16.mxu0 0
    %395 = vmatpush2.bf16.xpose.msra.mxu0 0
    %396 = vmatprep.subr.bf16.mxu0 0
    %397 = vmatpush2.bf16.xpose.msra.mxu0 0
    %398 = vmatprep.subr.bf16.mxu0 0
    %399 = vmatpush2.bf16.xpose.msra.mxu0 0
    %400 = vmatprep.subr.bf16.mxu0 0
    %401 = vmatpush2.bf16.xpose.msra.mxu0 0
    %402 = vmatprep.subr.bf16.mxu0 0
    %403 = vmatpush2.bf16.xpose.msra.mxu0 0
    %404 = vmatprep.subr.bf16.mxu0 0
    %405 = vmatpush2.bf16.xpose.msra.mxu0 0
    %406 = vmatprep.subr.bf16.mxu0 0
    %407 = vmatpush2.bf16.xpose.msra.mxu0 0
    %408 = vmatprep.subr.bf16.mxu0 0
    %409 = vmatpush2.bf16.xpose.msra.mxu0 0
    %410 = vmatprep.mubr.bf16.mxu0 0
    %411 = vmatmul.mubr.bf16.gmra.mxu0 %v373
    %v412 = vpop.f32.mrf.mxu0
    %v413 = vadd.f32 0.0, %v412
    %v414 = vpop.f32.mrf.mxu0
    %v415 = vpop.f32.mrf.mxu0
    %v416 = vpop.f32.mrf.mxu0
    %417 = vdwg.mxu0
    %419 = vrot.lane.b32.xlu0 %v171, 96
    %v420 = vpop.permute.xlu0 %419
    %v422 = vsel %vm175, %v171, 0
    %v425 = vsel %vm175, %v420, 0
    %427 = vmatprep.subr.bf16.mxu0 0
    %428 = vmatpush1.bf16.xpose.msra.mxu0 0
    %429 = vmatprep.subr.bf16.mxu0 0
    %430 = vmatpush1.bf16.xpose.msra.mxu0 0
    %431 = vmatprep.subr.bf16.mxu0 0
    %432 = vmatpush1.bf16.xpose.msra.mxu0 0
    %433 = vmatprep.subr.bf16.mxu0 0
    %434 = vmatpush1.bf16.xpose.msra.mxu0 0
    %435 = vmatprep.subr.bf16.mxu0 0
    %436 = vmatpush1.bf16.xpose.msra.mxu0 0
    %437 = vmatprep.subr.bf16.mxu0 0
    %438 = vmatpush1.bf16.xpose.msra.mxu0 0
    %439 = vmatprep.subr.bf16.mxu0 0
    %440 = vmatpush1.bf16.xpose.msra.mxu0 0
    %441 = vmatprep.subr.bf16.mxu0 0
    %442 = vmatpush1.bf16.xpose.msra.mxu0 %v425
    %443 = vmatprep.subr.bf16.mxu0 0
    %444 = vmatpush2.bf16.xpose.msra.mxu0 0
    %445 = vmatprep.subr.bf16.mxu0 0
    %446 = vmatpush2.bf16.xpose.msra.mxu0 0
    %447 = vmatprep.subr.bf16.mxu0 0
    %448 = vmatpush2.bf16.xpose.msra.mxu0 0
    %449 = vmatprep.subr.bf16.mxu0 0
    %450 = vmatpush2.bf16.xpose.msra.mxu0 0
    %451 = vmatprep.subr.bf16.mxu0 0
    %452 = vmatpush2.bf16.xpose.msra.mxu0 0
    %453 = vmatprep.subr.bf16.mxu0 0
    %454 = vmatpush2.bf16.xpose.msra.mxu0 0
    %455 = vmatprep.subr.bf16.mxu0 0
    %456 = vmatpush2.bf16.xpose.msra.mxu0 0
    %457 = vmatprep.subr.bf16.mxu0 0
    %458 = vmatpush2.bf16.xpose.msra.mxu0 0
    %459 = vmatprep.mubr.bf16.mxu0 0
    %460 = vmatmul.mubr.bf16.gmra.mxu0 %v422
    %v461 = vpop.f32.mrf.mxu0
    %v462 = vadd.f32 0.0, %v461
    %v463 = vpop.f32.mrf.mxu0
    %v464 = vpop.f32.mrf.mxu0
    %v465 = vpop.f32.mrf.mxu0
    %466 = vdwg.mxu0
    %v467 = vsel %vm175, %v217, -inf
    %v468 = vrot.slane %v467, 4
    %v469 = vmax.f32 %v467, %v468
    %v470 = vrot.slane %v469, 2
    %v471 = vmax.f32 %v469, %v470
    %v472 = vrot.slane %v471, 1
    %v473 = vmax.f32 %v471, %v472
    %v474 = vsel %vm175, %v266, -inf
    %v475 = vrot.slane %v474, 4
    %v476 = vmax.f32 %v474, %v475
    %v477 = vrot.slane %v476, 2
    %v478 = vmax.f32 %v476, %v477
    %v479 = vrot.slane %v478, 1
    %v480 = vmax.f32 %v478, %v479
    %v481 = vsel %vm175, %v315, -inf
    %v482 = vrot.slane %v481, 4
    %v483 = vmax.f32 %v481, %v482
    %v484 = vrot.slane %v483, 2
    %v485 = vmax.f32 %v483, %v484
    %v486 = vrot.slane %v485, 1
    %v487 = vmax.f32 %v485, %v486
    %v488 = vsel %vm175, %v364, -inf
    %v489 = vrot.slane %v488, 4
    %v490 = vmax.f32 %v488, %v489
    %v491 = vrot.slane %v490, 2
    %v492 = vmax.f32 %v490, %v491
    %v493 = vrot.slane %v492, 1
    %v494 = vmax.f32 %v492, %v493
    %v495 = vsel %vm175, %v413, -inf
    %v496 = vrot.slane %v495, 4
    %v497 = vmax.f32 %v495, %v496
    %v498 = vrot.slane %v497, 2
    %v499 = vmax.f32 %v497, %v498
    %v500 = vrot.slane %v499, 1
    %v501 = vmax.f32 %v499, %v500
    %v502 = vsel %vm175, %v462, -inf
    %v503 = vrot.slane %v502, 4
    %v504 = vmax.f32 %v502, %v503
    %v505 = vrot.slane %v504, 2
    %v506 = vmax.f32 %v504, %v505
    %v507 = vrot.slane %v506, 1
    %v508 = vmax.f32 %v506, %v507
    %v509 = vsub.f32 %v217, %v473
    %v510 = vsub.f32 %v266, %v480
    %v511 = vsub.f32 %v315, %v487
    %v512 = vsub.f32 %v364, %v494
    %v513 = vsub.f32 %v413, %v501
    %v514 = vsub.f32 %v462, %v508
    %v515 = vmul.f32 %v509, 1.442695
    %v516 = vpow.pop %v515
    %v517 = vmul.f32 %v510, 1.442695
    %v518 = vpow.pop %v517
    %v519 = vmul.f32 %v511, 1.442695
    %v520 = vpow.pop %v519
    %v521 = vmul.f32 %v512, 1.442695
    %v522 = vpow.pop %v521
    %v523 = vmul.f32 %v513, 1.442695
    %v524 = vpow.pop %v523
    %v525 = vmul.f32 %v514, 1.442695
    %v526 = vpow.pop %v525
    %v527 = vsel %vm175, %v516, 0.0
    %v528 = vrot.slane %v527, 4
    %v529 = vadd.f32 %v527, %v528
    %v530 = vrot.slane %v529, 2
    %v531 = vadd.f32 %v529, %v530
    %v532 = vrot.slane %v531, 1
    %v533 = vadd.f32 %v531, %v532
    %v534 = vsel %vm175, %v518, 0.0
    %v535 = vrot.slane %v534, 4
    %v536 = vadd.f32 %v534, %v535
    %v537 = vrot.slane %v536, 2
    %v538 = vadd.f32 %v536, %v537
    %v539 = vrot.slane %v538, 1
    %v540 = vadd.f32 %v538, %v539
    %v541 = vsel %vm175, %v520, 0.0
    %v542 = vrot.slane %v541, 4
    %v543 = vadd.f32 %v541, %v542
    %v544 = vrot.slane %v543, 2
    %v545 = vadd.f32 %v543, %v544
    %v546 = vrot.slane %v545, 1
    %v547 = vadd.f32 %v545, %v546
    %v548 = vsel %vm175, %v522, 0.0
    %v549 = vrot.slane %v548, 4
    %v550 = vadd.f32 %v548, %v549
    %v551 = vrot.slane %v550, 2
    %v552 = vadd.f32 %v550, %v551
    %v553 = vrot.slane %v552, 1
    %v554 = vadd.f32 %v552, %v553
    %v555 = vsel %vm175, %v524, 0.0
    %v556 = vrot.slane %v555, 4
    %v557 = vadd.f32 %v555, %v556
    %v558 = vrot.slane %v557, 2
    %v559 = vadd.f32 %v557, %v558
    %v560 = vrot.slane %v559, 1
    %v561 = vadd.f32 %v559, %v560
    %v562 = vsel %vm175, %v526, 0.0
    %v563 = vrot.slane %v562, 4
    %v564 = vadd.f32 %v562, %v563
    %v565 = vrot.slane %v564, 2
    %v566 = vadd.f32 %v564, %v565
    %v567 = vrot.slane %v566, 1
    %v568 = vadd.f32 %v566, %v567
    %v569 = vrcp.pop %v533
    %v570 = vrcp.pop %v540
    %v571 = vrcp.pop %v547
    %v572 = vrcp.pop %v554
    %v573 = vrcp.pop %v561
    %v574 = vrcp.pop %v568
    %v575 = vmul.f32 %v516, %v569
    %v576 = vmul.f32 %v518, %v570
    %v577 = vmul.f32 %v520, %v571
    %v578 = vmul.f32 %v522, %v572
    %v579 = vmul.f32 %v524, %v573
    %v580 = vmul.f32 %v526, %v574
    %v581 = vpack.c.bf16 %v575, %v575
    %v582 = vpack.c.bf16 %v576, %v576
    %v583 = vpack.c.bf16 %v577, %v577
    %v584 = vpack.c.bf16 %v578, %v578
    %v585 = vpack.c.bf16 %v579, %v579
    %v586 = vpack.c.bf16 %v580, %v580
    %587 = vrot.lane.b32.xlu0 %v166, 64
    %v588 = vpop.permute.xlu0 %587
    %v590 = vsel %vm175, %v581, 0
    %vm592 = vcmask 1043456
    %v594 = vsel %vm592, %v588, 0
    %596 = vmatprep.subr.bf16.mxu0 0
    %597 = vmatpush1.bf16.msra.mxu0 0
    %598 = vmatprep.subr.bf16.mxu0 0
    %599 = vmatpush1.bf16.msra.mxu0 0
    %600 = vmatprep.subr.bf16.mxu0 0
    %601 = vmatpush1.bf16.msra.mxu0 0
    %602 = vmatprep.subr.bf16.mxu0 0
    %603 = vmatpush1.bf16.msra.mxu0 0
    %604 = vmatprep.subr.bf16.mxu0 0
    %605 = vmatpush1.bf16.msra.mxu0 0
    %606 = vmatprep.subr.bf16.mxu0 0
    %607 = vmatpush1.bf16.msra.mxu0 0
    %608 = vmatprep.subr.bf16.mxu0 0
    %609 = vmatpush1.bf16.msra.mxu0 0
    %610 = vmatprep.subr.bf16.mxu0 0
    %611 = vmatpush1.bf16.msra.mxu0 %v594
    %612 = vmatprep.subr.bf16.mxu0 0
    %613 = vmatpush2.bf16.msra.mxu0 0
    %614 = vmatprep.subr.bf16.mxu0 0
    %615 = vmatpush2.bf16.msra.mxu0 0
    %616 = vmatprep.subr.bf16.mxu0 0
    %617 = vmatpush2.bf16.msra.mxu0 0
    %618 = vmatprep.subr.bf16.mxu0 0
    %619 = vmatpush2.bf16.msra.mxu0 0
    %620 = vmatprep.subr.bf16.mxu0 0
    %621 = vmatpush2.bf16.msra.mxu0 0
    %622 = vmatprep.subr.bf16.mxu0 0
    %623 = vmatpush2.bf16.msra.mxu0 0
    %624 = vmatprep.subr.bf16.mxu0 0
    %625 = vmatpush2.bf16.msra.mxu0 0
    %626 = vmatprep.subr.bf16.mxu0 0
    %627 = vmatpush2.bf16.msra.mxu0 0
    %628 = vmatprep.mubr.bf16.mxu0 0
    %629 = vmatmul.mubr.bf16.gmra.mxu0 %v590
    %v630 = vpop.f32.mrf.mxu0
    %v631 = vadd.f32 0.0, %v630
    %v632 = vpop.f32.mrf.mxu0
    %v633 = vpop.f32.mrf.mxu0
    %v634 = vpop.f32.mrf.mxu0
    %635 = vdwg.mxu0
    %636 = vrot.lane.b32.xlu0 %v167, 64
    %v637 = vpop.permute.xlu0 %636
    %v639 = vsel %vm175, %v582, 0
    %v642 = vsel %vm592, %v637, 0
    %644 = vmatprep.subr.bf16.mxu0 0
    %645 = vmatpush1.bf16.msra.mxu0 0
    %646 = vmatprep.subr.bf16.mxu0 0
    %647 = vmatpush1.bf16.msra.mxu0 0
    %648 = vmatprep.subr.bf16.mxu0 0
    %649 = vmatpush1.bf16.msra.mxu0 0
    %650 = vmatprep.subr.bf16.mxu0 0
    %651 = vmatpush1.bf16.msra.mxu0 0
    %652 = vmatprep.subr.bf16.mxu0 0
    %653 = vmatpush1.bf16.msra.mxu0 0
    %654 = vmatprep.subr.bf16.mxu0 0
    %655 = vmatpush1.bf16.msra.mxu0 0
    %656 = vmatprep.subr.bf16.mxu0 0
    %657 = vmatpush1.bf16.msra.mxu0 0
    %658 = vmatprep.subr.bf16.mxu0 0
    %659 = vmatpush1.bf16.msra.mxu0 %v642
    %660 = vmatprep.subr.bf16.mxu0 0
    %661 = vmatpush2.bf16.msra.mxu0 0
    %662 = vmatprep.subr.bf16.mxu0 0
    %663 = vmatpush2.bf16.msra.mxu0 0
    %664 = vmatprep.subr.bf16.mxu0 0
    %665 = vmatpush2.bf16.msra.mxu0 0
    %666 = vmatprep.subr.bf16.mxu0 0
    %667 = vmatpush2.bf16.msra.mxu0 0
    %668 = vmatprep.subr.bf16.mxu0 0
    %669 = vmatpush2.bf16.msra.mxu0 0
    %670 = vmatprep.subr.bf16.mxu0 0
    %671 = vmatpush2.bf16.msra.mxu0 0
    %672 = vmatprep.subr.bf16.mxu0 0
    %673 = vmatpush2.bf16.msra.mxu0 0
    %674 = vmatprep.subr.bf16.mxu0 0
    %675 = vmatpush2.bf16.msra.mxu0 0
    %676 = vmatprep.mubr.bf16.mxu0 0
    %677 = vmatmul.mubr.bf16.gmra.mxu0 %v639
    %v678 = vpop.f32.mrf.mxu0
    %v679 = vadd.f32 0.0, %v678
    %v680 = vpop.f32.mrf.mxu0
    %v681 = vpop.f32.mrf.mxu0
    %v682 = vpop.f32.mrf.mxu0
    %683 = vdwg.mxu0
    %684 = vrot.lane.b32.xlu0 %v168, 64
    %v685 = vpop.permute.xlu0 %684
    %v687 = vsel %vm175, %v583, 0
    %v690 = vsel %vm592, %v685, 0
    %692 = vmatprep.subr.bf16.mxu0 0
    %693 = vmatpush1.bf16.msra.mxu0 0
    %694 = vmatprep.subr.bf16.mxu0 0
    %695 = vmatpush1.bf16.msra.mxu0 0
    %696 = vmatprep.subr.bf16.mxu0 0
    %697 = vmatpush1.bf16.msra.mxu0 0
    %698 = vmatprep.subr.bf16.mxu0 0
    %699 = vmatpush1.bf16.msra.mxu0 0
    %700 = vmatprep.subr.bf16.mxu0 0
    %701 = vmatpush1.bf16.msra.mxu0 0
    %702 = vmatprep.subr.bf16.mxu0 0
    %703 = vmatpush1.bf16.msra.mxu0 0
    %704 = vmatprep.subr.bf16.mxu0 0
    %705 = vmatpush1.bf16.msra.mxu0 0
    %706 = vmatprep.subr.bf16.mxu0 0
    %707 = vmatpush1.bf16.msra.mxu0 %v690
    %708 = vmatprep.subr.bf16.mxu0 0
    %709 = vmatpush2.bf16.msra.mxu0 0
    %710 = vmatprep.subr.bf16.mxu0 0
    %711 = vmatpush2.bf16.msra.mxu0 0
    %712 = vmatprep.subr.bf16.mxu0 0
    %713 = vmatpush2.bf16.msra.mxu0 0
    %714 = vmatprep.subr.bf16.mxu0 0
    %715 = vmatpush2.bf16.msra.mxu0 0
    %716 = vmatprep.subr.bf16.mxu0 0
    %717 = vmatpush2.bf16.msra.mxu0 0
    %718 = vmatprep.subr.bf16.mxu0 0
    %719 = vmatpush2.bf16.msra.mxu0 0
    %720 = vmatprep.subr.bf16.mxu0 0
    %721 = vmatpush2.bf16.msra.mxu0 0
    %722 = vmatprep.subr.bf16.mxu0 0
    %723 = vmatpush2.bf16.msra.mxu0 0
    %724 = vmatprep.mubr.bf16.mxu0 0
    %725 = vmatmul.mubr.bf16.gmra.mxu0 %v687
    %v726 = vpop.f32.mrf.mxu0
    %v727 = vadd.f32 0.0, %v726
    %v728 = vpop.f32.mrf.mxu0
    %v729 = vpop.f32.mrf.mxu0
    %v730 = vpop.f32.mrf.mxu0
    %731 = vdwg.mxu0
    %732 = vrot.lane.b32.xlu0 %v169, 64
    %v733 = vpop.permute.xlu0 %732
    %v735 = vsel %vm175, %v584, 0
    %v738 = vsel %vm592, %v733, 0
    %740 = vmatprep.subr.bf16.mxu0 0
    %741 = vmatpush1.bf16.msra.mxu0 0
    %742 = vmatprep.subr.bf16.mxu0 0
    %743 = vmatpush1.bf16.msra.mxu0 0
    %744 = vmatprep.subr.bf16.mxu0 0
    %745 = vmatpush1.bf16.msra.mxu0 0
    %746 = vmatprep.subr.bf16.mxu0 0
    %747 = vmatpush1.bf16.msra.mxu0 0
    %748 = vmatprep.subr.bf16.mxu0 0
    %749 = vmatpush1.bf16.msra.mxu0 0
    %750 = vmatprep.subr.bf16.mxu0 0
    %751 = vmatpush1.bf16.msra.mxu0 0
    %752 = vmatprep.subr.bf16.mxu0 0
    %753 = vmatpush1.bf16.msra.mxu0 0
    %754 = vmatprep.subr.bf16.mxu0 0
    %755 = vmatpush1.bf16.msra.mxu0 %v738
    %756 = vmatprep.subr.bf16.mxu0 0
    %757 = vmatpush2.bf16.msra.mxu0 0
    %758 = vmatprep.subr.bf16.mxu0 0
    %759 = vmatpush2.bf16.msra.mxu0 0
    %760 = vmatprep.subr.bf16.mxu0 0
    %761 = vmatpush2.bf16.msra.mxu0 0
    %762 = vmatprep.subr.bf16.mxu0 0
    %763 = vmatpush2.bf16.msra.mxu0 0
    %764 = vmatprep.subr.bf16.mxu0 0
    %765 = vmatpush2.bf16.msra.mxu0 0
    %766 = vmatprep.subr.bf16.mxu0 0
    %767 = vmatpush2.bf16.msra.mxu0 0
    %768 = vmatprep.subr.bf16.mxu0 0
    %769 = vmatpush2.bf16.msra.mxu0 0
    %770 = vmatprep.subr.bf16.mxu0 0
    %771 = vmatpush2.bf16.msra.mxu0 0
    %772 = vmatprep.mubr.bf16.mxu0 0
    %773 = vmatmul.mubr.bf16.gmra.mxu0 %v735
    %v774 = vpop.f32.mrf.mxu0
    %v775 = vadd.f32 0.0, %v774
    %v776 = vpop.f32.mrf.mxu0
    %v777 = vpop.f32.mrf.mxu0
    %v778 = vpop.f32.mrf.mxu0
    %779 = vdwg.mxu0
    %780 = vrot.lane.b32.xlu0 %v170, 64
    %v781 = vpop.permute.xlu0 %780
    %v783 = vsel %vm175, %v585, 0
    %v786 = vsel %vm592, %v781, 0
    %788 = vmatprep.subr.bf16.mxu0 0
    %789 = vmatpush1.bf16.msra.mxu0 0
    %790 = vmatprep.subr.bf16.mxu0 0
    %791 = vmatpush1.bf16.msra.mxu0 0
    %792 = vmatprep.subr.bf16.mxu0 0
    %793 = vmatpush1.bf16.msra.mxu0 0
    %794 = vmatprep.subr.bf16.mxu0 0
    %795 = vmatpush1.bf16.msra.mxu0 0
    %796 = vmatprep.subr.bf16.mxu0 0
    %797 = vmatpush1.bf16.msra.mxu0 0
    %798 = vmatprep.subr.bf16.mxu0 0
    %799 = vmatpush1.bf16.msra.mxu0 0
    %800 = vmatprep.subr.bf16.mxu0 0
    %801 = vmatpush1.bf16.msra.mxu0 0
    %802 = vmatprep.subr.bf16.mxu0 0
    %803 = vmatpush1.bf16.msra.mxu0 %v786
    %804 = vmatprep.subr.bf16.mxu0 0
    %805 = vmatpush2.bf16.msra.mxu0 0
    %806 = vmatprep.subr.bf16.mxu0 0
    %807 = vmatpush2.bf16.msra.mxu0 0
    %808 = vmatprep.subr.bf16.mxu0 0
    %809 = vmatpush2.bf16.msra.mxu0 0
    %810 = vmatprep.subr.bf16.mxu0 0
    %811 = vmatpush2.bf16.msra.mxu0 0
    %812 = vmatprep.subr.bf16.mxu0 0
    %813 = vmatpush2.bf16.msra.mxu0 0
    %814 = vmatprep.subr.bf16.mxu0 0
    %815 = vmatpush2.bf16.msra.mxu0 0
    %816 = vmatprep.subr.bf16.mxu0 0
    %817 = vmatpush2.bf16.msra.mxu0 0
    %818 = vmatprep.subr.bf16.mxu0 0
    %819 = vmatpush2.bf16.msra.mxu0 0
    %820 = vmatprep.mubr.bf16.mxu0 0
    %821 = vmatmul.mubr.bf16.gmra.mxu0 %v783
    %v822 = vpop.f32.mrf.mxu0
    %v823 = vadd.f32 0.0, %v822
    %v824 = vpop.f32.mrf.mxu0
    %v825 = vpop.f32.mrf.mxu0
    %v826 = vpop.f32.mrf.mxu0
    %827 = vdwg.mxu0
    %828 = vrot.lane.b32.xlu0 %v171, 64
    %v829 = vpop.permute.xlu0 %828
    %v831 = vsel %vm175, %v586, 0
    %v834 = vsel %vm592, %v829, 0
    %836 = vmatprep.subr.bf16.mxu0 0
    %837 = vmatpush1.bf16.msra.mxu0 0
    %838 = vmatprep.subr.bf16.mxu0 0
    %839 = vmatpush1.bf16.msra.mxu0 0
    %840 = vmatprep.subr.bf16.mxu0 0
    %841 = vmatpush1.bf16.msra.mxu0 0
    %842 = vmatprep.subr.bf16.mxu0 0
    %843 = vmatpush1.bf16.msra.mxu0 0
    %844 = vmatprep.subr.bf16.mxu0 0
    %845 = vmatpush1.bf16.msra.mxu0 0
    %846 = vmatprep.subr.bf16.mxu0 0
    %847 = vmatpush1.bf16.msra.mxu0 0
    %848 = vmatprep.subr.bf16.mxu0 0
    %849 = vmatpush1.bf16.msra.mxu0 0
    %850 = vmatprep.subr.bf16.mxu0 0
    %851 = vmatpush1.bf16.msra.mxu0 %v834
    %852 = vmatprep.subr.bf16.mxu0 0
    %853 = vmatpush2.bf16.msra.mxu0 0
    %854 = vmatprep.subr.bf16.mxu0 0
    %855 = vmatpush2.bf16.msra.mxu0 0
    %856 = vmatprep.subr.bf16.mxu0 0
    %857 = vmatpush2.bf16.msra.mxu0 0
    %858 = vmatprep.subr.bf16.mxu0 0
    %859 = vmatpush2.bf16.msra.mxu0 0
    %860 = vmatprep.subr.bf16.mxu0 0
    %861 = vmatpush2.bf16.msra.mxu0 0
    %862 = vmatprep.subr.bf16.mxu0 0
    %863 = vmatpush2.bf16.msra.mxu0 0
    %864 = vmatprep.subr.bf16.mxu0 0
    %865 = vmatpush2.bf16.msra.mxu0 0
    %866 = vmatprep.subr.bf16.mxu0 0
    %867 = vmatpush2.bf16.msra.mxu0 0
    %868 = vmatprep.mubr.bf16.mxu0 0
    %869 = vmatmul.mubr.bf16.gmra.mxu0 %v831
    %v870 = vpop.f32.mrf.mxu0
    %v871 = vadd.f32 0.0, %v870
    %v872 = vpop.f32.mrf.mxu0
    %v873 = vpop.f32.mrf.mxu0
    %v874 = vpop.f32.mrf.mxu0
    %875 = vdwg.mxu0
    %876 = vrot.lane.b32.xlu0 %v166, 120
    %v877 = vpop.permute.xlu0 %876
    %878 = vrot.lane.b32.xlu0 %v166, 88
    %v879 = vpop.permute.xlu0 %878
    %v881 = vsel %vm175, %v877, 0
    %v884 = vsel %vm175, %v879, 0
    %886 = vmatprep.subr.bf16.mxu0 0
    %887 = vmatpush1.bf16.xpose.msra.mxu0 0
    %888 = vmatprep.subr.bf16.mxu0 0
    %889 = vmatpush1.bf16.xpose.msra.mxu0 0
    %890 = vmatprep.subr.bf16.mxu0 0
    %891 = vmatpush1.bf16.xpose.msra.mxu0 0
    %892 = vmatprep.subr.bf16.mxu0 0
    %893 = vmatpush1.bf16.xpose.msra.mxu0 0
    %894 = vmatprep.subr.bf16.mxu0 0
    %895 = vmatpush1.bf16.xpose.msra.mxu0 0
    %896 = vmatprep.subr.bf16.mxu0 0
    %897 = vmatpush1.bf16.xpose.msra.mxu0 0
    %898 = vmatprep.subr.bf16.mxu0 0
    %899 = vmatpush1.bf16.xpose.msra.mxu0 0
    %900 = vmatprep.subr.bf16.mxu0 0
    %901 = vmatpush1.bf16.xpose.msra.mxu0 %v884
    %902 = vmatprep.subr.bf16.mxu0 0
    %903 = vmatpush2.bf16.xpose.msra.mxu0 0
    %904 = vmatprep.subr.bf16.mxu0 0
    %905 = vmatpush2.bf16.xpose.msra.mxu0 0
    %906 = vmatprep.subr.bf16.mxu0 0
    %907 = vmatpush2.bf16.xpose.msra.mxu0 0
    %908 = vmatprep.subr.bf16.mxu0 0
    %909 = vmatpush2.bf16.xpose.msra.mxu0 0
    %910 = vmatprep.subr.bf16.mxu0 0
    %911 = vmatpush2.bf16.xpose.msra.mxu0 0
    %912 = vmatprep.subr.bf16.mxu0 0
    %913 = vmatpush2.bf16.xpose.msra.mxu0 0
    %914 = vmatprep.subr.bf16.mxu0 0
    %915 = vmatpush2.bf16.xpose.msra.mxu0 0
    %916 = vmatprep.subr.bf16.mxu0 0
    %917 = vmatpush2.bf16.xpose.msra.mxu0 0
    %918 = vmatprep.mubr.bf16.mxu0 0
    %919 = vmatmul.mubr.bf16.gmra.mxu0 %v881
    %v920 = vpop.f32.mrf.mxu0
    %v921 = vadd.f32 0.0, %v920
    %v922 = vpop.f32.mrf.mxu0
    %v923 = vpop.f32.mrf.mxu0
    %v924 = vpop.f32.mrf.mxu0
    %925 = vdwg.mxu0
    %926 = vrot.lane.b32.xlu0 %v167, 120
    %v927 = vpop.permute.xlu0 %926
    %928 = vrot.lane.b32.xlu0 %v167, 88
    %v929 = vpop.permute.xlu0 %928
    %v931 = vsel %vm175, %v927, 0
    %v934 = vsel %vm175, %v929, 0
    %936 = vmatprep.subr.bf16.mxu0 0
    %937 = vmatpush1.bf16.xpose.msra.mxu0 0
    %938 = vmatprep.subr.bf16.mxu0 0
    %939 = vmatpush1.bf16.xpose.msra.mxu0 0
    %940 = vmatprep.subr.bf16.mxu0 0
    %941 = vmatpush1.bf16.xpose.msra.mxu0 0
    %942 = vmatprep.subr.bf16.mxu0 0
    %943 = vmatpush1.bf16.xpose.msra.mxu0 0
    %944 = vmatprep.subr.bf16.mxu0 0
    %945 = vmatpush1.bf16.xpose.msra.mxu0 0
    %946 = vmatprep.subr.bf16.mxu0 0
    %947 = vmatpush1.bf16.xpose.msra.mxu0 0
    %948 = vmatprep.subr.bf16.mxu0 0
    %949 = vmatpush1.bf16.xpose.msra.mxu0 0
    %950 = vmatprep.subr.bf16.mxu0 0
    %951 = vmatpush1.bf16.xpose.msra.mxu0 %v934
    %952 = vmatprep.subr.bf16.mxu0 0
    %953 = vmatpush2.bf16.xpose.msra.mxu0 0
    %954 = vmatprep.subr.bf16.mxu0 0
    %955 = vmatpush2.bf16.xpose.msra.mxu0 0
    %956 = vmatprep.subr.bf16.mxu0 0
    %957 = vmatpush2.bf16.xpose.msra.mxu0 0
    %958 = vmatprep.subr.bf16.mxu0 0
    %959 = vmatpush2.bf16.xpose.msra.mxu0 0
    %960 = vmatprep.subr.bf16.mxu0 0
    %961 = vmatpush2.bf16.xpose.msra.mxu0 0
    %962 = vmatprep.subr.bf16.mxu0 0
    %963 = vmatpush2.bf16.xpose.msra.mxu0 0
    %964 = vmatprep.subr.bf16.mxu0 0
    %965 = vmatpush2.bf16.xpose.msra.mxu0 0
    %966 = vmatprep.subr.bf16.mxu0 0
    %967 = vmatpush2.bf16.xpose.msra.mxu0 0
    %968 = vmatprep.mubr.bf16.mxu0 0
    %969 = vmatmul.mubr.bf16.gmra.mxu0 %v931
    %v970 = vpop.f32.mrf.mxu0
    %v971 = vadd.f32 0.0, %v970
    %v972 = vpop.f32.mrf.mxu0
    %v973 = vpop.f32.mrf.mxu0
    %v974 = vpop.f32.mrf.mxu0
    %975 = vdwg.mxu0
    %976 = vrot.lane.b32.xlu0 %v168, 120
    %v977 = vpop.permute.xlu0 %976
    %978 = vrot.lane.b32.xlu0 %v168, 88
    %v979 = vpop.permute.xlu0 %978
    %v981 = vsel %vm175, %v977, 0
    %v984 = vsel %vm175, %v979, 0
    %986 = vmatprep.subr.bf16.mxu0 0
    %987 = vmatpush1.bf16.xpose.msra.mxu0 0
    %988 = vmatprep.subr.bf16.mxu0 0
    %989 = vmatpush1.bf16.xpose.msra.mxu0 0
    %990 = vmatprep.subr.bf16.mxu0 0
    %991 = vmatpush1.bf16.xpose.msra.mxu0 0
    %992 = vmatprep.subr.bf16.mxu0 0
    %993 = vmatpush1.bf16.xpose.msra.mxu0 0
    %994 = vmatprep.subr.bf16.mxu0 0
    %995 = vmatpush1.bf16.xpose.msra.mxu0 0
    %996 = vmatprep.subr.bf16.mxu0 0
    %997 = vmatpush1.bf16.xpose.msra.mxu0 0
    %998 = vmatprep.subr.bf16.mxu0 0
    %999 = vmatpush1.bf16.xpose.msra.mxu0 0
    %1000 = vmatprep.subr.bf16.mxu0 0
    %1001 = vmatpush1.bf16.xpose.msra.mxu0 %v984
    %1002 = vmatprep.subr.bf16.mxu0 0
    %1003 = vmatpush2.bf16.xpose.msra.mxu0 0
    %1004 = vmatprep.subr.bf16.mxu0 0
    %1005 = vmatpush2.bf16.xpose.msra.mxu0 0
    %1006 = vmatprep.subr.bf16.mxu0 0
    %1007 = vmatpush2.bf16.xpose.msra.mxu0 0
    %1008 = vmatprep.subr.bf16.mxu0 0
    %1009 = vmatpush2.bf16.xpose.msra.mxu0 0
    %1010 = vmatprep.subr.bf16.mxu0 0
    %1011 = vmatpush2.bf16.xpose.msra.mxu0 0
    %1012 = vmatprep.subr.bf16.mxu0 0
    %1013 = vmatpush2.bf16.xpose.msra.mxu0 0
    %1014 = vmatprep.subr.bf16.mxu0 0
    %1015 = vmatpush2.bf16.xpose.msra.mxu0 0
    %1016 = vmatprep.subr.bf16.mxu0 0
    %1017 = vmatpush2.bf16.xpose.msra.mxu0 0
    %1018 = vmatprep.mubr.bf16.mxu0 0
    %1019 = vmatmul.mubr.bf16.gmra.mxu0 %v981
    %v1020 = vpop.f32.mrf.mxu0
    %v1021 = vadd.f32 0.0, %v1020
    %v1022 = vpop.f32.mrf.mxu0
    %v1023 = vpop.f32.mrf.mxu0
    %v1024 = vpop.f32.mrf.mxu0
    %1025 = vdwg.mxu0
    %1026 = vrot.lane.b32.xlu0 %v169, 120
    %v1027 = vpop.permute.xlu0 %1026
    %1028 = vrot.lane.b32.xlu0 %v169, 88
    %v1029 = vpop.permute.xlu0 %1028
    %v1031 = vsel %vm175, %v1027, 0
    %v1034 = vsel %vm175, %v1029, 0
    %1036 = vmatprep.subr.bf16.mxu0 0
    %1037 = vmatpush1.bf16.xpose.msra.mxu0 0
    %1038 = vmatprep.subr.bf16.mxu0 0
    %1039 = vmatpush1.bf16.xpose.msra.mxu0 0
    %1040 = vmatprep.subr.bf16.mxu0 0
    %1041 = vmatpush1.bf16.xpose.msra.mxu0 0
    %1042 = vmatprep.subr.bf16.mxu0 0
    %1043 = vmatpush1.bf16.xpose.msra.mxu0 0
    %1044 = vmatprep.subr.bf16.mxu0 0
    %1045 = vmatpush1.bf16.xpose.msra.mxu0 0
    %1046 = vmatprep.subr.bf16.mxu0 0
    %1047 = vmatpush1.bf16.xpose.msra.mxu0 0
    %1048 = vmatprep.subr.bf16.mxu0 0
    %1049 = vmatpush1.bf16.xpose.msra.mxu0 0
    %1050 = vmatprep.subr.bf16.mxu0 0
    %1051 = vmatpush1.bf16.xpose.msra.mxu0 %v1034
    %1052 = vmatprep.subr.bf16.mxu0 0
    %1053 = vmatpush2.bf16.xpose.msra.mxu0 0
    %1054 = vmatprep.subr.bf16.mxu0 0
    %1055 = vmatpush2.bf16.xpose.msra.mxu0 0
    %1056 = vmatprep.subr.bf16.mxu0 0
    %1057 = vmatpush2.bf16.xpose.msra.mxu0 0
    %1058 = vmatprep.subr.bf16.mxu0 0
    %1059 = vmatpush2.bf16.xpose.msra.mxu0 0
    %1060 = vmatprep.subr.bf16.mxu0 0
    %1061 = vmatpush2.bf16.xpose.msra.mxu0 0
    %1062 = vmatprep.subr.bf16.mxu0 0
    %1063 = vmatpush2.bf16.xpose.msra.mxu0 0
    %1064 = vmatprep.subr.bf16.mxu0 0
    %1065 = vmatpush2.bf16.xpose.msra.mxu0 0
    %1066 = vmatprep.subr.bf16.mxu0 0
    %1067 = vmatpush2.bf16.xpose.msra.mxu0 0
    %1068 = vmatprep.mubr.bf16.mxu0 0
    %1069 = vmatmul.mubr.bf16.gmra.mxu0 %v1031
    %v1070 = vpop.f32.mrf.mxu0
    %v1071 = vadd.f32 0.0, %v1070
    %v1072 = vpop.f32.mrf.mxu0
    %v1073 = vpop.f32.mrf.mxu0
    %v1074 = vpop.f32.mrf.mxu0
    %1075 = vdwg.mxu0
    %1076 = vrot.lane.b32.xlu0 %v170, 120
    %v1077 = vpop.permute.xlu0 %1076
    %1078 = vrot.lane.b32.xlu0 %v170, 88
    %v1079 = vpop.permute.xlu0 %1078
    %v1081 = vsel %vm175, %v1077, 0
    %v1084 = vsel %vm175, %v1079, 0
    %1086 = vmatprep.subr.bf16.mxu0 0
    %1087 = vmatpush1.bf16.xpose.msra.mxu0 0
    %1088 = vmatprep.subr.bf16.mxu0 0
    %1089 = vmatpush1.bf16.xpose.msra.mxu0 0
    %1090 = vmatprep.subr.bf16.mxu0 0
    %1091 = vmatpush1.bf16.xpose.msra.mxu0 0
    %1092 = vmatprep.subr.bf16.mxu0 0
    %1093 = vmatpush1.bf16.xpose.msra.mxu0 0
    %1094 = vmatprep.subr.bf16.mxu0 0
    %1095 = vmatpush1.bf16.xpose.msra.mxu0 0
    %1096 = vmatprep.subr.bf16.mxu0 0
    %1097 = vmatpush1.bf16.xpose.msra.mxu0 0
    %1098 = vmatprep.subr.bf16.mxu0 0
    %1099 = vmatpush1.bf16.xpose.msra.mxu0 0
    %1100 = vmatprep.subr.bf16.mxu0 0
    %1101 = vmatpush1.bf16.xpose.msra.mxu0 %v1084
    %1102 = vmatprep.subr.bf16.mxu0 0
    %1103 = vmatpush2.bf16.xpose.msra.mxu0 0
    %1104 = vmatprep.subr.bf16.mxu0 0
    %1105 = vmatpush2.bf16.xpose.msra.mxu0 0
    %1106 = vmatprep.subr.bf16.mxu0 0
    %1107 = vmatpush2.bf16.xpose.msra.mxu0 0
    %1108 = vmatprep.subr.bf16.mxu0 0
    %1109 = vmatpush2.bf16.xpose.msra.mxu0 0
    %1110 = vmatprep.subr.bf16.mxu0 0
    %1111 = vmatpush2.bf16.xpose.msra.mxu0 0
    %1112 = vmatprep.subr.bf16.mxu0 0
    %1113 = vmatpush2.bf16.xpose.msra.mxu0 0
    %1114 = vmatprep.subr.bf16.mxu0 0
    %1115 = vmatpush2.bf16.xpose.msra.mxu0 0
    %1116 = vmatprep.subr.bf16.mxu0 0
    %1117 = vmatpush2.bf16.xpose.msra.mxu0 0
    %1118 = vmatprep.mubr.bf16.mxu0 0
    %1119 = vmatmul.mubr.bf16.gmra.mxu0 %v1081
    %v1120 = vpop.f32.mrf.mxu0
    %v1121 = vadd.f32 0.0, %v1120
    %v1122 = vpop.f32.mrf.mxu0
    %v1123 = vpop.f32.mrf.mxu0
    %v1124 = vpop.f32.mrf.mxu0
    %1125 = vdwg.mxu0
    %1126 = vrot.lane.b32.xlu0 %v171, 120
    %v1127 = vpop.permute.xlu0 %1126
    %1128 = vrot.lane.b32.xlu0 %v171, 88
    %v1129 = vpop.permute.xlu0 %1128
    %v1131 = vsel %vm175, %v1127, 0
    %v1134 = vsel %vm175, %v1129, 0
    %1136 = vmatprep.subr.bf16.mxu0 0
    %1137 = vmatpush1.bf16.xpose.msra.mxu0 0
    %1138 = vmatprep.subr.bf16.mxu0 0
    %1139 = vmatpush1.bf16.xpose.msra.mxu0 0
    %1140 = vmatprep.subr.bf16.mxu0 0
    %1141 = vmatpush1.bf16.xpose.msra.mxu0 0
    %1142 = vmatprep.subr.bf16.mxu0 0
    %1143 = vmatpush1.bf16.xpose.msra.mxu0 0
    %1144 = vmatprep.subr.bf16.mxu0 0
    %1145 = vmatpush1.bf16.xpose.msra.mxu0 0
    %1146 = vmatprep.subr.bf16.mxu0 0
    %1147 = vmatpush1.bf16.xpose.msra.mxu0 0
    %1148 = vmatprep.subr.bf16.mxu0 0
    %1149 = vmatpush1.bf16.xpose.msra.mxu0 0
    %1150 = vmatprep.subr.bf16.mxu0 0
    %1151 = vmatpush1.bf16.xpose.msra.mxu0 %v1134
    %1152 = vmatprep.subr.bf16.mxu0 0
    %1153 = vmatpush2.bf16.xpose.msra.mxu0 0
    %1154 = vmatprep.subr.bf16.mxu0 0
    %1155 = vmatpush2.bf16.xpose.msra.mxu0 0
    %1156 = vmatprep.subr.bf16.mxu0 0
    %1157 = vmatpush2.bf16.xpose.msra.mxu0 0
    %1158 = vmatprep.subr.bf16.mxu0 0
    %1159 = vmatpush2.bf16.xpose.msra.mxu0 0
    %1160 = vmatprep.subr.bf16.mxu0 0
    %1161 = vmatpush2.bf16.xpose.msra.mxu0 0
    %1162 = vmatprep.subr.bf16.mxu0 0
    %1163 = vmatpush2.bf16.xpose.msra.mxu0 0
    %1164 = vmatprep.subr.bf16.mxu0 0
    %1165 = vmatpush2.bf16.xpose.msra.mxu0 0
    %1166 = vmatprep.subr.bf16.mxu0 0
    %1167 = vmatpush2.bf16.xpose.msra.mxu0 0
    %1168 = vmatprep.mubr.bf16.mxu0 0
    %1169 = vmatmul.mubr.bf16.gmra.mxu0 %v1131
    %v1170 = vpop.f32.mrf.mxu0
    %v1171 = vadd.f32 0.0, %v1170
    %v1172 = vpop.f32.mrf.mxu0
    %v1173 = vpop.f32.mrf.mxu0
    %v1174 = vpop.f32.mrf.mxu0
    %1175 = vdwg.mxu0
    %v1176 = vsel %vm175, %v921, -inf
    %v1177 = vrot.slane %v1176, 4
    %v1178 = vmax.f32 %v1176, %v1177
    %v1179 = vrot.slane %v1178, 2
    %v1180 = vmax.f32 %v1178, %v1179
    %v1181 = vrot.slane %v1180, 1
    %v1182 = vmax.f32 %v1180, %v1181
    %v1183 = vsel %vm175, %v971, -inf
    %v1184 = vrot.slane %v1183, 4
    %v1185 = vmax.f32 %v1183, %v1184
    %v1186 = vrot.slane %v1185, 2
    %v1187 = vmax.f32 %v1185, %v1186
    %v1188 = vrot.slane %v1187, 1
    %v1189 = vmax.f32 %v1187, %v1188
    %v1190 = vsel %vm175, %v1021, -inf
    %v1191 = vrot.slane %v1190, 4
    %v1192 = vmax.f32 %v1190, %v1191
    %v1193 = vrot.slane %v1192, 2
    %v1194 = vmax.f32 %v1192, %v1193
    %v1195 = vrot.slane %v1194, 1
    %v1196 = vmax.f32 %v1194, %v1195
    %v1197 = vsel %vm175, %v1071, -inf
    %v1198 = vrot.slane %v1197, 4
    %v1199 = vmax.f32 %v1197, %v1198
    %v1200 = vrot.slane %v1199, 2
    %v1201 = vmax.f32 %v1199, %v1200
    %v1202 = vrot.slane %v1201, 1
    %v1203 = vmax.f32 %v1201, %v1202
    %v1204 = vsel %vm175, %v1121, -inf
    %v1205 = vrot.slane %v1204, 4
    %v1206 = vmax.f32 %v1204, %v1205
    %v1207 = vrot.slane %v1206, 2
    %v1208 = vmax.f32 %v1206, %v1207
    %v1209 = vrot.slane %v1208, 1
    %v1210 = vmax.f32 %v1208, %v1209
    %v1211 = vsel %vm175, %v1171, -inf
    %v1212 = vrot.slane %v1211, 4
    %v1213 = vmax.f32 %v1211, %v1212
    %v1214 = vrot.slane %v1213, 2
    %v1215 = vmax.f32 %v1213, %v1214
    %v1216 = vrot.slane %v1215, 1
    %v1217 = vmax.f32 %v1215, %v1216
    %v1218 = vsub.f32 %v921, %v1182
    %v1219 = vsub.f32 %v971, %v1189
    %v1220 = vsub.f32 %v1021, %v1196
    %v1221 = vsub.f32 %v1071, %v1203
    %v1222 = vsub.f32 %v1121, %v1210
    %v1223 = vsub.f32 %v1171, %v1217
    %v1224 = vmul.f32 %v1218, 1.442695
    %v1225 = vpow.pop %v1224
    %v1226 = vmul.f32 %v1219, 1.442695
    %v1227 = vpow.pop %v1226
    %v1228 = vmul.f32 %v1220, 1.442695
    %v1229 = vpow.pop %v1228
    %v1230 = vmul.f32 %v1221, 1.442695
    %v1231 = vpow.pop %v1230
    %v1232 = vmul.f32 %v1222, 1.442695
    %v1233 = vpow.pop %v1232
    %v1234 = vmul.f32 %v1223, 1.442695
    %v1235 = vpow.pop %v1234
    %v1236 = vsel %vm175, %v1225, 0.0
    %v1237 = vrot.slane %v1236, 4
    %v1238 = vadd.f32 %v1236, %v1237
    %v1239 = vrot.slane %v1238, 2
    %v1240 = vadd.f32 %v1238, %v1239
    %v1241 = vrot.slane %v1240, 1
    %v1242 = vadd.f32 %v1240, %v1241
    %v1243 = vsel %vm175, %v1227, 0.0
    %v1244 = vrot.slane %v1243, 4
    %v1245 = vadd.f32 %v1243, %v1244
    %v1246 = vrot.slane %v1245, 2
    %v1247 = vadd.f32 %v1245, %v1246
    %v1248 = vrot.slane %v1247, 1
    %v1249 = vadd.f32 %v1247, %v1248
    %v1250 = vsel %vm175, %v1229, 0.0
    %v1251 = vrot.slane %v1250, 4
    %v1252 = vadd.f32 %v1250, %v1251
    %v1253 = vrot.slane %v1252, 2
    %v1254 = vadd.f32 %v1252, %v1253
    %v1255 = vrot.slane %v1254, 1
    %v1256 = vadd.f32 %v1254, %v1255
    %v1257 = vsel %vm175, %v1231, 0.0
    %v1258 = vrot.slane %v1257, 4
    %v1259 = vadd.f32 %v1257, %v1258
    %v1260 = vrot.slane %v1259, 2
    %v1261 = vadd.f32 %v1259, %v1260
    %v1262 = vrot.slane %v1261, 1
    %v1263 = vadd.f32 %v1261, %v1262
    %v1264 = vsel %vm175, %v1233, 0.0
    %v1265 = vrot.slane %v1264, 4
    %v1266 = vadd.f32 %v1264, %v1265
    %v1267 = vrot.slane %v1266, 2
    %v1268 = vadd.f32 %v1266, %v1267
    %v1269 = vrot.slane %v1268, 1
    %v1270 = vadd.f32 %v1268, %v1269
    %v1271 = vsel %vm175, %v1235, 0.0
    %v1272 = vrot.slane %v1271, 4
    %v1273 = vadd.f32 %v1271, %v1272
    %v1274 = vrot.slane %v1273, 2
    %v1275 = vadd.f32 %v1273, %v1274
    %v1276 = vrot.slane %v1275, 1
    %v1277 = vadd.f32 %v1275, %v1276
    %v1278 = vrcp.pop %v1242
    %v1279 = vrcp.pop %v1249
    %v1280 = vrcp.pop %v1256
    %v1281 = vrcp.pop %v1263
    %v1282 = vrcp.pop %v1270
    %v1283 = vrcp.pop %v1277
    %v1284 = vmul.f32 %v1225, %v1278
    %v1285 = vmul.f32 %v1227, %v1279
    %v1286 = vmul.f32 %v1229, %v1280
    %v1287 = vmul.f32 %v1231, %v1281
    %v1288 = vmul.f32 %v1233, %v1282
    %v1289 = vmul.f32 %v1235, %v1283
    %v1290 = vpack.c.bf16 %v1284, %v1284
    %v1291 = vpack.c.bf16 %v1285, %v1285
    %v1292 = vpack.c.bf16 %v1286, %v1286
    %v1293 = vpack.c.bf16 %v1287, %v1287
    %v1294 = vpack.c.bf16 %v1288, %v1288
    %v1295 = vpack.c.bf16 %v1289, %v1289
    %1296 = vrot.lane.b32.xlu0 %v166, 56
    %v1297 = vpop.permute.xlu0 %1296
    %v1299 = vsel %vm175, %v1290, 0
    %v1302 = vsel %vm592, %v1297, 0
    %1304 = vmatprep.subr.bf16.mxu0 0
    %1305 = vmatpush1.bf16.msra.mxu0 0
    %1306 = vmatprep.subr.bf16.mxu0 0
    %1307 = vmatpush1.bf16.msra.mxu0 0
    %1308 = vmatprep.subr.bf16.mxu0 0
    %1309 = vmatpush1.bf16.msra.mxu0 0
    %1310 = vmatprep.subr.bf16.mxu0 0
    %1311 = vmatpush1.bf16.msra.mxu0 0
    %1312 = vmatprep.subr.bf16.mxu0 0
    %1313 = vmatpush1.bf16.msra.mxu0 0
    %1314 = vmatprep.subr.bf16.mxu0 0
    %1315 = vmatpush1.bf16.msra.mxu0 0
    %1316 = vmatprep.subr.bf16.mxu0 0
    %1317 = vmatpush1.bf16.msra.mxu0 0
    %1318 = vmatprep.subr.bf16.mxu0 0
    %1319 = vmatpush1.bf16.msra.mxu0 %v1302
    %1320 = vmatprep.subr.bf16.mxu0 0
    %1321 = vmatpush2.bf16.msra.mxu0 0
    %1322 = vmatprep.subr.bf16.mxu0 0
    %1323 = vmatpush2.bf16.msra.mxu0 0
    %1324 = vmatprep.subr.bf16.mxu0 0
    %1325 = vmatpush2.bf16.msra.mxu0 0
    %1326 = vmatprep.subr.bf16.mxu0 0
    %1327 = vmatpush2.bf16.msra.mxu0 0
    %1328 = vmatprep.subr.bf16.mxu0 0
    %1329 = vmatpush2.bf16.msra.mxu0 0
    %1330 = vmatprep.subr.bf16.mxu0 0
    %1331 = vmatpush2.bf16.msra.mxu0 0
    %1332 = vmatprep.subr.bf16.mxu0 0
    %1333 = vmatpush2.bf16.msra.mxu0 0
    %1334 = vmatprep.subr.bf16.mxu0 0
    %1335 = vmatpush2.bf16.msra.mxu0 0
    %1336 = vmatprep.mubr.bf16.mxu0 0
    %1337 = vmatmul.mubr.bf16.gmra.mxu0 %v1299
    %v1338 = vpop.f32.mrf.mxu0
    %v1339 = vadd.f32 0.0, %v1338
    %v1340 = vpop.f32.mrf.mxu0
    %v1341 = vpop.f32.mrf.mxu0
    %v1342 = vpop.f32.mrf.mxu0
    %1343 = vdwg.mxu0
    %1344 = vrot.lane.b32.xlu0 %v167, 56
    %v1345 = vpop.permute.xlu0 %1344
    %v1347 = vsel %vm175, %v1291, 0
    %v1350 = vsel %vm592, %v1345, 0
    %1352 = vmatprep.subr.bf16.mxu0 0
    %1353 = vmatpush1.bf16.msra.mxu0 0
    %1354 = vmatprep.subr.bf16.mxu0 0
    %1355 = vmatpush1.bf16.msra.mxu0 0
    %1356 = vmatprep.subr.bf16.mxu0 0
    %1357 = vmatpush1.bf16.msra.mxu0 0
    %1358 = vmatprep.subr.bf16.mxu0 0
    %1359 = vmatpush1.bf16.msra.mxu0 0
    %1360 = vmatprep.subr.bf16.mxu0 0
    %1361 = vmatpush1.bf16.msra.mxu0 0
    %1362 = vmatprep.subr.bf16.mxu0 0
    %1363 = vmatpush1.bf16.msra.mxu0 0
    %1364 = vmatprep.subr.bf16.mxu0 0
    %1365 = vmatpush1.bf16.msra.mxu0 0
    %1366 = vmatprep.subr.bf16.mxu0 0
    %1367 = vmatpush1.bf16.msra.mxu0 %v1350
    %1368 = vmatprep.subr.bf16.mxu0 0
    %1369 = vmatpush2.bf16.msra.mxu0 0
    %1370 = vmatprep.subr.bf16.mxu0 0
    %1371 = vmatpush2.bf16.msra.mxu0 0
    %1372 = vmatprep.subr.bf16.mxu0 0
    %1373 = vmatpush2.bf16.msra.mxu0 0
    %1374 = vmatprep.subr.bf16.mxu0 0
    %1375 = vmatpush2.bf16.msra.mxu0 0
    %1376 = vmatprep.subr.bf16.mxu0 0
    %1377 = vmatpush2.bf16.msra.mxu0 0
    %1378 = vmatprep.subr.bf16.mxu0 0
    %1379 = vmatpush2.bf16.msra.mxu0 0
    %1380 = vmatprep.subr.bf16.mxu0 0
    %1381 = vmatpush2.bf16.msra.mxu0 0
    %1382 = vmatprep.subr.bf16.mxu0 0
    %1383 = vmatpush2.bf16.msra.mxu0 0
    %1384 = vmatprep.mubr.bf16.mxu0 0
    %1385 = vmatmul.mubr.bf16.gmra.mxu0 %v1347
    %v1386 = vpop.f32.mrf.mxu0
    %v1387 = vadd.f32 0.0, %v1386
    %v1388 = vpop.f32.mrf.mxu0
    %v1389 = vpop.f32.mrf.mxu0
    %v1390 = vpop.f32.mrf.mxu0
    %1391 = vdwg.mxu0
    %1392 = vrot.lane.b32.xlu0 %v168, 56
    %v1393 = vpop.permute.xlu0 %1392
    %v1395 = vsel %vm175, %v1292, 0
    %v1398 = vsel %vm592, %v1393, 0
    %1400 = vmatprep.subr.bf16.mxu0 0
    %1401 = vmatpush1.bf16.msra.mxu0 0
    %1402 = vmatprep.subr.bf16.mxu0 0
    %1403 = vmatpush1.bf16.msra.mxu0 0
    %1404 = vmatprep.subr.bf16.mxu0 0
    %1405 = vmatpush1.bf16.msra.mxu0 0
    %1406 = vmatprep.subr.bf16.mxu0 0
    %1407 = vmatpush1.bf16.msra.mxu0 0
    %1408 = vmatprep.subr.bf16.mxu0 0
    %1409 = vmatpush1.bf16.msra.mxu0 0
    %1410 = vmatprep.subr.bf16.mxu0 0
    %1411 = vmatpush1.bf16.msra.mxu0 0
    %1412 = vmatprep.subr.bf16.mxu0 0
    %1413 = vmatpush1.bf16.msra.mxu0 0
    %1414 = vmatprep.subr.bf16.mxu0 0
    %1415 = vmatpush1.bf16.msra.mxu0 %v1398
    %1416 = vmatprep.subr.bf16.mxu0 0
    %1417 = vmatpush2.bf16.msra.mxu0 0
    %1418 = vmatprep.subr.bf16.mxu0 0
    %1419 = vmatpush2.bf16.msra.mxu0 0
    %1420 = vmatprep.subr.bf16.mxu0 0
    %1421 = vmatpush2.bf16.msra.mxu0 0
    %1422 = vmatprep.subr.bf16.mxu0 0
    %1423 = vmatpush2.bf16.msra.mxu0 0
    %1424 = vmatprep.subr.bf16.mxu0 0
    %1425 = vmatpush2.bf16.msra.mxu0 0
    %1426 = vmatprep.subr.bf16.mxu0 0
    %1427 = vmatpush2.bf16.msra.mxu0 0
    %1428 = vmatprep.subr.bf16.mxu0 0
    %1429 = vmatpush2.bf16.msra.mxu0 0
    %1430 = vmatprep.subr.bf16.mxu0 0
    %1431 = vmatpush2.bf16.msra.mxu0 0
    %1432 = vmatprep.mubr.bf16.mxu0 0
    %1433 = vmatmul.mubr.bf16.gmra.mxu0 %v1395
    %v1434 = vpop.f32.mrf.mxu0
    %v1435 = vadd.f32 0.0, %v1434
    %v1436 = vpop.f32.mrf.mxu0
    %v1437 = vpop.f32.mrf.mxu0
    %v1438 = vpop.f32.mrf.mxu0
    %1439 = vdwg.mxu0
    %1440 = vrot.lane.b32.xlu0 %v169, 56
    %v1441 = vpop.permute.xlu0 %1440
    %v1443 = vsel %vm175, %v1293, 0
    %v1446 = vsel %vm592, %v1441, 0
    %1448 = vmatprep.subr.bf16.mxu0 0
    %1449 = vmatpush1.bf16.msra.mxu0 0
    %1450 = vmatprep.subr.bf16.mxu0 0
    %1451 = vmatpush1.bf16.msra.mxu0 0
    %1452 = vmatprep.subr.bf16.mxu0 0
    %1453 = vmatpush1.bf16.msra.mxu0 0
    %1454 = vmatprep.subr.bf16.mxu0 0
    %1455 = vmatpush1.bf16.msra.mxu0 0
    %1456 = vmatprep.subr.bf16.mxu0 0
    %1457 = vmatpush1.bf16.msra.mxu0 0
    %1458 = vmatprep.subr.bf16.mxu0 0
    %1459 = vmatpush1.bf16.msra.mxu0 0
    %1460 = vmatprep.subr.bf16.mxu0 0
    %1461 = vmatpush1.bf16.msra.mxu0 0
    %1462 = vmatprep.subr.bf16.mxu0 0
    %1463 = vmatpush1.bf16.msra.mxu0 %v1446
    %1464 = vmatprep.subr.bf16.mxu0 0
    %1465 = vmatpush2.bf16.msra.mxu0 0
    %1466 = vmatprep.subr.bf16.mxu0 0
    %1467 = vmatpush2.bf16.msra.mxu0 0
    %1468 = vmatprep.subr.bf16.mxu0 0
    %1469 = vmatpush2.bf16.msra.mxu0 0
    %1470 = vmatprep.subr.bf16.mxu0 0
    %1471 = vmatpush2.bf16.msra.mxu0 0
    %1472 = vmatprep.subr.bf16.mxu0 0
    %1473 = vmatpush2.bf16.msra.mxu0 0
    %1474 = vmatprep.subr.bf16.mxu0 0
    %1475 = vmatpush2.bf16.msra.mxu0 0
    %1476 = vmatprep.subr.bf16.mxu0 0
    %1477 = vmatpush2.bf16.msra.mxu0 0
    %1478 = vmatprep.subr.bf16.mxu0 0
    %1479 = vmatpush2.bf16.msra.mxu0 0
    %1480 = vmatprep.mubr.bf16.mxu0 0
    %1481 = vmatmul.mubr.bf16.gmra.mxu0 %v1443
    %v1482 = vpop.f32.mrf.mxu0
    %v1483 = vadd.f32 0.0, %v1482
    %v1484 = vpop.f32.mrf.mxu0
    %v1485 = vpop.f32.mrf.mxu0
    %v1486 = vpop.f32.mrf.mxu0
    %1487 = vdwg.mxu0
    %1488 = vrot.lane.b32.xlu0 %v170, 56
    %v1489 = vpop.permute.xlu0 %1488
    %v1491 = vsel %vm175, %v1294, 0
    %v1494 = vsel %vm592, %v1489, 0
    %1496 = vmatprep.subr.bf16.mxu0 0
    %1497 = vmatpush1.bf16.msra.mxu0 0
    %1498 = vmatprep.subr.bf16.mxu0 0
    %1499 = vmatpush1.bf16.msra.mxu0 0
    %1500 = vmatprep.subr.bf16.mxu0 0
    %1501 = vmatpush1.bf16.msra.mxu0 0
    %1502 = vmatprep.subr.bf16.mxu0 0
    %1503 = vmatpush1.bf16.msra.mxu0 0
    %1504 = vmatprep.subr.bf16.mxu0 0
    %1505 = vmatpush1.bf16.msra.mxu0 0
    %1506 = vmatprep.subr.bf16.mxu0 0
    %1507 = vmatpush1.bf16.msra.mxu0 0
    %1508 = vmatprep.subr.bf16.mxu0 0
    %1509 = vmatpush1.bf16.msra.mxu0 0
    %1510 = vmatprep.subr.bf16.mxu0 0
    %1511 = vmatpush1.bf16.msra.mxu0 %v1494
    %1512 = vmatprep.subr.bf16.mxu0 0
    %1513 = vmatpush2.bf16.msra.mxu0 0
    %1514 = vmatprep.subr.bf16.mxu0 0
    %1515 = vmatpush2.bf16.msra.mxu0 0
    %1516 = vmatprep.subr.bf16.mxu0 0
    %1517 = vmatpush2.bf16.msra.mxu0 0
    %1518 = vmatprep.subr.bf16.mxu0 0
    %1519 = vmatpush2.bf16.msra.mxu0 0
    %1520 = vmatprep.subr.bf16.mxu0 0
    %1521 = vmatpush2.bf16.msra.mxu0 0
    %1522 = vmatprep.subr.bf16.mxu0 0
    %1523 = vmatpush2.bf16.msra.mxu0 0
    %1524 = vmatprep.subr.bf16.mxu0 0
    %1525 = vmatpush2.bf16.msra.mxu0 0
    %1526 = vmatprep.subr.bf16.mxu0 0
    %1527 = vmatpush2.bf16.msra.mxu0 0
    %1528 = vmatprep.mubr.bf16.mxu0 0
    %1529 = vmatmul.mubr.bf16.gmra.mxu0 %v1491
    %v1530 = vpop.f32.mrf.mxu0
    %v1531 = vadd.f32 0.0, %v1530
    %v1532 = vpop.f32.mrf.mxu0
    %v1533 = vpop.f32.mrf.mxu0
    %v1534 = vpop.f32.mrf.mxu0
    %1535 = vdwg.mxu0
    %1536 = vrot.lane.b32.xlu0 %v171, 56
    %v1537 = vpop.permute.xlu0 %1536
    %v1539 = vsel %vm175, %v1295, 0
    %v1542 = vsel %vm592, %v1537, 0
    %1544 = vmatprep.subr.bf16.mxu0 0
    %1545 = vmatpush1.bf16.msra.mxu0 0
    %1546 = vmatprep.subr.bf16.mxu0 0
    %1547 = vmatpush1.bf16.msra.mxu0 0
    %1548 = vmatprep.subr.bf16.mxu0 0
    %1549 = vmatpush1.bf16.msra.mxu0 0
    %1550 = vmatprep.subr.bf16.mxu0 0
    %1551 = vmatpush1.bf16.msra.mxu0 0
    %1552 = vmatprep.subr.bf16.mxu0 0
    %1553 = vmatpush1.bf16.msra.mxu0 0
    %1554 = vmatprep.subr.bf16.mxu0 0
    %1555 = vmatpush1.bf16.msra.mxu0 0
    %1556 = vmatprep.subr.bf16.mxu0 0
    %1557 = vmatpush1.bf16.msra.mxu0 0
    %1558 = vmatprep.subr.bf16.mxu0 0
    %1559 = vmatpush1.bf16.msra.mxu0 %v1542
    %1560 = vmatprep.subr.bf16.mxu0 0
    %1561 = vmatpush2.bf16.msra.mxu0 0
    %1562 = vmatprep.subr.bf16.mxu0 0
    %1563 = vmatpush2.bf16.msra.mxu0 0
    %1564 = vmatprep.subr.bf16.mxu0 0
    %1565 = vmatpush2.bf16.msra.mxu0 0
    %1566 = vmatprep.subr.bf16.mxu0 0
    %1567 = vmatpush2.bf16.msra.mxu0 0
    %1568 = vmatprep.subr.bf16.mxu0 0
    %1569 = vmatpush2.bf16.msra.mxu0 0
    %1570 = vmatprep.subr.bf16.mxu0 0
    %1571 = vmatpush2.bf16.msra.mxu0 0
    %1572 = vmatprep.subr.bf16.mxu0 0
    %1573 = vmatpush2.bf16.msra.mxu0 0
    %1574 = vmatprep.subr.bf16.mxu0 0
    %1575 = vmatpush2.bf16.msra.mxu0 0
    %1576 = vmatprep.mubr.bf16.mxu0 0
    %1577 = vmatmul.mubr.bf16.gmra.mxu0 %v1539
    %v1578 = vpop.f32.mrf.mxu0
    %v1579 = vadd.f32 0.0, %v1578
    %v1580 = vpop.f32.mrf.mxu0
    %v1581 = vpop.f32.mrf.mxu0
    %v1582 = vpop.f32.mrf.mxu0
    %1583 = vdwg.mxu0
    %1584 = vrot.lane.b32.xlu0 %v166, 112
    %v1585 = vpop.permute.xlu0 %1584
    %1586 = vrot.lane.b32.xlu0 %v166, 80
    %v1587 = vpop.permute.xlu0 %1586
    %v1589 = vsel %vm175, %v1585, 0
    %v1592 = vsel %vm175, %v1587, 0
    %1594 = vmatprep.subr.bf16.mxu0 0
    %1595 = vmatpush1.bf16.xpose.msra.mxu0 0
    %1596 = vmatprep.subr.bf16.mxu0 0
    %1597 = vmatpush1.bf16.xpose.msra.mxu0 0
    %1598 = vmatprep.subr.bf16.mxu0 0
    %1599 = vmatpush1.bf16.xpose.msra.mxu0 0
    %1600 = vmatprep.subr.bf16.mxu0 0
    %1601 = vmatpush1.bf16.xpose.msra.mxu0 0
    %1602 = vmatprep.subr.bf16.mxu0 0
    %1603 = vmatpush1.bf16.xpose.msra.mxu0 0
    %1604 = vmatprep.subr.bf16.mxu0 0
    %1605 = vmatpush1.bf16.xpose.msra.mxu0 0
    %1606 = vmatprep.subr.bf16.mxu0 0
    %1607 = vmatpush1.bf16.xpose.msra.mxu0 0
    %1608 = vmatprep.subr.bf16.mxu0 0
    %1609 = vmatpush1.bf16.xpose.msra.mxu0 %v1592
    %1610 = vmatprep.subr.bf16.mxu0 0
    %1611 = vmatpush2.bf16.xpose.msra.mxu0 0
    %1612 = vmatprep.subr.bf16.mxu0 0
    %1613 = vmatpush2.bf16.xpose.msra.mxu0 0
    %1614 = vmatprep.subr.bf16.mxu0 0
    %1615 = vmatpush2.bf16.xpose.msra.mxu0 0
    %1616 = vmatprep.subr.bf16.mxu0 0
    %1617 = vmatpush2.bf16.xpose.msra.mxu0 0
    %1618 = vmatprep.subr.bf16.mxu0 0
    %1619 = vmatpush2.bf16.xpose.msra.mxu0 0
    %1620 = vmatprep.subr.bf16.mxu0 0
    %1621 = vmatpush2.bf16.xpose.msra.mxu0 0
    %1622 = vmatprep.subr.bf16.mxu0 0
    %1623 = vmatpush2.bf16.xpose.msra.mxu0 0
    %1624 = vmatprep.subr.bf16.mxu0 0
    %1625 = vmatpush2.bf16.xpose.msra.mxu0 0
    %1626 = vmatprep.mubr.bf16.mxu0 0
    %1627 = vmatmul.mubr.bf16.gmra.mxu0 %v1589
    %v1628 = vpop.f32.mrf.mxu0
    %v1629 = vadd.f32 0.0, %v1628
    %v1630 = vpop.f32.mrf.mxu0
    %v1631 = vpop.f32.mrf.mxu0
    %v1632 = vpop.f32.mrf.mxu0
    %1633 = vdwg.mxu0
    %1634 = vrot.lane.b32.xlu0 %v167, 112
    %v1635 = vpop.permute.xlu0 %1634
    %1636 = vrot.lane.b32.xlu0 %v167, 80
    %v1637 = vpop.permute.xlu0 %1636
    %v1639 = vsel %vm175, %v1635, 0
    %v1642 = vsel %vm175, %v1637, 0
    %1644 = vmatprep.subr.bf16.mxu0 0
    %1645 = vmatpush1.bf16.xpose.msra.mxu0 0
    %1646 = vmatprep.subr.bf16.mxu0 0
    %1647 = vmatpush1.bf16.xpose.msra.mxu0 0
    %1648 = vmatprep.subr.bf16.mxu0 0
    %1649 = vmatpush1.bf16.xpose.msra.mxu0 0
    %1650 = vmatprep.subr.bf16.mxu0 0
    %1651 = vmatpush1.bf16.xpose.msra.mxu0 0
    %1652 = vmatprep.subr.bf16.mxu0 0
    %1653 = vmatpush1.bf16.xpose.msra.mxu0 0
    %1654 = vmatprep.subr.bf16.mxu0 0
    %1655 = vmatpush1.bf16.xpose.msra.mxu0 0
    %1656 = vmatprep.subr.bf16.mxu0 0
    %1657 = vmatpush1.bf16.xpose.msra.mxu0 0
    %1658 = vmatprep.subr.bf16.mxu0 0
    %1659 = vmatpush1.bf16.xpose.msra.mxu0 %v1642
    %1660 = vmatprep.subr.bf16.mxu0 0
    %1661 = vmatpush2.bf16.xpose.msra.mxu0 0
    %1662 = vmatprep.subr.bf16.mxu0 0
    %1663 = vmatpush2.bf16.xpose.msra.mxu0 0
    %1664 = vmatprep.subr.bf16.mxu0 0
    %1665 = vmatpush2.bf16.xpose.msra.mxu0 0
    %1666 = vmatprep.subr.bf16.mxu0 0
    %1667 = vmatpush2.bf16.xpose.msra.mxu0 0
    %1668 = vmatprep.subr.bf16.mxu0 0
    %1669 = vmatpush2.bf16.xpose.msra.mxu0 0
    %1670 = vmatprep.subr.bf16.mxu0 0
    %1671 = vmatpush2.bf16.xpose.msra.mxu0 0
    %1672 = vmatprep.subr.bf16.mxu0 0
    %1673 = vmatpush2.bf16.xpose.msra.mxu0 0
    %1674 = vmatprep.subr.bf16.mxu0 0
    %1675 = vmatpush2.bf16.xpose.msra.mxu0 0
    %1676 = vmatprep.mubr.bf16.mxu0 0
    %1677 = vmatmul.mubr.bf16.gmra.mxu0 %v1639
    %v1678 = vpop.f32.mrf.mxu0
    %v1679 = vadd.f32 0.0, %v1678
    %v1680 = vpop.f32.mrf.mxu0
    %v1681 = vpop.f32.mrf.mxu0
    %v1682 = vpop.f32.mrf.mxu0
    %1683 = vdwg.mxu0
    %1684 = vrot.lane.b32.xlu0 %v168, 112
    %v1685 = vpop.permute.xlu0 %1684
    %1686 = vrot.lane.b32.xlu0 %v168, 80
    %v1687 = vpop.permute.xlu0 %1686
    %v1689 = vsel %vm175, %v1685, 0
    %v1692 = vsel %vm175, %v1687, 0
    %1694 = vmatprep.subr.bf16.mxu0 0
    %1695 = vmatpush1.bf16.xpose.msra.mxu0 0
    %1696 = vmatprep.subr.bf16.mxu0 0
    %1697 = vmatpush1.bf16.xpose.msra.mxu0 0
    %1698 = vmatprep.subr.bf16.mxu0 0
    %1699 = vmatpush1.bf16.xpose.msra.mxu0 0
    %1700 = vmatprep.subr.bf16.mxu0 0
    %1701 = vmatpush1.bf16.xpose.msra.mxu0 0
    %1702 = vmatprep.subr.bf16.mxu0 0
    %1703 = vmatpush1.bf16.xpose.msra.mxu0 0
    %1704 = vmatprep.subr.bf16.mxu0 0
    %1705 = vmatpush1.bf16.xpose.msra.mxu0 0
    %1706 = vmatprep.subr.bf16.mxu0 0
    %1707 = vmatpush1.bf16.xpose.msra.mxu0 0
    %1708 = vmatprep.subr.bf16.mxu0 0
    %1709 = vmatpush1.bf16.xpose.msra.mxu0 %v1692
    %1710 = vmatprep.subr.bf16.mxu0 0
    %1711 = vmatpush2.bf16.xpose.msra.mxu0 0
    %1712 = vmatprep.subr.bf16.mxu0 0
    %1713 = vmatpush2.bf16.xpose.msra.mxu0 0
    %1714 = vmatprep.subr.bf16.mxu0 0
    %1715 = vmatpush2.bf16.xpose.msra.mxu0 0
    %1716 = vmatprep.subr.bf16.mxu0 0
    %1717 = vmatpush2.bf16.xpose.msra.mxu0 0
    %1718 = vmatprep.subr.bf16.mxu0 0
    %1719 = vmatpush2.bf16.xpose.msra.mxu0 0
    %1720 = vmatprep.subr.bf16.mxu0 0
    %1721 = vmatpush2.bf16.xpose.msra.mxu0 0
    %1722 = vmatprep.subr.bf16.mxu0 0
    %1723 = vmatpush2.bf16.xpose.msra.mxu0 0
    %1724 = vmatprep.subr.bf16.mxu0 0
    %1725 = vmatpush2.bf16.xpose.msra.mxu0 0
    %1726 = vmatprep.mubr.bf16.mxu0 0
    %1727 = vmatmul.mubr.bf16.gmra.mxu0 %v1689
    %v1728 = vpop.f32.mrf.mxu0
    %v1729 = vadd.f32 0.0, %v1728
    %v1730 = vpop.f32.mrf.mxu0
    %v1731 = vpop.f32.mrf.mxu0
    %v1732 = vpop.f32.mrf.mxu0
    %1733 = vdwg.mxu0
    %1734 = vrot.lane.b32.xlu0 %v169, 112
    %v1735 = vpop.permute.xlu0 %1734
    %1736 = vrot.lane.b32.xlu0 %v169, 80
    %v1737 = vpop.permute.xlu0 %1736
    %v1739 = vsel %vm175, %v1735, 0
    %v1742 = vsel %vm175, %v1737, 0
    %1744 = vmatprep.subr.bf16.mxu0 0
    %1745 = vmatpush1.bf16.xpose.msra.mxu0 0
    %1746 = vmatprep.subr.bf16.mxu0 0
    %1747 = vmatpush1.bf16.xpose.msra.mxu0 0
    %1748 = vmatprep.subr.bf16.mxu0 0
    %1749 = vmatpush1.bf16.xpose.msra.mxu0 0
    %1750 = vmatprep.subr.bf16.mxu0 0
    %1751 = vmatpush1.bf16.xpose.msra.mxu0 0
    %1752 = vmatprep.subr.bf16.mxu0 0
    %1753 = vmatpush1.bf16.xpose.msra.mxu0 0
    %1754 = vmatprep.subr.bf16.mxu0 0
    %1755 = vmatpush1.bf16.xpose.msra.mxu0 0
    %1756 = vmatprep.subr.bf16.mxu0 0
    %1757 = vmatpush1.bf16.xpose.msra.mxu0 0
    %1758 = vmatprep.subr.bf16.mxu0 0
    %1759 = vmatpush1.bf16.xpose.msra.mxu0 %v1742
    %1760 = vmatprep.subr.bf16.mxu0 0
    %1761 = vmatpush2.bf16.xpose.msra.mxu0 0
    %1762 = vmatprep.subr.bf16.mxu0 0
    %1763 = vmatpush2.bf16.xpose.msra.mxu0 0
    %1764 = vmatprep.subr.bf16.mxu0 0
    %1765 = vmatpush2.bf16.xpose.msra.mxu0 0
    %1766 = vmatprep.subr.bf16.mxu0 0
    %1767 = vmatpush2.bf16.xpose.msra.mxu0 0
    %1768 = vmatprep.subr.bf16.mxu0 0
    %1769 = vmatpush2.bf16.xpose.msra.mxu0 0
    %1770 = vmatprep.subr.bf16.mxu0 0
    %1771 = vmatpush2.bf16.xpose.msra.mxu0 0
    %1772 = vmatprep.subr.bf16.mxu0 0
    %1773 = vmatpush2.bf16.xpose.msra.mxu0 0
    %1774 = vmatprep.subr.bf16.mxu0 0
    %1775 = vmatpush2.bf16.xpose.msra.mxu0 0
    %1776 = vmatprep.mubr.bf16.mxu0 0
    %1777 = vmatmul.mubr.bf16.gmra.mxu0 %v1739
    %v1778 = vpop.f32.mrf.mxu0
    %v1779 = vadd.f32 0.0, %v1778
    %v1780 = vpop.f32.mrf.mxu0
    %v1781 = vpop.f32.mrf.mxu0
    %v1782 = vpop.f32.mrf.mxu0
    %1783 = vdwg.mxu0
    %1784 = vrot.lane.b32.xlu0 %v170, 112
    %v1785 = vpop.permute.xlu0 %1784
    %1786 = vrot.lane.b32.xlu0 %v170, 80
    %v1787 = vpop.permute.xlu0 %1786
    %v1789 = vsel %vm175, %v1785, 0
    %v1792 = vsel %vm175, %v1787, 0
    %1794 = vmatprep.subr.bf16.mxu0 0
    %1795 = vmatpush1.bf16.xpose.msra.mxu0 0
    %1796 = vmatprep.subr.bf16.mxu0 0
    %1797 = vmatpush1.bf16.xpose.msra.mxu0 0
    %1798 = vmatprep.subr.bf16.mxu0 0
    %1799 = vmatpush1.bf16.xpose.msra.mxu0 0
    %1800 = vmatprep.subr.bf16.mxu0 0
    %1801 = vmatpush1.bf16.xpose.msra.mxu0 0
    %1802 = vmatprep.subr.bf16.mxu0 0
    %1803 = vmatpush1.bf16.xpose.msra.mxu0 0
    %1804 = vmatprep.subr.bf16.mxu0 0
    %1805 = vmatpush1.bf16.xpose.msra.mxu0 0
    %1806 = vmatprep.subr.bf16.mxu0 0
    %1807 = vmatpush1.bf16.xpose.msra.mxu0 0
    %1808 = vmatprep.subr.bf16.mxu0 0
    %1809 = vmatpush1.bf16.xpose.msra.mxu0 %v1792
    %1810 = vmatprep.subr.bf16.mxu0 0
    %1811 = vmatpush2.bf16.xpose.msra.mxu0 0
    %1812 = vmatprep.subr.bf16.mxu0 0
    %1813 = vmatpush2.bf16.xpose.msra.mxu0 0
    %1814 = vmatprep.subr.bf16.mxu0 0
    %1815 = vmatpush2.bf16.xpose.msra.mxu0 0
    %1816 = vmatprep.subr.bf16.mxu0 0
    %1817 = vmatpush2.bf16.xpose.msra.mxu0 0
    %1818 = vmatprep.subr.bf16.mxu0 0
    %1819 = vmatpush2.bf16.xpose.msra.mxu0 0
    %1820 = vmatprep.subr.bf16.mxu0 0
    %1821 = vmatpush2.bf16.xpose.msra.mxu0 0
    %1822 = vmatprep.subr.bf16.mxu0 0
    %1823 = vmatpush2.bf16.xpose.msra.mxu0 0
    %1824 = vmatprep.subr.bf16.mxu0 0
    %1825 = vmatpush2.bf16.xpose.msra.mxu0 0
    %1826 = vmatprep.mubr.bf16.mxu0 0
    %1827 = vmatmul.mubr.bf16.gmra.mxu0 %v1789
    %v1828 = vpop.f32.mrf.mxu0
    %v1829 = vadd.f32 0.0, %v1828
    %v1830 = vpop.f32.mrf.mxu0
    %v1831 = vpop.f32.mrf.mxu0
    %v1832 = vpop.f32.mrf.mxu0
    %1833 = vdwg.mxu0
    %1834 = vrot.lane.b32.xlu0 %v171, 112
    %v1835 = vpop.permute.xlu0 %1834
    %1836 = vrot.lane.b32.xlu0 %v171, 80
    %v1837 = vpop.permute.xlu0 %1836
    %v1839 = vsel %vm175, %v1835, 0
    %v1842 = vsel %vm175, %v1837, 0
    %1844 = vmatprep.subr.bf16.mxu0 0
    %1845 = vmatpush1.bf16.xpose.msra.mxu0 0
    %1846 = vmatprep.subr.bf16.mxu0 0
    %1847 = vmatpush1.bf16.xpose.msra.mxu0 0
    %1848 = vmatprep.subr.bf16.mxu0 0
    %1849 = vmatpush1.bf16.xpose.msra.mxu0 0
    %1850 = vmatprep.subr.bf16.mxu0 0
    %1851 = vmatpush1.bf16.xpose.msra.mxu0 0
    %1852 = vmatprep.subr.bf16.mxu0 0
    %1853 = vmatpush1.bf16.xpose.msra.mxu0 0
    %1854 = vmatprep.subr.bf16.mxu0 0
    %1855 = vmatpush1.bf16.xpose.msra.mxu0 0
    %1856 = vmatprep.subr.bf16.mxu0 0
    %1857 = vmatpush1.bf16.xpose.msra.mxu0 0
    %1858 = vmatprep.subr.bf16.mxu0 0
    %1859 = vmatpush1.bf16.xpose.msra.mxu0 %v1842
    %1860 = vmatprep.subr.bf16.mxu0 0
    %1861 = vmatpush2.bf16.xpose.msra.mxu0 0
    %1862 = vmatprep.subr.bf16.mxu0 0
    %1863 = vmatpush2.bf16.xpose.msra.mxu0 0
    %1864 = vmatprep.subr.bf16.mxu0 0
    %1865 = vmatpush2.bf16.xpose.msra.mxu0 0
    %1866 = vmatprep.subr.bf16.mxu0 0
    %1867 = vmatpush2.bf16.xpose.msra.mxu0 0
    %1868 = vmatprep.subr.bf16.mxu0 0
    %1869 = vmatpush2.bf16.xpose.msra.mxu0 0
    %1870 = vmatprep.subr.bf16.mxu0 0
    %1871 = vmatpush2.bf16.xpose.msra.mxu0 0
    %1872 = vmatprep.subr.bf16.mxu0 0
    %1873 = vmatpush2.bf16.xpose.msra.mxu0 0
    %1874 = vmatprep.subr.bf16.mxu0 0
    %1875 = vmatpush2.bf16.xpose.msra.mxu0 0
    %1876 = vmatprep.mubr.bf16.mxu0 0
    %1877 = vmatmul.mubr.bf16.gmra.mxu0 %v1839
    %v1878 = vpop.f32.mrf.mxu0
    %v1879 = vadd.f32 0.0, %v1878
    %v1880 = vpop.f32.mrf.mxu0
    %v1881 = vpop.f32.mrf.mxu0
    %v1882 = vpop.f32.mrf.mxu0
    %1883 = vdwg.mxu0
    %v1884 = vsel %vm175, %v1629, -inf
    %v1885 = vrot.slane %v1884, 4
    %v1886 = vmax.f32 %v1884, %v1885
    %v1887 = vrot.slane %v1886, 2
    %v1888 = vmax.f32 %v1886, %v1887
    %v1889 = vrot.slane %v1888, 1
    %v1890 = vmax.f32 %v1888, %v1889
    %v1891 = vsel %vm175, %v1679, -inf
    %v1892 = vrot.slane %v1891, 4
    %v1893 = vmax.f32 %v1891, %v1892
    %v1894 = vrot.slane %v1893, 2
    %v1895 = vmax.f32 %v1893, %v1894
    %v1896 = vrot.slane %v1895, 1
    %v1897 = vmax.f32 %v1895, %v1896
    %v1898 = vsel %vm175, %v1729, -inf
    %v1899 = vrot.slane %v1898, 4
    %v1900 = vmax.f32 %v1898, %v1899
    %v1901 = vrot.slane %v1900, 2
    %v1902 = vmax.f32 %v1900, %v1901
    %v1903 = vrot.slane %v1902, 1
    %v1904 = vmax.f32 %v1902, %v1903
    %v1905 = vsel %vm175, %v1779, -inf
    %v1906 = vrot.slane %v1905, 4
    %v1907 = vmax.f32 %v1905, %v1906
    %v1908 = vrot.slane %v1907, 2
    %v1909 = vmax.f32 %v1907, %v1908
    %v1910 = vrot.slane %v1909, 1
    %v1911 = vmax.f32 %v1909, %v1910
    %v1912 = vsel %vm175, %v1829, -inf
    %v1913 = vrot.slane %v1912, 4
    %v1914 = vmax.f32 %v1912, %v1913
    %v1915 = vrot.slane %v1914, 2
    %v1916 = vmax.f32 %v1914, %v1915
    %v1917 = vrot.slane %v1916, 1
    %v1918 = vmax.f32 %v1916, %v1917
    %v1919 = vsel %vm175, %v1879, -inf
    %v1920 = vrot.slane %v1919, 4
    %v1921 = vmax.f32 %v1919, %v1920
    %v1922 = vrot.slane %v1921, 2
    %v1923 = vmax.f32 %v1921, %v1922
    %v1924 = vrot.slane %v1923, 1
    %v1925 = vmax.f32 %v1923, %v1924
    %v1926 = vsub.f32 %v1629, %v1890
    %v1927 = vsub.f32 %v1679, %v1897
    %v1928 = vsub.f32 %v1729, %v1904
    %v1929 = vsub.f32 %v1779, %v1911
    %v1930 = vsub.f32 %v1829, %v1918
    %v1931 = vsub.f32 %v1879, %v1925
    %v1932 = vmul.f32 %v1926, 1.442695
    %v1933 = vpow.pop %v1932
    %v1934 = vmul.f32 %v1927, 1.442695
    %v1935 = vpow.pop %v1934
    %v1936 = vmul.f32 %v1928, 1.442695
    %v1937 = vpow.pop %v1936
    %v1938 = vmul.f32 %v1929, 1.442695
    %v1939 = vpow.pop %v1938
    %v1940 = vmul.f32 %v1930, 1.442695
    %v1941 = vpow.pop %v1940
    %v1942 = vmul.f32 %v1931, 1.442695
    %v1943 = vpow.pop %v1942
    %v1944 = vsel %vm175, %v1933, 0.0
    %v1945 = vrot.slane %v1944, 4
    %v1946 = vadd.f32 %v1944, %v1945
    %v1947 = vrot.slane %v1946, 2
    %v1948 = vadd.f32 %v1946, %v1947
    %v1949 = vrot.slane %v1948, 1
    %v1950 = vadd.f32 %v1948, %v1949
    %v1951 = vsel %vm175, %v1935, 0.0
    %v1952 = vrot.slane %v1951, 4
    %v1953 = vadd.f32 %v1951, %v1952
    %v1954 = vrot.slane %v1953, 2
    %v1955 = vadd.f32 %v1953, %v1954
    %v1956 = vrot.slane %v1955, 1
    %v1957 = vadd.f32 %v1955, %v1956
    %v1958 = vsel %vm175, %v1937, 0.0
    %v1959 = vrot.slane %v1958, 4
    %v1960 = vadd.f32 %v1958, %v1959
    %v1961 = vrot.slane %v1960, 2
    %v1962 = vadd.f32 %v1960, %v1961
    %v1963 = vrot.slane %v1962, 1
    %v1964 = vadd.f32 %v1962, %v1963
    %v1965 = vsel %vm175, %v1939, 0.0
    %v1966 = vrot.slane %v1965, 4
    %v1967 = vadd.f32 %v1965, %v1966
    %v1968 = vrot.slane %v1967, 2
    %v1969 = vadd.f32 %v1967, %v1968
    %v1970 = vrot.slane %v1969, 1
    %v1971 = vadd.f32 %v1969, %v1970
    %v1972 = vsel %vm175, %v1941, 0.0
    %v1973 = vrot.slane %v1972, 4
    %v1974 = vadd.f32 %v1972, %v1973
    %v1975 = vrot.slane %v1974, 2
    %v1976 = vadd.f32 %v1974, %v1975
    %v1977 = vrot.slane %v1976, 1
    %v1978 = vadd.f32 %v1976, %v1977
    %v1979 = vsel %vm175, %v1943, 0.0
    %v1980 = vrot.slane %v1979, 4
    %v1981 = vadd.f32 %v1979, %v1980
    %v1982 = vrot.slane %v1981, 2
    %v1983 = vadd.f32 %v1981, %v1982
    %v1984 = vrot.slane %v1983, 1
    %v1985 = vadd.f32 %v1983, %v1984
    %v1986 = vrcp.pop %v1950
    %v1987 = vrcp.pop %v1957
    %v1988 = vrcp.pop %v1964
    %v1989 = vrcp.pop %v1971
    %v1990 = vrcp.pop %v1978
    %v1991 = vrcp.pop %v1985
    %v1992 = vmul.f32 %v1933, %v1986
    %v1993 = vmul.f32 %v1935, %v1987
    %v1994 = vmul.f32 %v1937, %v1988
    %v1995 = vmul.f32 %v1939, %v1989
    %v1996 = vmul.f32 %v1941, %v1990
    %v1997 = vmul.f32 %v1943, %v1991
    %v1998 = vpack.c.bf16 %v1992, %v1992
    %v1999 = vpack.c.bf16 %v1993, %v1993
    %v2000 = vpack.c.bf16 %v1994, %v1994
    %v2001 = vpack.c.bf16 %v1995, %v1995
    %v2002 = vpack.c.bf16 %v1996, %v1996
    %v2003 = vpack.c.bf16 %v1997, %v1997
    %2004 = vrot.lane.b32.xlu0 %v166, 48
    %v2005 = vpop.permute.xlu0 %2004
    %v2007 = vsel %vm175, %v1998, 0
    %v2010 = vsel %vm592, %v2005, 0
    %2012 = vmatprep.subr.bf16.mxu0 0
    %2013 = vmatpush1.bf16.msra.mxu0 0
    %2014 = vmatprep.subr.bf16.mxu0 0
    %2015 = vmatpush1.bf16.msra.mxu0 0
    %2016 = vmatprep.subr.bf16.mxu0 0
    %2017 = vmatpush1.bf16.msra.mxu0 0
    %2018 = vmatprep.subr.bf16.mxu0 0
    %2019 = vmatpush1.bf16.msra.mxu0 0
    %2020 = vmatprep.subr.bf16.mxu0 0
    %2021 = vmatpush1.bf16.msra.mxu0 0
    %2022 = vmatprep.subr.bf16.mxu0 0
    %2023 = vmatpush1.bf16.msra.mxu0 0
    %2024 = vmatprep.subr.bf16.mxu0 0
    %2025 = vmatpush1.bf16.msra.mxu0 0
    %2026 = vmatprep.subr.bf16.mxu0 0
    %2027 = vmatpush1.bf16.msra.mxu0 %v2010
    %2028 = vmatprep.subr.bf16.mxu0 0
    %2029 = vmatpush2.bf16.msra.mxu0 0
    %2030 = vmatprep.subr.bf16.mxu0 0
    %2031 = vmatpush2.bf16.msra.mxu0 0
    %2032 = vmatprep.subr.bf16.mxu0 0
    %2033 = vmatpush2.bf16.msra.mxu0 0
    %2034 = vmatprep.subr.bf16.mxu0 0
    %2035 = vmatpush2.bf16.msra.mxu0 0
    %2036 = vmatprep.subr.bf16.mxu0 0
    %2037 = vmatpush2.bf16.msra.mxu0 0
    %2038 = vmatprep.subr.bf16.mxu0 0
    %2039 = vmatpush2.bf16.msra.mxu0 0
    %2040 = vmatprep.subr.bf16.mxu0 0
    %2041 = vmatpush2.bf16.msra.mxu0 0
    %2042 = vmatprep.subr.bf16.mxu0 0
    %2043 = vmatpush2.bf16.msra.mxu0 0
    %2044 = vmatprep.mubr.bf16.mxu0 0
    %2045 = vmatmul.mubr.bf16.gmra.mxu0 %v2007
    %v2046 = vpop.f32.mrf.mxu0
    %v2047 = vadd.f32 0.0, %v2046
    %v2048 = vpop.f32.mrf.mxu0
    %v2049 = vpop.f32.mrf.mxu0
    %v2050 = vpop.f32.mrf.mxu0
    %2051 = vdwg.mxu0
    %2052 = vrot.lane.b32.xlu0 %v167, 48
    %v2053 = vpop.permute.xlu0 %2052
    %v2055 = vsel %vm175, %v1999, 0
    %v2058 = vsel %vm592, %v2053, 0
    %2060 = vmatprep.subr.bf16.mxu0 0
    %2061 = vmatpush1.bf16.msra.mxu0 0
    %2062 = vmatprep.subr.bf16.mxu0 0
    %2063 = vmatpush1.bf16.msra.mxu0 0
    %2064 = vmatprep.subr.bf16.mxu0 0
    %2065 = vmatpush1.bf16.msra.mxu0 0
    %2066 = vmatprep.subr.bf16.mxu0 0
    %2067 = vmatpush1.bf16.msra.mxu0 0
    %2068 = vmatprep.subr.bf16.mxu0 0
    %2069 = vmatpush1.bf16.msra.mxu0 0
    %2070 = vmatprep.subr.bf16.mxu0 0
    %2071 = vmatpush1.bf16.msra.mxu0 0
    %2072 = vmatprep.subr.bf16.mxu0 0
    %2073 = vmatpush1.bf16.msra.mxu0 0
    %2074 = vmatprep.subr.bf16.mxu0 0
    %2075 = vmatpush1.bf16.msra.mxu0 %v2058
    %2076 = vmatprep.subr.bf16.mxu0 0
    %2077 = vmatpush2.bf16.msra.mxu0 0
    %2078 = vmatprep.subr.bf16.mxu0 0
    %2079 = vmatpush2.bf16.msra.mxu0 0
    %2080 = vmatprep.subr.bf16.mxu0 0
    %2081 = vmatpush2.bf16.msra.mxu0 0
    %2082 = vmatprep.subr.bf16.mxu0 0
    %2083 = vmatpush2.bf16.msra.mxu0 0
    %2084 = vmatprep.subr.bf16.mxu0 0
    %2085 = vmatpush2.bf16.msra.mxu0 0
    %2086 = vmatprep.subr.bf16.mxu0 0
    %2087 = vmatpush2.bf16.msra.mxu0 0
    %2088 = vmatprep.subr.bf16.mxu0 0
    %2089 = vmatpush2.bf16.msra.mxu0 0
    %2090 = vmatprep.subr.bf16.mxu0 0
    %2091 = vmatpush2.bf16.msra.mxu0 0
    %2092 = vmatprep.mubr.bf16.mxu0 0
    %2093 = vmatmul.mubr.bf16.gmra.mxu0 %v2055
    %v2094 = vpop.f32.mrf.mxu0
    %v2095 = vadd.f32 0.0, %v2094
    %v2096 = vpop.f32.mrf.mxu0
    %v2097 = vpop.f32.mrf.mxu0
    %v2098 = vpop.f32.mrf.mxu0
    %2099 = vdwg.mxu0
    %2100 = vrot.lane.b32.xlu0 %v168, 48
    %v2101 = vpop.permute.xlu0 %2100
    %v2103 = vsel %vm175, %v2000, 0
    %v2106 = vsel %vm592, %v2101, 0
    %2108 = vmatprep.subr.bf16.mxu0 0
    %2109 = vmatpush1.bf16.msra.mxu0 0
    %2110 = vmatprep.subr.bf16.mxu0 0
    %2111 = vmatpush1.bf16.msra.mxu0 0
    %2112 = vmatprep.subr.bf16.mxu0 0
    %2113 = vmatpush1.bf16.msra.mxu0 0
    %2114 = vmatprep.subr.bf16.mxu0 0
    %2115 = vmatpush1.bf16.msra.mxu0 0
    %2116 = vmatprep.subr.bf16.mxu0 0
    %2117 = vmatpush1.bf16.msra.mxu0 0
    %2118 = vmatprep.subr.bf16.mxu0 0
    %2119 = vmatpush1.bf16.msra.mxu0 0
    %2120 = vmatprep.subr.bf16.mxu0 0
    %2121 = vmatpush1.bf16.msra.mxu0 0
    %2122 = vmatprep.subr.bf16.mxu0 0
    %2123 = vmatpush1.bf16.msra.mxu0 %v2106
    %2124 = vmatprep.subr.bf16.mxu0 0
    %2125 = vmatpush2.bf16.msra.mxu0 0
    %2126 = vmatprep.subr.bf16.mxu0 0
    %2127 = vmatpush2.bf16.msra.mxu0 0
    %2128 = vmatprep.subr.bf16.mxu0 0
    %2129 = vmatpush2.bf16.msra.mxu0 0
    %2130 = vmatprep.subr.bf16.mxu0 0
    %2131 = vmatpush2.bf16.msra.mxu0 0
    %2132 = vmatprep.subr.bf16.mxu0 0
    %2133 = vmatpush2.bf16.msra.mxu0 0
    %2134 = vmatprep.subr.bf16.mxu0 0
    %2135 = vmatpush2.bf16.msra.mxu0 0
    %2136 = vmatprep.subr.bf16.mxu0 0
    %2137 = vmatpush2.bf16.msra.mxu0 0
    %2138 = vmatprep.subr.bf16.mxu0 0
    %2139 = vmatpush2.bf16.msra.mxu0 0
    %2140 = vmatprep.mubr.bf16.mxu0 0
    %2141 = vmatmul.mubr.bf16.gmra.mxu0 %v2103
    %v2142 = vpop.f32.mrf.mxu0
    %v2143 = vadd.f32 0.0, %v2142
    %v2144 = vpop.f32.mrf.mxu0
    %v2145 = vpop.f32.mrf.mxu0
    %v2146 = vpop.f32.mrf.mxu0
    %2147 = vdwg.mxu0
    %2148 = vrot.lane.b32.xlu0 %v169, 48
    %v2149 = vpop.permute.xlu0 %2148
    %v2151 = vsel %vm175, %v2001, 0
    %v2154 = vsel %vm592, %v2149, 0
    %2156 = vmatprep.subr.bf16.mxu0 0
    %2157 = vmatpush1.bf16.msra.mxu0 0
    %2158 = vmatprep.subr.bf16.mxu0 0
    %2159 = vmatpush1.bf16.msra.mxu0 0
    %2160 = vmatprep.subr.bf16.mxu0 0
    %2161 = vmatpush1.bf16.msra.mxu0 0
    %2162 = vmatprep.subr.bf16.mxu0 0
    %2163 = vmatpush1.bf16.msra.mxu0 0
    %2164 = vmatprep.subr.bf16.mxu0 0
    %2165 = vmatpush1.bf16.msra.mxu0 0
    %2166 = vmatprep.subr.bf16.mxu0 0
    %2167 = vmatpush1.bf16.msra.mxu0 0
    %2168 = vmatprep.subr.bf16.mxu0 0
    %2169 = vmatpush1.bf16.msra.mxu0 0
    %2170 = vmatprep.subr.bf16.mxu0 0
    %2171 = vmatpush1.bf16.msra.mxu0 %v2154
    %2172 = vmatprep.subr.bf16.mxu0 0
    %2173 = vmatpush2.bf16.msra.mxu0 0
    %2174 = vmatprep.subr.bf16.mxu0 0
    %2175 = vmatpush2.bf16.msra.mxu0 0
    %2176 = vmatprep.subr.bf16.mxu0 0
    %2177 = vmatpush2.bf16.msra.mxu0 0
    %2178 = vmatprep.subr.bf16.mxu0 0
    %2179 = vmatpush2.bf16.msra.mxu0 0
    %2180 = vmatprep.subr.bf16.mxu0 0
    %2181 = vmatpush2.bf16.msra.mxu0 0
    %2182 = vmatprep.subr.bf16.mxu0 0
    %2183 = vmatpush2.bf16.msra.mxu0 0
    %2184 = vmatprep.subr.bf16.mxu0 0
    %2185 = vmatpush2.bf16.msra.mxu0 0
    %2186 = vmatprep.subr.bf16.mxu0 0
    %2187 = vmatpush2.bf16.msra.mxu0 0
    %2188 = vmatprep.mubr.bf16.mxu0 0
    %2189 = vmatmul.mubr.bf16.gmra.mxu0 %v2151
    %v2190 = vpop.f32.mrf.mxu0
    %v2191 = vadd.f32 0.0, %v2190
    %v2192 = vpop.f32.mrf.mxu0
    %v2193 = vpop.f32.mrf.mxu0
    %v2194 = vpop.f32.mrf.mxu0
    %2195 = vdwg.mxu0
    %2196 = vrot.lane.b32.xlu0 %v170, 48
    %v2197 = vpop.permute.xlu0 %2196
    %v2199 = vsel %vm175, %v2002, 0
    %v2202 = vsel %vm592, %v2197, 0
    %2204 = vmatprep.subr.bf16.mxu0 0
    %2205 = vmatpush1.bf16.msra.mxu0 0
    %2206 = vmatprep.subr.bf16.mxu0 0
    %2207 = vmatpush1.bf16.msra.mxu0 0
    %2208 = vmatprep.subr.bf16.mxu0 0
    %2209 = vmatpush1.bf16.msra.mxu0 0
    %2210 = vmatprep.subr.bf16.mxu0 0
    %2211 = vmatpush1.bf16.msra.mxu0 0
    %2212 = vmatprep.subr.bf16.mxu0 0
    %2213 = vmatpush1.bf16.msra.mxu0 0
    %2214 = vmatprep.subr.bf16.mxu0 0
    %2215 = vmatpush1.bf16.msra.mxu0 0
    %2216 = vmatprep.subr.bf16.mxu0 0
    %2217 = vmatpush1.bf16.msra.mxu0 0
    %2218 = vmatprep.subr.bf16.mxu0 0
    %2219 = vmatpush1.bf16.msra.mxu0 %v2202
    %2220 = vmatprep.subr.bf16.mxu0 0
    %2221 = vmatpush2.bf16.msra.mxu0 0
    %2222 = vmatprep.subr.bf16.mxu0 0
    %2223 = vmatpush2.bf16.msra.mxu0 0
    %2224 = vmatprep.subr.bf16.mxu0 0
    %2225 = vmatpush2.bf16.msra.mxu0 0
    %2226 = vmatprep.subr.bf16.mxu0 0
    %2227 = vmatpush2.bf16.msra.mxu0 0
    %2228 = vmatprep.subr.bf16.mxu0 0
    %2229 = vmatpush2.bf16.msra.mxu0 0
    %2230 = vmatprep.subr.bf16.mxu0 0
    %2231 = vmatpush2.bf16.msra.mxu0 0
    %2232 = vmatprep.subr.bf16.mxu0 0
    %2233 = vmatpush2.bf16.msra.mxu0 0
    %2234 = vmatprep.subr.bf16.mxu0 0
    %2235 = vmatpush2.bf16.msra.mxu0 0
    %2236 = vmatprep.mubr.bf16.mxu0 0
    %2237 = vmatmul.mubr.bf16.gmra.mxu0 %v2199
    %v2238 = vpop.f32.mrf.mxu0
    %v2239 = vadd.f32 0.0, %v2238
    %v2240 = vpop.f32.mrf.mxu0
    %v2241 = vpop.f32.mrf.mxu0
    %v2242 = vpop.f32.mrf.mxu0
    %2243 = vdwg.mxu0
    %2244 = vrot.lane.b32.xlu0 %v171, 48
    %v2245 = vpop.permute.xlu0 %2244
    %v2247 = vsel %vm175, %v2003, 0
    %v2250 = vsel %vm592, %v2245, 0
    %2252 = vmatprep.subr.bf16.mxu0 0
    %2253 = vmatpush1.bf16.msra.mxu0 0
    %2254 = vmatprep.subr.bf16.mxu0 0
    %2255 = vmatpush1.bf16.msra.mxu0 0
    %2256 = vmatprep.subr.bf16.mxu0 0
    %2257 = vmatpush1.bf16.msra.mxu0 0
    %2258 = vmatprep.subr.bf16.mxu0 0
    %2259 = vmatpush1.bf16.msra.mxu0 0
    %2260 = vmatprep.subr.bf16.mxu0 0
    %2261 = vmatpush1.bf16.msra.mxu0 0
    %2262 = vmatprep.subr.bf16.mxu0 0
    %2263 = vmatpush1.bf16.msra.mxu0 0
    %2264 = vmatprep.subr.bf16.mxu0 0
    %2265 = vmatpush1.bf16.msra.mxu0 0
    %2266 = vmatprep.subr.bf16.mxu0 0
    %2267 = vmatpush1.bf16.msra.mxu0 %v2250
    %2268 = vmatprep.subr.bf16.mxu0 0
    %2269 = vmatpush2.bf16.msra.mxu0 0
    %2270 = vmatprep.subr.bf16.mxu0 0
    %2271 = vmatpush2.bf16.msra.mxu0 0
    %2272 = vmatprep.subr.bf16.mxu0 0
    %2273 = vmatpush2.bf16.msra.mxu0 0
    %2274 = vmatprep.subr.bf16.mxu0 0
    %2275 = vmatpush2.bf16.msra.mxu0 0
    %2276 = vmatprep.subr.bf16.mxu0 0
    %2277 = vmatpush2.bf16.msra.mxu0 0
    %2278 = vmatprep.subr.bf16.mxu0 0
    %2279 = vmatpush2.bf16.msra.mxu0 0
    %2280 = vmatprep.subr.bf16.mxu0 0
    %2281 = vmatpush2.bf16.msra.mxu0 0
    %2282 = vmatprep.subr.bf16.mxu0 0
    %2283 = vmatpush2.bf16.msra.mxu0 0
    %2284 = vmatprep.mubr.bf16.mxu0 0
    %2285 = vmatmul.mubr.bf16.gmra.mxu0 %v2247
    %v2286 = vpop.f32.mrf.mxu0
    %v2287 = vadd.f32 0.0, %v2286
    %v2288 = vpop.f32.mrf.mxu0
    %v2289 = vpop.f32.mrf.mxu0
    %v2290 = vpop.f32.mrf.mxu0
    %2291 = vdwg.mxu0
    %2292 = vrot.lane.b32.xlu0 %v166, 104
    %v2293 = vpop.permute.xlu0 %2292
    %2294 = vrot.lane.b32.xlu0 %v166, 72
    %v2295 = vpop.permute.xlu0 %2294
    %v2297 = vsel %vm175, %v2293, 0
    %v2300 = vsel %vm175, %v2295, 0
    %2302 = vmatprep.subr.bf16.mxu0 0
    %2303 = vmatpush1.bf16.xpose.msra.mxu0 0
    %2304 = vmatprep.subr.bf16.mxu0 0
    %2305 = vmatpush1.bf16.xpose.msra.mxu0 0
    %2306 = vmatprep.subr.bf16.mxu0 0
    %2307 = vmatpush1.bf16.xpose.msra.mxu0 0
    %2308 = vmatprep.subr.bf16.mxu0 0
    %2309 = vmatpush1.bf16.xpose.msra.mxu0 0
    %2310 = vmatprep.subr.bf16.mxu0 0
    %2311 = vmatpush1.bf16.xpose.msra.mxu0 0
    %2312 = vmatprep.subr.bf16.mxu0 0
    %2313 = vmatpush1.bf16.xpose.msra.mxu0 0
    %2314 = vmatprep.subr.bf16.mxu0 0
    %2315 = vmatpush1.bf16.xpose.msra.mxu0 0
    %2316 = vmatprep.subr.bf16.mxu0 0
    %2317 = vmatpush1.bf16.xpose.msra.mxu0 %v2300
    %2318 = vmatprep.subr.bf16.mxu0 0
    %2319 = vmatpush2.bf16.xpose.msra.mxu0 0
    %2320 = vmatprep.subr.bf16.mxu0 0
    %2321 = vmatpush2.bf16.xpose.msra.mxu0 0
    %2322 = vmatprep.subr.bf16.mxu0 0
    %2323 = vmatpush2.bf16.xpose.msra.mxu0 0
    %2324 = vmatprep.subr.bf16.mxu0 0
    %2325 = vmatpush2.bf16.xpose.msra.mxu0 0
    %2326 = vmatprep.subr.bf16.mxu0 0
    %2327 = vmatpush2.bf16.xpose.msra.mxu0 0
    %2328 = vmatprep.subr.bf16.mxu0 0
    %2329 = vmatpush2.bf16.xpose.msra.mxu0 0
    %2330 = vmatprep.subr.bf16.mxu0 0
    %2331 = vmatpush2.bf16.xpose.msra.mxu0 0
    %2332 = vmatprep.subr.bf16.mxu0 0
    %2333 = vmatpush2.bf16.xpose.msra.mxu0 0
    %2334 = vmatprep.mubr.bf16.mxu0 0
    %2335 = vmatmul.mubr.bf16.gmra.mxu0 %v2297
    %v2336 = vpop.f32.mrf.mxu0
    %v2337 = vadd.f32 0.0, %v2336
    %v2338 = vpop.f32.mrf.mxu0
    %v2339 = vpop.f32.mrf.mxu0
    %v2340 = vpop.f32.mrf.mxu0
    %2341 = vdwg.mxu0
    %2342 = vrot.lane.b32.xlu0 %v167, 104
    %v2343 = vpop.permute.xlu0 %2342
    %2344 = vrot.lane.b32.xlu0 %v167, 72
    %v2345 = vpop.permute.xlu0 %2344
    %v2347 = vsel %vm175, %v2343, 0
    %v2350 = vsel %vm175, %v2345, 0
    %2352 = vmatprep.subr.bf16.mxu0 0
    %2353 = vmatpush1.bf16.xpose.msra.mxu0 0
    %2354 = vmatprep.subr.bf16.mxu0 0
    %2355 = vmatpush1.bf16.xpose.msra.mxu0 0
    %2356 = vmatprep.subr.bf16.mxu0 0
    %2357 = vmatpush1.bf16.xpose.msra.mxu0 0
    %2358 = vmatprep.subr.bf16.mxu0 0
    %2359 = vmatpush1.bf16.xpose.msra.mxu0 0
    %2360 = vmatprep.subr.bf16.mxu0 0
    %2361 = vmatpush1.bf16.xpose.msra.mxu0 0
    %2362 = vmatprep.subr.bf16.mxu0 0
    %2363 = vmatpush1.bf16.xpose.msra.mxu0 0
    %2364 = vmatprep.subr.bf16.mxu0 0
    %2365 = vmatpush1.bf16.xpose.msra.mxu0 0
    %2366 = vmatprep.subr.bf16.mxu0 0
    %2367 = vmatpush1.bf16.xpose.msra.mxu0 %v2350
    %2368 = vmatprep.subr.bf16.mxu0 0
    %2369 = vmatpush2.bf16.xpose.msra.mxu0 0
    %2370 = vmatprep.subr.bf16.mxu0 0
    %2371 = vmatpush2.bf16.xpose.msra.mxu0 0
    %2372 = vmatprep.subr.bf16.mxu0 0
    %2373 = vmatpush2.bf16.xpose.msra.mxu0 0
    %2374 = vmatprep.subr.bf16.mxu0 0
    %2375 = vmatpush2.bf16.xpose.msra.mxu0 0
    %2376 = vmatprep.subr.bf16.mxu0 0
    %2377 = vmatpush2.bf16.xpose.msra.mxu0 0
    %2378 = vmatprep.subr.bf16.mxu0 0
    %2379 = vmatpush2.bf16.xpose.msra.mxu0 0
    %2380 = vmatprep.subr.bf16.mxu0 0
    %2381 = vmatpush2.bf16.xpose.msra.mxu0 0
    %2382 = vmatprep.subr.bf16.mxu0 0
    %2383 = vmatpush2.bf16.xpose.msra.mxu0 0
    %2384 = vmatprep.mubr.bf16.mxu0 0
    %2385 = vmatmul.mubr.bf16.gmra.mxu0 %v2347
    %v2386 = vpop.f32.mrf.mxu0
    %v2387 = vadd.f32 0.0, %v2386
    %v2388 = vpop.f32.mrf.mxu0
    %v2389 = vpop.f32.mrf.mxu0
    %v2390 = vpop.f32.mrf.mxu0
    %2391 = vdwg.mxu0
    %2392 = vrot.lane.b32.xlu0 %v168, 104
    %v2393 = vpop.permute.xlu0 %2392
    %2394 = vrot.lane.b32.xlu0 %v168, 72
    %v2395 = vpop.permute.xlu0 %2394
    %v2397 = vsel %vm175, %v2393, 0
    %v2400 = vsel %vm175, %v2395, 0
    %2402 = vmatprep.subr.bf16.mxu0 0
    %2403 = vmatpush1.bf16.xpose.msra.mxu0 0
    %2404 = vmatprep.subr.bf16.mxu0 0
    %2405 = vmatpush1.bf16.xpose.msra.mxu0 0
    %2406 = vmatprep.subr.bf16.mxu0 0
    %2407 = vmatpush1.bf16.xpose.msra.mxu0 0
    %2408 = vmatprep.subr.bf16.mxu0 0
    %2409 = vmatpush1.bf16.xpose.msra.mxu0 0
    %2410 = vmatprep.subr.bf16.mxu0 0
    %2411 = vmatpush1.bf16.xpose.msra.mxu0 0
    %2412 = vmatprep.subr.bf16.mxu0 0
    %2413 = vmatpush1.bf16.xpose.msra.mxu0 0
    %2414 = vmatprep.subr.bf16.mxu0 0
    %2415 = vmatpush1.bf16.xpose.msra.mxu0 0
    %2416 = vmatprep.subr.bf16.mxu0 0
    %2417 = vmatpush1.bf16.xpose.msra.mxu0 %v2400
    %2418 = vmatprep.subr.bf16.mxu0 0
    %2419 = vmatpush2.bf16.xpose.msra.mxu0 0
    %2420 = vmatprep.subr.bf16.mxu0 0
    %2421 = vmatpush2.bf16.xpose.msra.mxu0 0
    %2422 = vmatprep.subr.bf16.mxu0 0
    %2423 = vmatpush2.bf16.xpose.msra.mxu0 0
    %2424 = vmatprep.subr.bf16.mxu0 0
    %2425 = vmatpush2.bf16.xpose.msra.mxu0 0
    %2426 = vmatprep.subr.bf16.mxu0 0
    %2427 = vmatpush2.bf16.xpose.msra.mxu0 0
    %2428 = vmatprep.subr.bf16.mxu0 0
    %2429 = vmatpush2.bf16.xpose.msra.mxu0 0
    %2430 = vmatprep.subr.bf16.mxu0 0
    %2431 = vmatpush2.bf16.xpose.msra.mxu0 0
    %2432 = vmatprep.subr.bf16.mxu0 0
    %2433 = vmatpush2.bf16.xpose.msra.mxu0 0
    %2434 = vmatprep.mubr.bf16.mxu0 0
    %2435 = vmatmul.mubr.bf16.gmra.mxu0 %v2397
    %v2436 = vpop.f32.mrf.mxu0
    %v2437 = vadd.f32 0.0, %v2436
    %v2438 = vpop.f32.mrf.mxu0
    %v2439 = vpop.f32.mrf.mxu0
    %v2440 = vpop.f32.mrf.mxu0
    %2441 = vdwg.mxu0
    %2442 = vrot.lane.b32.xlu0 %v169, 104
    %v2443 = vpop.permute.xlu0 %2442
    %2444 = vrot.lane.b32.xlu0 %v169, 72
    %v2445 = vpop.permute.xlu0 %2444
    %v2447 = vsel %vm175, %v2443, 0
    %v2450 = vsel %vm175, %v2445, 0
    %2452 = vmatprep.subr.bf16.mxu0 0
    %2453 = vmatpush1.bf16.xpose.msra.mxu0 0
    %2454 = vmatprep.subr.bf16.mxu0 0
    %2455 = vmatpush1.bf16.xpose.msra.mxu0 0
    %2456 = vmatprep.subr.bf16.mxu0 0
    %2457 = vmatpush1.bf16.xpose.msra.mxu0 0
    %2458 = vmatprep.subr.bf16.mxu0 0
    %2459 = vmatpush1.bf16.xpose.msra.mxu0 0
    %2460 = vmatprep.subr.bf16.mxu0 0
    %2461 = vmatpush1.bf16.xpose.msra.mxu0 0
    %2462 = vmatprep.subr.bf16.mxu0 0
    %2463 = vmatpush1.bf16.xpose.msra.mxu0 0
    %2464 = vmatprep.subr.bf16.mxu0 0
    %2465 = vmatpush1.bf16.xpose.msra.mxu0 0
    %2466 = vmatprep.subr.bf16.mxu0 0
    %2467 = vmatpush1.bf16.xpose.msra.mxu0 %v2450
    %2468 = vmatprep.subr.bf16.mxu0 0
    %2469 = vmatpush2.bf16.xpose.msra.mxu0 0
    %2470 = vmatprep.subr.bf16.mxu0 0
    %2471 = vmatpush2.bf16.xpose.msra.mxu0 0
    %2472 = vmatprep.subr.bf16.mxu0 0
    %2473 = vmatpush2.bf16.xpose.msra.mxu0 0
    %2474 = vmatprep.subr.bf16.mxu0 0
    %2475 = vmatpush2.bf16.xpose.msra.mxu0 0
    %2476 = vmatprep.subr.bf16.mxu0 0
    %2477 = vmatpush2.bf16.xpose.msra.mxu0 0
    %2478 = vmatprep.subr.bf16.mxu0 0
    %2479 = vmatpush2.bf16.xpose.msra.mxu0 0
    %2480 = vmatprep.subr.bf16.mxu0 0
    %2481 = vmatpush2.bf16.xpose.msra.mxu0 0
    %2482 = vmatprep.subr.bf16.mxu0 0
    %2483 = vmatpush2.bf16.xpose.msra.mxu0 0
    %2484 = vmatprep.mubr.bf16.mxu0 0
    %2485 = vmatmul.mubr.bf16.gmra.mxu0 %v2447
    %v2486 = vpop.f32.mrf.mxu0
    %v2487 = vadd.f32 0.0, %v2486
    %v2488 = vpop.f32.mrf.mxu0
    %v2489 = vpop.f32.mrf.mxu0
    %v2490 = vpop.f32.mrf.mxu0
    %2491 = vdwg.mxu0
    %2492 = vrot.lane.b32.xlu0 %v170, 104
    %v2493 = vpop.permute.xlu0 %2492
    %2494 = vrot.lane.b32.xlu0 %v170, 72
    %v2495 = vpop.permute.xlu0 %2494
    %v2497 = vsel %vm175, %v2493, 0
    %v2500 = vsel %vm175, %v2495, 0
    %2502 = vmatprep.subr.bf16.mxu0 0
    %2503 = vmatpush1.bf16.xpose.msra.mxu0 0
    %2504 = vmatprep.subr.bf16.mxu0 0
    %2505 = vmatpush1.bf16.xpose.msra.mxu0 0
    %2506 = vmatprep.subr.bf16.mxu0 0
    %2507 = vmatpush1.bf16.xpose.msra.mxu0 0
    %2508 = vmatprep.subr.bf16.mxu0 0
    %2509 = vmatpush1.bf16.xpose.msra.mxu0 0
    %2510 = vmatprep.subr.bf16.mxu0 0
    %2511 = vmatpush1.bf16.xpose.msra.mxu0 0
    %2512 = vmatprep.subr.bf16.mxu0 0
    %2513 = vmatpush1.bf16.xpose.msra.mxu0 0
    %2514 = vmatprep.subr.bf16.mxu0 0
    %2515 = vmatpush1.bf16.xpose.msra.mxu0 0
    %2516 = vmatprep.subr.bf16.mxu0 0
    %2517 = vmatpush1.bf16.xpose.msra.mxu0 %v2500
    %2518 = vmatprep.subr.bf16.mxu0 0
    %2519 = vmatpush2.bf16.xpose.msra.mxu0 0
    %2520 = vmatprep.subr.bf16.mxu0 0
    %2521 = vmatpush2.bf16.xpose.msra.mxu0 0
    %2522 = vmatprep.subr.bf16.mxu0 0
    %2523 = vmatpush2.bf16.xpose.msra.mxu0 0
    %2524 = vmatprep.subr.bf16.mxu0 0
    %2525 = vmatpush2.bf16.xpose.msra.mxu0 0
    %2526 = vmatprep.subr.bf16.mxu0 0
    %2527 = vmatpush2.bf16.xpose.msra.mxu0 0
    %2528 = vmatprep.subr.bf16.mxu0 0
    %2529 = vmatpush2.bf16.xpose.msra.mxu0 0
    %2530 = vmatprep.subr.bf16.mxu0 0
    %2531 = vmatpush2.bf16.xpose.msra.mxu0 0
    %2532 = vmatprep.subr.bf16.mxu0 0
    %2533 = vmatpush2.bf16.xpose.msra.mxu0 0
    %2534 = vmatprep.mubr.bf16.mxu0 0
    %2535 = vmatmul.mubr.bf16.gmra.mxu0 %v2497
    %v2536 = vpop.f32.mrf.mxu0
    %v2537 = vadd.f32 0.0, %v2536
    %v2538 = vpop.f32.mrf.mxu0
    %v2539 = vpop.f32.mrf.mxu0
    %v2540 = vpop.f32.mrf.mxu0
    %2541 = vdwg.mxu0
    %2542 = vrot.lane.b32.xlu0 %v171, 104
    %v2543 = vpop.permute.xlu0 %2542
    %2544 = vrot.lane.b32.xlu0 %v171, 72
    %v2545 = vpop.permute.xlu0 %2544
    %v2547 = vsel %vm175, %v2543, 0
    %v2550 = vsel %vm175, %v2545, 0
    %2552 = vmatprep.subr.bf16.mxu0 0
    %2553 = vmatpush1.bf16.xpose.msra.mxu0 0
    %2554 = vmatprep.subr.bf16.mxu0 0
    %2555 = vmatpush1.bf16.xpose.msra.mxu0 0
    %2556 = vmatprep.subr.bf16.mxu0 0
    %2557 = vmatpush1.bf16.xpose.msra.mxu0 0
    %2558 = vmatprep.subr.bf16.mxu0 0
    %2559 = vmatpush1.bf16.xpose.msra.mxu0 0
    %2560 = vmatprep.subr.bf16.mxu0 0
    %2561 = vmatpush1.bf16.xpose.msra.mxu0 0
    %2562 = vmatprep.subr.bf16.mxu0 0
    %2563 = vmatpush1.bf16.xpose.msra.mxu0 0
    %2564 = vmatprep.subr.bf16.mxu0 0
    %2565 = vmatpush1.bf16.xpose.msra.mxu0 0
    %2566 = vmatprep.subr.bf16.mxu0 0
    %2567 = vmatpush1.bf16.xpose.msra.mxu0 %v2550
    %2568 = vmatprep.subr.bf16.mxu0 0
    %2569 = vmatpush2.bf16.xpose.msra.mxu0 0
    %2570 = vmatprep.subr.bf16.mxu0 0
    %2571 = vmatpush2.bf16.xpose.msra.mxu0 0
    %2572 = vmatprep.subr.bf16.mxu0 0
    %2573 = vmatpush2.bf16.xpose.msra.mxu0 0
    %2574 = vmatprep.subr.bf16.mxu0 0
    %2575 = vmatpush2.bf16.xpose.msra.mxu0 0
    %2576 = vmatprep.subr.bf16.mxu0 0
    %2577 = vmatpush2.bf16.xpose.msra.mxu0 0
    %2578 = vmatprep.subr.bf16.mxu0 0
    %2579 = vmatpush2.bf16.xpose.msra.mxu0 0
    %2580 = vmatprep.subr.bf16.mxu0 0
    %2581 = vmatpush2.bf16.xpose.msra.mxu0 0
    %2582 = vmatprep.subr.bf16.mxu0 0
    %2583 = vmatpush2.bf16.xpose.msra.mxu0 0
    %2584 = vmatprep.mubr.bf16.mxu0 0
    %2585 = vmatmul.mubr.bf16.gmra.mxu0 %v2547
    %v2586 = vpop.f32.mrf.mxu0
    %v2587 = vadd.f32 0.0, %v2586
    %v2588 = vpop.f32.mrf.mxu0
    %v2589 = vpop.f32.mrf.mxu0
    %v2590 = vpop.f32.mrf.mxu0
    %2591 = vdwg.mxu0
    %v2592 = vsel %vm175, %v2337, -inf
    %v2593 = vrot.slane %v2592, 4
    %v2594 = vmax.f32 %v2592, %v2593
    %v2595 = vrot.slane %v2594, 2
    %v2596 = vmax.f32 %v2594, %v2595
    %v2597 = vrot.slane %v2596, 1
    %v2598 = vmax.f32 %v2596, %v2597
    %v2599 = vsel %vm175, %v2387, -inf
    %v2600 = vrot.slane %v2599, 4
    %v2601 = vmax.f32 %v2599, %v2600
    %v2602 = vrot.slane %v2601, 2
    %v2603 = vmax.f32 %v2601, %v2602
    %v2604 = vrot.slane %v2603, 1
    %v2605 = vmax.f32 %v2603, %v2604
    %v2606 = vsel %vm175, %v2437, -inf
    %v2607 = vrot.slane %v2606, 4
    %v2608 = vmax.f32 %v2606, %v2607
    %v2609 = vrot.slane %v2608, 2
    %v2610 = vmax.f32 %v2608, %v2609
    %v2611 = vrot.slane %v2610, 1
    %v2612 = vmax.f32 %v2610, %v2611
    %v2613 = vsel %vm175, %v2487, -inf
    %v2614 = vrot.slane %v2613, 4
    %v2615 = vmax.f32 %v2613, %v2614
    %v2616 = vrot.slane %v2615, 2
    %v2617 = vmax.f32 %v2615, %v2616
    %v2618 = vrot.slane %v2617, 1
    %v2619 = vmax.f32 %v2617, %v2618
    %v2620 = vsel %vm175, %v2537, -inf
    %v2621 = vrot.slane %v2620, 4
    %v2622 = vmax.f32 %v2620, %v2621
    %v2623 = vrot.slane %v2622, 2
    %v2624 = vmax.f32 %v2622, %v2623
    %v2625 = vrot.slane %v2624, 1
    %v2626 = vmax.f32 %v2624, %v2625
    %v2627 = vsel %vm175, %v2587, -inf
    %v2628 = vrot.slane %v2627, 4
    %v2629 = vmax.f32 %v2627, %v2628
    %v2630 = vrot.slane %v2629, 2
    %v2631 = vmax.f32 %v2629, %v2630
    %v2632 = vrot.slane %v2631, 1
    %v2633 = vmax.f32 %v2631, %v2632
    %v2634 = vsub.f32 %v2337, %v2598
    %v2635 = vsub.f32 %v2387, %v2605
    %v2636 = vsub.f32 %v2437, %v2612
    %v2637 = vsub.f32 %v2487, %v2619
    %v2638 = vsub.f32 %v2537, %v2626
    %v2639 = vsub.f32 %v2587, %v2633
    %v2640 = vmul.f32 %v2634, 1.442695
    %v2641 = vpow.pop %v2640
    %v2642 = vmul.f32 %v2635, 1.442695
    %v2643 = vpow.pop %v2642
    %v2644 = vmul.f32 %v2636, 1.442695
    %v2645 = vpow.pop %v2644
    %v2646 = vmul.f32 %v2637, 1.442695
    %v2647 = vpow.pop %v2646
    %v2648 = vmul.f32 %v2638, 1.442695
    %v2649 = vpow.pop %v2648
    %v2650 = vmul.f32 %v2639, 1.442695
    %v2651 = vpow.pop %v2650
    %v2652 = vsel %vm175, %v2641, 0.0
    %v2653 = vrot.slane %v2652, 4
    %v2654 = vadd.f32 %v2652, %v2653
    %v2655 = vrot.slane %v2654, 2
    %v2656 = vadd.f32 %v2654, %v2655
    %v2657 = vrot.slane %v2656, 1
    %v2658 = vadd.f32 %v2656, %v2657
    %v2659 = vsel %vm175, %v2643, 0.0
    %v2660 = vrot.slane %v2659, 4
    %v2661 = vadd.f32 %v2659, %v2660
    %v2662 = vrot.slane %v2661, 2
    %v2663 = vadd.f32 %v2661, %v2662
    %v2664 = vrot.slane %v2663, 1
    %v2665 = vadd.f32 %v2663, %v2664
    %v2666 = vsel %vm175, %v2645, 0.0
    %v2667 = vrot.slane %v2666, 4
    %v2668 = vadd.f32 %v2666, %v2667
    %v2669 = vrot.slane %v2668, 2
    %v2670 = vadd.f32 %v2668, %v2669
    %v2671 = vrot.slane %v2670, 1
    %v2672 = vadd.f32 %v2670, %v2671
    %v2673 = vsel %vm175, %v2647, 0.0
    %v2674 = vrot.slane %v2673, 4
    %v2675 = vadd.f32 %v2673, %v2674
    %v2676 = vrot.slane %v2675, 2
    %v2677 = vadd.f32 %v2675, %v2676
    %v2678 = vrot.slane %v2677, 1
    %v2679 = vadd.f32 %v2677, %v2678
    %v2680 = vsel %vm175, %v2649, 0.0
    %v2681 = vrot.slane %v2680, 4
    %v2682 = vadd.f32 %v2680, %v2681
    %v2683 = vrot.slane %v2682, 2
    %v2684 = vadd.f32 %v2682, %v2683
    %v2685 = vrot.slane %v2684, 1
    %v2686 = vadd.f32 %v2684, %v2685
    %v2687 = vsel %vm175, %v2651, 0.0
    %v2688 = vrot.slane %v2687, 4
    %v2689 = vadd.f32 %v2687, %v2688
    %v2690 = vrot.slane %v2689, 2
    %v2691 = vadd.f32 %v2689, %v2690
    %v2692 = vrot.slane %v2691, 1
    %v2693 = vadd.f32 %v2691, %v2692
    %v2694 = vrcp.pop %v2658
    %v2695 = vrcp.pop %v2665
    %v2696 = vrcp.pop %v2672
    %v2697 = vrcp.pop %v2679
    %v2698 = vrcp.pop %v2686
    %v2699 = vrcp.pop %v2693
    %v2700 = vmul.f32 %v2641, %v2694
    %v2701 = vmul.f32 %v2643, %v2695
    %v2702 = vmul.f32 %v2645, %v2696
    %v2703 = vmul.f32 %v2647, %v2697
    %v2704 = vmul.f32 %v2649, %v2698
    %v2705 = vmul.f32 %v2651, %v2699
    %v2706 = vpack.c.bf16 %v2700, %v2700
    %v2707 = vpack.c.bf16 %v2701, %v2701
    %v2708 = vpack.c.bf16 %v2702, %v2702
    %v2709 = vpack.c.bf16 %v2703, %v2703
    %v2710 = vpack.c.bf16 %v2704, %v2704
    %v2711 = vpack.c.bf16 %v2705, %v2705
    %2712 = vrot.lane.b32.xlu0 %v166, 40
    %v2713 = vpop.permute.xlu0 %2712
    %v2715 = vsel %vm175, %v2706, 0
    %v2718 = vsel %vm592, %v2713, 0
    %2720 = vmatprep.subr.bf16.mxu0 0
    %2721 = vmatpush1.bf16.msra.mxu0 0
    %2722 = vmatprep.subr.bf16.mxu0 0
    %2723 = vmatpush1.bf16.msra.mxu0 0
    %2724 = vmatprep.subr.bf16.mxu0 0
    %2725 = vmatpush1.bf16.msra.mxu0 0
    %2726 = vmatprep.subr.bf16.mxu0 0
    %2727 = vmatpush1.bf16.msra.mxu0 0
    %2728 = vmatprep.subr.bf16.mxu0 0
    %2729 = vmatpush1.bf16.msra.mxu0 0
    %2730 = vmatprep.subr.bf16.mxu0 0
    %2731 = vmatpush1.bf16.msra.mxu0 0
    %2732 = vmatprep.subr.bf16.mxu0 0
    %2733 = vmatpush1.bf16.msra.mxu0 0
    %2734 = vmatprep.subr.bf16.mxu0 0
    %2735 = vmatpush1.bf16.msra.mxu0 %v2718
    %2736 = vmatprep.subr.bf16.mxu0 0
    %2737 = vmatpush2.bf16.msra.mxu0 0
    %2738 = vmatprep.subr.bf16.mxu0 0
    %2739 = vmatpush2.bf16.msra.mxu0 0
    %2740 = vmatprep.subr.bf16.mxu0 0
    %2741 = vmatpush2.bf16.msra.mxu0 0
    %2742 = vmatprep.subr.bf16.mxu0 0
    %2743 = vmatpush2.bf16.msra.mxu0 0
    %2744 = vmatprep.subr.bf16.mxu0 0
    %2745 = vmatpush2.bf16.msra.mxu0 0
    %2746 = vmatprep.subr.bf16.mxu0 0
    %2747 = vmatpush2.bf16.msra.mxu0 0
    %2748 = vmatprep.subr.bf16.mxu0 0
    %2749 = vmatpush2.bf16.msra.mxu0 0
    %2750 = vmatprep.subr.bf16.mxu0 0
    %2751 = vmatpush2.bf16.msra.mxu0 0
    %2752 = vmatprep.mubr.bf16.mxu0 0
    %2753 = vmatmul.mubr.bf16.gmra.mxu0 %v2715
    %v2754 = vpop.f32.mrf.mxu0
    %v2755 = vadd.f32 0.0, %v2754
    %v2756 = vpop.f32.mrf.mxu0
    %v2757 = vpop.f32.mrf.mxu0
    %v2758 = vpop.f32.mrf.mxu0
    %2759 = vdwg.mxu0
    %2760 = vrot.lane.b32.xlu0 %v167, 40
    %v2761 = vpop.permute.xlu0 %2760
    %v2763 = vsel %vm175, %v2707, 0
    %v2766 = vsel %vm592, %v2761, 0
    %2768 = vmatprep.subr.bf16.mxu0 0
    %2769 = vmatpush1.bf16.msra.mxu0 0
    %2770 = vmatprep.subr.bf16.mxu0 0
    %2771 = vmatpush1.bf16.msra.mxu0 0
    %2772 = vmatprep.subr.bf16.mxu0 0
    %2773 = vmatpush1.bf16.msra.mxu0 0
    %2774 = vmatprep.subr.bf16.mxu0 0
    %2775 = vmatpush1.bf16.msra.mxu0 0
    %2776 = vmatprep.subr.bf16.mxu0 0
    %2777 = vmatpush1.bf16.msra.mxu0 0
    %2778 = vmatprep.subr.bf16.mxu0 0
    %2779 = vmatpush1.bf16.msra.mxu0 0
    %2780 = vmatprep.subr.bf16.mxu0 0
    %2781 = vmatpush1.bf16.msra.mxu0 0
    %2782 = vmatprep.subr.bf16.mxu0 0
    %2783 = vmatpush1.bf16.msra.mxu0 %v2766
    %2784 = vmatprep.subr.bf16.mxu0 0
    %2785 = vmatpush2.bf16.msra.mxu0 0
    %2786 = vmatprep.subr.bf16.mxu0 0
    %2787 = vmatpush2.bf16.msra.mxu0 0
    %2788 = vmatprep.subr.bf16.mxu0 0
    %2789 = vmatpush2.bf16.msra.mxu0 0
    %2790 = vmatprep.subr.bf16.mxu0 0
    %2791 = vmatpush2.bf16.msra.mxu0 0
    %2792 = vmatprep.subr.bf16.mxu0 0
    %2793 = vmatpush2.bf16.msra.mxu0 0
    %2794 = vmatprep.subr.bf16.mxu0 0
    %2795 = vmatpush2.bf16.msra.mxu0 0
    %2796 = vmatprep.subr.bf16.mxu0 0
    %2797 = vmatpush2.bf16.msra.mxu0 0
    %2798 = vmatprep.subr.bf16.mxu0 0
    %2799 = vmatpush2.bf16.msra.mxu0 0
    %2800 = vmatprep.mubr.bf16.mxu0 0
    %2801 = vmatmul.mubr.bf16.gmra.mxu0 %v2763
    %v2802 = vpop.f32.mrf.mxu0
    %v2803 = vadd.f32 0.0, %v2802
    %v2804 = vpop.f32.mrf.mxu0
    %v2805 = vpop.f32.mrf.mxu0
    %v2806 = vpop.f32.mrf.mxu0
    %2807 = vdwg.mxu0
    %2808 = vrot.lane.b32.xlu0 %v168, 40
    %v2809 = vpop.permute.xlu0 %2808
    %v2811 = vsel %vm175, %v2708, 0
    %v2814 = vsel %vm592, %v2809, 0
    %2816 = vmatprep.subr.bf16.mxu0 0
    %2817 = vmatpush1.bf16.msra.mxu0 0
    %2818 = vmatprep.subr.bf16.mxu0 0
    %2819 = vmatpush1.bf16.msra.mxu0 0
    %2820 = vmatprep.subr.bf16.mxu0 0
    %2821 = vmatpush1.bf16.msra.mxu0 0
    %2822 = vmatprep.subr.bf16.mxu0 0
    %2823 = vmatpush1.bf16.msra.mxu0 0
    %2824 = vmatprep.subr.bf16.mxu0 0
    %2825 = vmatpush1.bf16.msra.mxu0 0
    %2826 = vmatprep.subr.bf16.mxu0 0
    %2827 = vmatpush1.bf16.msra.mxu0 0
    %2828 = vmatprep.subr.bf16.mxu0 0
    %2829 = vmatpush1.bf16.msra.mxu0 0
    %2830 = vmatprep.subr.bf16.mxu0 0
    %2831 = vmatpush1.bf16.msra.mxu0 %v2814
    %2832 = vmatprep.subr.bf16.mxu0 0
    %2833 = vmatpush2.bf16.msra.mxu0 0
    %2834 = vmatprep.subr.bf16.mxu0 0
    %2835 = vmatpush2.bf16.msra.mxu0 0
    %2836 = vmatprep.subr.bf16.mxu0 0
    %2837 = vmatpush2.bf16.msra.mxu0 0
    %2838 = vmatprep.subr.bf16.mxu0 0
    %2839 = vmatpush2.bf16.msra.mxu0 0
    %2840 = vmatprep.subr.bf16.mxu0 0
    %2841 = vmatpush2.bf16.msra.mxu0 0
    %2842 = vmatprep.subr.bf16.mxu0 0
    %2843 = vmatpush2.bf16.msra.mxu0 0
    %2844 = vmatprep.subr.bf16.mxu0 0
    %2845 = vmatpush2.bf16.msra.mxu0 0
    %2846 = vmatprep.subr.bf16.mxu0 0
    %2847 = vmatpush2.bf16.msra.mxu0 0
    %2848 = vmatprep.mubr.bf16.mxu0 0
    %2849 = vmatmul.mubr.bf16.gmra.mxu0 %v2811
    %v2850 = vpop.f32.mrf.mxu0
    %v2851 = vadd.f32 0.0, %v2850
    %v2852 = vpop.f32.mrf.mxu0
    %v2853 = vpop.f32.mrf.mxu0
    %v2854 = vpop.f32.mrf.mxu0
    %2855 = vdwg.mxu0
    %2856 = vrot.lane.b32.xlu0 %v169, 40
    %v2857 = vpop.permute.xlu0 %2856
    %v2859 = vsel %vm175, %v2709, 0
    %v2862 = vsel %vm592, %v2857, 0
    %2864 = vmatprep.subr.bf16.mxu0 0
    %2865 = vmatpush1.bf16.msra.mxu0 0
    %2866 = vmatprep.subr.bf16.mxu0 0
    %2867 = vmatpush1.bf16.msra.mxu0 0
    %2868 = vmatprep.subr.bf16.mxu0 0
    %2869 = vmatpush1.bf16.msra.mxu0 0
    %2870 = vmatprep.subr.bf16.mxu0 0
    %2871 = vmatpush1.bf16.msra.mxu0 0
    %2872 = vmatprep.subr.bf16.mxu0 0
    %2873 = vmatpush1.bf16.msra.mxu0 0
    %2874 = vmatprep.subr.bf16.mxu0 0
    %2875 = vmatpush1.bf16.msra.mxu0 0
    %2876 = vmatprep.subr.bf16.mxu0 0
    %2877 = vmatpush1.bf16.msra.mxu0 0
    %2878 = vmatprep.subr.bf16.mxu0 0
    %2879 = vmatpush1.bf16.msra.mxu0 %v2862
    %2880 = vmatprep.subr.bf16.mxu0 0
    %2881 = vmatpush2.bf16.msra.mxu0 0
    %2882 = vmatprep.subr.bf16.mxu0 0
    %2883 = vmatpush2.bf16.msra.mxu0 0
    %2884 = vmatprep.subr.bf16.mxu0 0
    %2885 = vmatpush2.bf16.msra.mxu0 0
    %2886 = vmatprep.subr.bf16.mxu0 0
    %2887 = vmatpush2.bf16.msra.mxu0 0
    %2888 = vmatprep.subr.bf16.mxu0 0
    %2889 = vmatpush2.bf16.msra.mxu0 0
    %2890 = vmatprep.subr.bf16.mxu0 0
    %2891 = vmatpush2.bf16.msra.mxu0 0
    %2892 = vmatprep.subr.bf16.mxu0 0
    %2893 = vmatpush2.bf16.msra.mxu0 0
    %2894 = vmatprep.subr.bf16.mxu0 0
    %2895 = vmatpush2.bf16.msra.mxu0 0
    %2896 = vmatprep.mubr.bf16.mxu0 0
    %2897 = vmatmul.mubr.bf16.gmra.mxu0 %v2859
    %v2898 = vpop.f32.mrf.mxu0
    %v2899 = vadd.f32 0.0, %v2898
    %v2900 = vpop.f32.mrf.mxu0
    %v2901 = vpop.f32.mrf.mxu0
    %v2902 = vpop.f32.mrf.mxu0
    %2903 = vdwg.mxu0
    %2904 = vrot.lane.b32.xlu0 %v170, 40
    %v2905 = vpop.permute.xlu0 %2904
    %v2907 = vsel %vm175, %v2710, 0
    %v2910 = vsel %vm592, %v2905, 0
    %2912 = vmatprep.subr.bf16.mxu0 0
    %2913 = vmatpush1.bf16.msra.mxu0 0
    %2914 = vmatprep.subr.bf16.mxu0 0
    %2915 = vmatpush1.bf16.msra.mxu0 0
    %2916 = vmatprep.subr.bf16.mxu0 0
    %2917 = vmatpush1.bf16.msra.mxu0 0
    %2918 = vmatprep.subr.bf16.mxu0 0
    %2919 = vmatpush1.bf16.msra.mxu0 0
    %2920 = vmatprep.subr.bf16.mxu0 0
    %2921 = vmatpush1.bf16.msra.mxu0 0
    %2922 = vmatprep.subr.bf16.mxu0 0
    %2923 = vmatpush1.bf16.msra.mxu0 0
    %2924 = vmatprep.subr.bf16.mxu0 0
    %2925 = vmatpush1.bf16.msra.mxu0 0
    %2926 = vmatprep.subr.bf16.mxu0 0
    %2927 = vmatpush1.bf16.msra.mxu0 %v2910
    %2928 = vmatprep.subr.bf16.mxu0 0
    %2929 = vmatpush2.bf16.msra.mxu0 0
    %2930 = vmatprep.subr.bf16.mxu0 0
    %2931 = vmatpush2.bf16.msra.mxu0 0
    %2932 = vmatprep.subr.bf16.mxu0 0
    %2933 = vmatpush2.bf16.msra.mxu0 0
    %2934 = vmatprep.subr.bf16.mxu0 0
    %2935 = vmatpush2.bf16.msra.mxu0 0
    %2936 = vmatprep.subr.bf16.mxu0 0
    %2937 = vmatpush2.bf16.msra.mxu0 0
    %2938 = vmatprep.subr.bf16.mxu0 0
    %2939 = vmatpush2.bf16.msra.mxu0 0
    %2940 = vmatprep.subr.bf16.mxu0 0
    %2941 = vmatpush2.bf16.msra.mxu0 0
    %2942 = vmatprep.subr.bf16.mxu0 0
    %2943 = vmatpush2.bf16.msra.mxu0 0
    %2944 = vmatprep.mubr.bf16.mxu0 0
    %2945 = vmatmul.mubr.bf16.gmra.mxu0 %v2907
    %v2946 = vpop.f32.mrf.mxu0
    %v2947 = vadd.f32 0.0, %v2946
    %v2948 = vpop.f32.mrf.mxu0
    %v2949 = vpop.f32.mrf.mxu0
    %v2950 = vpop.f32.mrf.mxu0
    %2951 = vdwg.mxu0
    %2952 = vrot.lane.b32.xlu0 %v171, 40
    %v2953 = vpop.permute.xlu0 %2952
    %v2955 = vsel %vm175, %v2711, 0
    %v2958 = vsel %vm592, %v2953, 0
    %2960 = vmatprep.subr.bf16.mxu0 0
    %2961 = vmatpush1.bf16.msra.mxu0 0
    %2962 = vmatprep.subr.bf16.mxu0 0
    %2963 = vmatpush1.bf16.msra.mxu0 0
    %2964 = vmatprep.subr.bf16.mxu0 0
    %2965 = vmatpush1.bf16.msra.mxu0 0
    %2966 = vmatprep.subr.bf16.mxu0 0
    %2967 = vmatpush1.bf16.msra.mxu0 0
    %2968 = vmatprep.subr.bf16.mxu0 0
    %2969 = vmatpush1.bf16.msra.mxu0 0
    %2970 = vmatprep.subr.bf16.mxu0 0
    %2971 = vmatpush1.bf16.msra.mxu0 0
    %2972 = vmatprep.subr.bf16.mxu0 0
    %2973 = vmatpush1.bf16.msra.mxu0 0
    %2974 = vmatprep.subr.bf16.mxu0 0
    %2975 = vmatpush1.bf16.msra.mxu0 %v2958
    %2976 = vmatprep.subr.bf16.mxu0 0
    %2977 = vmatpush2.bf16.msra.mxu0 0
    %2978 = vmatprep.subr.bf16.mxu0 0
    %2979 = vmatpush2.bf16.msra.mxu0 0
    %2980 = vmatprep.subr.bf16.mxu0 0
    %2981 = vmatpush2.bf16.msra.mxu0 0
    %2982 = vmatprep.subr.bf16.mxu0 0
    %2983 = vmatpush2.bf16.msra.mxu0 0
    %2984 = vmatprep.subr.bf16.mxu0 0
    %2985 = vmatpush2.bf16.msra.mxu0 0
    %2986 = vmatprep.subr.bf16.mxu0 0
    %2987 = vmatpush2.bf16.msra.mxu0 0
    %2988 = vmatprep.subr.bf16.mxu0 0
    %2989 = vmatpush2.bf16.msra.mxu0 0
    %2990 = vmatprep.subr.bf16.mxu0 0
    %2991 = vmatpush2.bf16.msra.mxu0 0
    %2992 = vmatprep.mubr.bf16.mxu0 0
    %2993 = vmatmul.mubr.bf16.gmra.mxu0 %v2955
    %v2994 = vpop.f32.mrf.mxu0
    %v2995 = vadd.f32 0.0, %v2994
    %v2996 = vpop.f32.mrf.mxu0
    %v2997 = vpop.f32.mrf.mxu0
    %v2998 = vpop.f32.mrf.mxu0
    %2999 = vdwg.mxu0
    %v3000 = vld [vmem:[%s7] sm:$0x3f]
    %3007 = vrot.lane.b32.xlu0 %v1339, 8
    %v3008 = vpop.permute.xlu0 %3007
    %3009 = vrot.lane.b32.xlu0 %v1387, 8
    %v3010 = vpop.permute.xlu0 %3009
    %3011 = vrot.lane.b32.xlu0 %v1435, 8
    %v3012 = vpop.permute.xlu0 %3011
    %3013 = vrot.lane.b32.xlu0 %v1483, 8
    %v3014 = vpop.permute.xlu0 %3013
    %3015 = vrot.lane.b32.xlu0 %v1531, 8
    %v3016 = vpop.permute.xlu0 %3015
    %3017 = vrot.lane.b32.xlu0 %v1579, 8
    %v3018 = vpop.permute.xlu0 %3017
    %3031 = vrot.lane.b32.xlu0 %v2047, 16
    %v3032 = vpop.permute.xlu0 %3031
    %3033 = vrot.lane.b32.xlu0 %v2095, 16
    %v3034 = vpop.permute.xlu0 %3033
    %3035 = vrot.lane.b32.xlu0 %v2143, 16
    %v3036 = vpop.permute.xlu0 %3035
    %3037 = vrot.lane.b32.xlu0 %v2191, 16
    %v3038 = vpop.permute.xlu0 %3037
    %3039 = vrot.lane.b32.xlu0 %v2239, 16
    %v3040 = vpop.permute.xlu0 %3039
    %3041 = vrot.lane.b32.xlu0 %v2287, 16
    %v3042 = vpop.permute.xlu0 %3041
    %3055 = vrot.lane.b32.xlu0 %v2755, 24
    %v3056 = vpop.permute.xlu0 %3055
    %3057 = vrot.lane.b32.xlu0 %v2803, 24
    %v3058 = vpop.permute.xlu0 %3057
    %3059 = vrot.lane.b32.xlu0 %v2851, 24
    %v3060 = vpop.permute.xlu0 %3059
    %3061 = vrot.lane.b32.xlu0 %v2899, 24
    %v3062 = vpop.permute.xlu0 %3061
    %3063 = vrot.lane.b32.xlu0 %v2947, 24
    %v3064 = vpop.permute.xlu0 %3063
    %3065 = vrot.lane.b32.xlu0 %v2995, 24
    %v3066 = vpop.permute.xlu0 %3065
    %v3073 = vsel %vm175, %v631, %v3008
    %v3074 = vsel %vm175, %v679, %v3010
    %v3075 = vsel %vm175, %v727, %v3012
    %v3076 = vsel %vm175, %v775, %v3014
    %v3077 = vsel %vm175, %v823, %v3016
    %v3078 = vsel %vm175, %v871, %v3018
    %vm3079 = vcmask 130048
    %v3080 = vsel %vm3079, %v3073, %v3032
    %v3081 = vsel %vm3079, %v3074, %v3034
    %v3082 = vsel %vm3079, %v3075, %v3036
    %v3083 = vsel %vm3079, %v3076, %v3038
    %v3084 = vsel %vm3079, %v3077, %v3040
    %v3085 = vsel %vm3079, %v3078, %v3042
    %vm3086 = vcmask 195584
    %v3087 = vsel %vm3086, %v3080, %v3056
    %v3088 = vsel %vm3086, %v3081, %v3058
    %v3089 = vsel %vm3086, %v3082, %v3060
    %v3090 = vsel %vm3086, %v3083, %v3062
    %v3091 = vsel %vm3086, %v3084, %v3064
    %v3092 = vsel %vm3086, %v3085, %v3066
    %v3093 = vpack.c.bf16 %v3088, %v3087
    %v3094 = vpack.c.bf16 %v3090, %v3089
    %v3095 = vpack.c.bf16 %v3092, %v3091
    %v3096 = vld [vmem:[%s4] sm:$0xf]
    %v3097 = vld [vmem:[%s4 + $0x4] sm:$0xf]
    %v3098 = vld [vmem:[%s4 + $0x8] sm:$0xf]
    %v3099 = vld [vmem:[%s4 + $0xc] sm:$0xf]
    %v3100 = vlaneseq
    %v3101 = vshrl.u32 %v3100, 7
    %v3102 = vsub.s32 0, %v3101
    %v3103 = vrot.slane %v3000, %v3102
    %v3108 = vunpack.c.l.b16 %v3096
    %v3109 = vunpack.c.l.b16 %v3097
    %v3110 = vunpack.c.l.b16 %v3098
    %v3111 = vunpack.c.l.b16 %v3099
    %v3112 = vpack.c.b16 %v3109, %v3108
    %v3113 = vpack.c.b16 %v3111, %v3110
    %v3117 = vsel %vm99, %v3093, 0
    %v3120 = vsel %vm99, %v3094, 0
    %v3123 = vsel %vm99, %v3095, 0
    %3125 = vmatprep.subr.bf16.mxu0 0
    %3126 = vmatpush1.bf16.msra.mxu0 0
    %3127 = vmatprep.subr.bf16.mxu0 0
    %3128 = vmatpush1.bf16.msra.mxu0 0
    %3129 = vmatprep.subr.bf16.mxu0 0
    %3130 = vmatpush1.bf16.msra.mxu0 0
    %3131 = vmatprep.subr.bf16.mxu0 0
    %3132 = vmatpush1.bf16.msra.mxu0 0
    %3133 = vmatprep.subr.bf16.mxu0 0
    %3134 = vmatpush1.bf16.msra.mxu0 0
    %3135 = vmatprep.subr.bf16.mxu0 0
    %3136 = vmatpush1.bf16.msra.mxu0 0
    %3137 = vmatprep.subr.bf16.mxu0 0
    %3138 = vmatpush1.bf16.msra.mxu0 %v3113
    %3139 = vmatprep.subr.bf16.mxu0 0
    %3140 = vmatpush1.bf16.msra.mxu0 %v3112
    %3141 = vmatprep.subr.bf16.mxu0 0
    %3142 = vmatpush2.bf16.msra.mxu0 0
    %3143 = vmatprep.subr.bf16.mxu0 0
    %3144 = vmatpush2.bf16.msra.mxu0 0
    %3145 = vmatprep.subr.bf16.mxu0 0
    %3146 = vmatpush2.bf16.msra.mxu0 0
    %3147 = vmatprep.subr.bf16.mxu0 0
    %3148 = vmatpush2.bf16.msra.mxu0 0
    %3149 = vmatprep.subr.bf16.mxu0 0
    %3150 = vmatpush2.bf16.msra.mxu0 0
    %3151 = vmatprep.subr.bf16.mxu0 0
    %3152 = vmatpush2.bf16.msra.mxu0 0
    %3153 = vmatprep.subr.bf16.mxu0 0
    %3154 = vmatpush2.bf16.msra.mxu0 0
    %3155 = vmatprep.subr.bf16.mxu0 0
    %3156 = vmatpush2.bf16.msra.mxu0 0
    %3157 = vmatprep.mubr.bf16.mxu0 0
    %3158 = vmatmul.mubr.bf16.gmra.mxu0 %v3117
    %v3159 = vpop.f32.mrf.mxu0
    %v3160 = vadd.f32 %v3103, %v3159
    %v3161 = vpop.f32.mrf.mxu0
    %v3162 = vpop.f32.mrf.mxu0
    %v3163 = vadd.f32 %v3103, %v3162
    %v3164 = vpop.f32.mrf.mxu0
    %3165 = vmatprep.mubr.bf16.mxu0 0
    %3166 = vmatmul.mubr.bf16.gmra.mxu0 %v3120
    %v3167 = vpop.f32.mrf.mxu0
    %v3168 = vadd.f32 %v3103, %v3167
    %v3169 = vpop.f32.mrf.mxu0
    %v3170 = vpop.f32.mrf.mxu0
    %v3171 = vadd.f32 %v3103, %v3170
    %v3172 = vpop.f32.mrf.mxu0
    %3173 = vmatprep.mubr.bf16.mxu0 0
    %3174 = vmatmul.mubr.bf16.gmra.mxu0 %v3123
    %v3175 = vpop.f32.mrf.mxu0
    %v3176 = vadd.f32 %v3103, %v3175
    %v3177 = vpop.f32.mrf.mxu0
    %v3178 = vpop.f32.mrf.mxu0
    %v3179 = vadd.f32 %v3103, %v3178
    %v3180 = vpop.f32.mrf.mxu0
    %3181 = vdwg.mxu0
    %v3182 = vadd.f32 %v3160, %v67
    %v3183 = vadd.f32 %v3163, %v68
    %v3184 = vadd.f32 %v3168, %v69
    %v3185 = vadd.f32 %v3171, %v70
    %v3186 = vadd.f32 %v3176, %v71
    %v3187 = vadd.f32 %v3179, %v72
    %v3188 = vsel %vm99, %v3182, 0.0
    %3189 = vadd.xlane.f32.xlu0 %v3188
    %v3190 = vpop.xlane.xlu0 %3189
    %v3191 = vsel %vm99, %v3183, 0.0
    %3192 = vadd.xlane.f32.xlu0 %v3191
    %v3193 = vpop.xlane.xlu0 %3192
    %v3194 = vsel %vm99, %v3184, 0.0
    %3195 = vadd.xlane.f32.xlu0 %v3194
    %v3196 = vpop.xlane.xlu0 %3195
    %v3197 = vsel %vm99, %v3185, 0.0
    %3198 = vadd.xlane.f32.xlu0 %v3197
    %v3199 = vpop.xlane.xlu0 %3198
    %v3200 = vsel %vm99, %v3186, 0.0
    %3201 = vadd.xlane.f32.xlu0 %v3200
    %v3202 = vpop.xlane.xlu0 %3201
    %v3203 = vsel %vm99, %v3187, 0.0
    %3204 = vadd.xlane.f32.xlu0 %v3203
    %v3205 = vpop.xlane.xlu0 %3204
    %v3206 = vrcp.pop 32.0
    %v3207 = vmul.f32 %v3190, %v3206
    %v3208 = vmul.f32 %v3193, %v3206
    %v3209 = vmul.f32 %v3196, %v3206
    %v3210 = vmul.f32 %v3199, %v3206
    %v3211 = vmul.f32 %v3202, %v3206
    %v3212 = vmul.f32 %v3205, %v3206
    %v3213 = vsub.f32 %v3182, %v3207
    %v3214 = vsub.f32 %v3183, %v3208
    %v3215 = vsub.f32 %v3184, %v3209
    %v3216 = vsub.f32 %v3185, %v3210
    %v3217 = vsub.f32 %v3186, %v3211
    %v3218 = vsub.f32 %v3187, %v3212
    %v3219 = vmul.f32 %v3213, %v3213
    %v3220 = vmul.f32 %v3214, %v3214
    %v3221 = vmul.f32 %v3215, %v3215
    %v3222 = vmul.f32 %v3216, %v3216
    %v3223 = vmul.f32 %v3217, %v3217
    %v3224 = vmul.f32 %v3218, %v3218
    %v3225 = vsel %vm99, %v3219, 0.0
    %3226 = vadd.xlane.f32.xlu0 %v3225
    %v3227 = vpop.xlane.xlu0 %3226
    %v3228 = vsel %vm99, %v3220, 0.0
    %3229 = vadd.xlane.f32.xlu0 %v3228
    %v3230 = vpop.xlane.xlu0 %3229
    %v3231 = vsel %vm99, %v3221, 0.0
    %3232 = vadd.xlane.f32.xlu0 %v3231
    %v3233 = vpop.xlane.xlu0 %3232
    %v3234 = vsel %vm99, %v3222, 0.0
    %3235 = vadd.xlane.f32.xlu0 %v3234
    %v3236 = vpop.xlane.xlu0 %3235
    %v3237 = vsel %vm99, %v3223, 0.0
    %3238 = vadd.xlane.f32.xlu0 %v3237
    %v3239 = vpop.xlane.xlu0 %3238
    %v3240 = vsel %vm99, %v3224, 0.0
    %3241 = vadd.xlane.f32.xlu0 %v3240
    %v3242 = vpop.xlane.xlu0 %3241
    %v3243 = vmul.f32 %v3227, %v3206
    %v3244 = vmul.f32 %v3230, %v3206
    %v3245 = vmul.f32 %v3233, %v3206
    %v3246 = vmul.f32 %v3236, %v3206
    %v3247 = vmul.f32 %v3239, %v3206
    %v3248 = vmul.f32 %v3242, %v3206
    %v3249 = vadd.f32 %v3243, 1e-05
    %v3250 = vadd.f32 %v3244, 1e-05
    %v3251 = vadd.f32 %v3245, 1e-05
    %v3252 = vadd.f32 %v3246, 1e-05
    %v3253 = vadd.f32 %v3247, 1e-05
    %v3254 = vadd.f32 %v3248, 1e-05
    %v3255 = vrsqrt.pop %v3249
    %v3256 = vrsqrt.pop %v3250
    %v3257 = vrsqrt.pop %v3251
    %v3258 = vrsqrt.pop %v3252
    %v3259 = vrsqrt.pop %v3253
    %v3260 = vrsqrt.pop %v3254
    %v3261 = vmul.f32 %v3213, %v3255
    %v3262 = vmul.f32 %v3214, %v3256
    %v3263 = vmul.f32 %v3215, %v3257
    %v3264 = vmul.f32 %v3216, %v3258
    %v3265 = vmul.f32 %v3217, %v3259
    %v3266 = vmul.f32 %v3218, %v3260
    %v3267 = vlaneseq
    %v3268 = vshrl.u32 %v3267, 7
    %v3269 = vsub.s32 1, %v3268
    %v3270 = vrot.slane %v3000, %v3269
    %v3271 = vmul.f32 %v3261, %v3270
    %v3272 = vmul.f32 %v3262, %v3270
    %v3273 = vmul.f32 %v3263, %v3270
    %v3274 = vmul.f32 %v3264, %v3270
    %v3275 = vmul.f32 %v3265, %v3270
    %v3276 = vmul.f32 %v3266, %v3270
    %v3277 = vlaneseq
    %v3278 = vshrl.u32 %v3277, 7
    %v3279 = vsub.s32 2, %v3278
    %v3280 = vrot.slane %v3000, %v3279
    %v3281 = vadd.f32 %v3271, %v3280
    %v3282 = vadd.f32 %v3272, %v3280
    %v3283 = vadd.f32 %v3273, %v3280
    %v3284 = vadd.f32 %v3274, %v3280
    %v3285 = vadd.f32 %v3275, %v3280
    %v3286 = vadd.f32 %v3276, %v3280
    %v3287 = vpack.c.bf16 %v3282, %v3281
    %v3288 = vpack.c.bf16 %v3284, %v3283
    %v3289 = vpack.c.bf16 %v3286, %v3285
    %v3290 = vld [vmem:[#allocation5] sm:$0xf]
    %v3291 = vld [vmem:[#allocation5 + $0x4] sm:$0xf]
    %v3292 = vld [vmem:[#allocation5 + $0x8] sm:$0xf]
    %v3293 = vld [vmem:[#allocation5 + $0xc] sm:$0xf]
    %v3294 = vld [vmem:[%s8] sm:$0x1]
    %v3296 = vlaneseq
    %v3297 = vshrl.u32 %v3296, 7
    %v3298 = vsub.s32 0, %v3297
    %v3299 = vrot.slane %v3294, %v3298
    %v3305 = vunpack.c.l.b16 %v3290
    %v3306 = vunpack.c.l.b16 %v3291
    %v3307 = vunpack.c.l.b16 %v3292
    %v3308 = vunpack.c.l.b16 %v3293
    %v3309 = vpack.c.b16 %v3306, %v3305
    %v3310 = vpack.c.b16 %v3308, %v3307
    %v3314 = vsel %vm99, %v3287, 0
    %v3317 = vsel %vm99, %v3288, 0
    %v3320 = vsel %vm99, %v3289, 0
    %3322 = vmatprep.subr.bf16.mxu0 0
    %3323 = vmatpush1.bf16.msra.mxu0 0
    %3324 = vmatprep.subr.bf16.mxu0 0
    %3325 = vmatpush1.bf16.msra.mxu0 0
    %3326 = vmatprep.subr.bf16.mxu0 0
    %3327 = vmatpush1.bf16.msra.mxu0 0
    %3328 = vmatprep.subr.bf16.mxu0 0
    %3329 = vmatpush1.bf16.msra.mxu0 0
    %3330 = vmatprep.subr.bf16.mxu0 0
    %3331 = vmatpush1.bf16.msra.mxu0 0
    %3332 = vmatprep.subr.bf16.mxu0 0
    %3333 = vmatpush1.bf16.msra.mxu0 0
    %3334 = vmatprep.subr.bf16.mxu0 0
    %3335 = vmatpush1.bf16.msra.mxu0 %v3310
    %3336 = vmatprep.subr.bf16.mxu0 0
    %3337 = vmatpush1.bf16.msra.mxu0 %v3309
    %3338 = vmatprep.subr.bf16.mxu0 0
    %3339 = vmatpush2.bf16.msra.mxu0 0
    %3340 = vmatprep.subr.bf16.mxu0 0
    %3341 = vmatpush2.bf16.msra.mxu0 0
    %3342 = vmatprep.subr.bf16.mxu0 0
    %3343 = vmatpush2.bf16.msra.mxu0 0
    %3344 = vmatprep.subr.bf16.mxu0 0
    %3345 = vmatpush2.bf16.msra.mxu0 0
    %3346 = vmatprep.subr.bf16.mxu0 0
    %3347 = vmatpush2.bf16.msra.mxu0 0
    %3348 = vmatprep.subr.bf16.mxu0 0
    %3349 = vmatpush2.bf16.msra.mxu0 0
    %3350 = vmatprep.subr.bf16.mxu0 0
    %3351 = vmatpush2.bf16.msra.mxu0 0
    %3352 = vmatprep.subr.bf16.mxu0 0
    %3353 = vmatpush2.bf16.msra.mxu0 0
    %3354 = vmatprep.mubr.bf16.mxu0 0
    %3355 = vmatmul.mubr.bf16.gmra.mxu0 %v3314
    %v3356 = vpop.f32.mrf.mxu0
    %v3357 = vadd.f32 %v3299, %v3356
    %v3358 = vpop.f32.mrf.mxu0
    %v3359 = vpop.f32.mrf.mxu0
    %v3360 = vadd.f32 %v3299, %v3359
    %v3361 = vpop.f32.mrf.mxu0
    %3362 = vmatprep.mubr.bf16.mxu0 0
    %3363 = vmatmul.mubr.bf16.gmra.mxu0 %v3317
    %v3364 = vpop.f32.mrf.mxu0
    %v3365 = vadd.f32 %v3299, %v3364
    %v3366 = vpop.f32.mrf.mxu0
    %v3367 = vpop.f32.mrf.mxu0
    %v3368 = vadd.f32 %v3299, %v3367
    %v3369 = vpop.f32.mrf.mxu0
    %3370 = vmatprep.mubr.bf16.mxu0 0
    %3371 = vmatmul.mubr.bf16.gmra.mxu0 %v3320
    %v3372 = vpop.f32.mrf.mxu0
    %v3373 = vadd.f32 %v3299, %v3372
    %v3374 = vpop.f32.mrf.mxu0
    %v3375 = vpop.f32.mrf.mxu0
    %v3376 = vadd.f32 %v3299, %v3375
    %v3377 = vpop.f32.mrf.mxu0
    %3378 = vdwg.mxu0
    %v3379 = vmax.f32 %v3357, 0.0
    %v3380 = vmax.f32 %v3360, 0.0
    %v3381 = vmax.f32 %v3365, 0.0
    %v3382 = vmax.f32 %v3368, 0.0
    %v3383 = vmax.f32 %v3373, 0.0
    %v3384 = vmax.f32 %v3376, 0.0
    %v3385 = vpack.c.bf16 %v3380, %v3379
    %v3386 = vpack.c.bf16 %v3382, %v3381
    %v3387 = vpack.c.bf16 %v3384, %v3383
    %v3388 = vld [vmem:[%s6] sm:$0xf]
    %v3389 = vld [vmem:[%s6 + $0x4] sm:$0xf]
    %v3390 = vld [vmem:[%s6 + $0x8] sm:$0xf]
    %v3391 = vld [vmem:[%s6 + $0xc] sm:$0xf]
    %v3392 = vld [vmem:[%s6 + $0x10] sm:$0xf]
    %v3393 = vld [vmem:[%s6 + $0x14] sm:$0xf]
    %v3394 = vld [vmem:[%s6 + $0x18] sm:$0xf]
    %v3395 = vld [vmem:[%s6 + $0x1c] sm:$0xf]
    %v3396 = vld [vmem:[%s6 + $0x20] sm:$0xf]
    %v3397 = vld [vmem:[%s6 + $0x24] sm:$0xf]
    %v3398 = vld [vmem:[%s6 + $0x28] sm:$0xf]
    %v3399 = vld [vmem:[%s6 + $0x2c] sm:$0xf]
    %v3400 = vld [vmem:[%s6 + $0x30] sm:$0xf]
    %v3401 = vld [vmem:[%s6 + $0x34] sm:$0xf]
    %v3402 = vld [vmem:[%s6 + $0x38] sm:$0xf]
    %v3403 = vld [vmem:[%s6 + $0x3c] sm:$0xf]
    %v3404 = vlaneseq
    %v3405 = vshrl.u32 %v3404, 7
    %v3406 = vsub.s32 5, %v3405
    %v3407 = vrot.slane %v3000, %v3406
    %v3424 = vunpack.c.l.b16 %v3388
    %v3425 = vunpack.c.l.b16 %v3389
    %v3426 = vunpack.c.l.b16 %v3390
    %v3427 = vunpack.c.l.b16 %v3391
    %v3428 = vunpack.c.l.b16 %v3392
    %v3429 = vunpack.c.l.b16 %v3393
    %v3430 = vunpack.c.l.b16 %v3394
    %v3431 = vunpack.c.l.b16 %v3395
    %v3432 = vunpack.c.l.b16 %v3396
    %v3433 = vunpack.c.l.b16 %v3397
    %v3434 = vunpack.c.l.b16 %v3398
    %v3435 = vunpack.c.l.b16 %v3399
    %v3436 = vunpack.c.l.b16 %v3400
    %v3437 = vunpack.c.l.b16 %v3401
    %v3438 = vunpack.c.l.b16 %v3402
    %v3439 = vunpack.c.l.b16 %v3403
    %v3440 = vpack.c.b16 %v3425, %v3424
    %v3441 = vpack.c.b16 %v3427, %v3426
    %v3442 = vpack.c.b16 %v3429, %v3428
    %v3443 = vpack.c.b16 %v3431, %v3430
    %v3444 = vpack.c.b16 %v3433, %v3432
    %v3445 = vpack.c.b16 %v3435, %v3434
    %v3446 = vpack.c.b16 %v3437, %v3436
    %v3447 = vpack.c.b16 %v3439, %v3438
    %3456 = vmatprep.subr.bf16.mxu0 0
    %3457 = vmatpush1.bf16.msra.mxu0 %v3447
    %3458 = vmatprep.subr.bf16.mxu0 0
    %3459 = vmatpush1.bf16.msra.mxu0 %v3446
    %3460 = vmatprep.subr.bf16.mxu0 0
    %3461 = vmatpush1.bf16.msra.mxu0 %v3445
    %3462 = vmatprep.subr.bf16.mxu0 0
    %3463 = vmatpush1.bf16.msra.mxu0 %v3444
    %3464 = vmatprep.subr.bf16.mxu0 0
    %3465 = vmatpush1.bf16.msra.mxu0 %v3443
    %3466 = vmatprep.subr.bf16.mxu0 0
    %3467 = vmatpush1.bf16.msra.mxu0 %v3442
    %3468 = vmatprep.subr.bf16.mxu0 0
    %3469 = vmatpush1.bf16.msra.mxu0 %v3441
    %3470 = vmatprep.subr.bf16.mxu0 0
    %3471 = vmatpush1.bf16.msra.mxu0 %v3440
    %3472 = vmatprep.subr.bf16.mxu0 0
    %3473 = vmatpush2.bf16.msra.mxu0 0
    %3474 = vmatprep.subr.bf16.mxu0 0
    %3475 = vmatpush2.bf16.msra.mxu0 0
    %3476 = vmatprep.subr.bf16.mxu0 0
    %3477 = vmatpush2.bf16.msra.mxu0 0
    %3478 = vmatprep.subr.bf16.mxu0 0
    %3479 = vmatpush2.bf16.msra.mxu0 0
    %3480 = vmatprep.subr.bf16.mxu0 0
    %3481 = vmatpush2.bf16.msra.mxu0 0
    %3482 = vmatprep.subr.bf16.mxu0 0
    %3483 = vmatpush2.bf16.msra.mxu0 0
    %3484 = vmatprep.subr.bf16.mxu0 0
    %3485 = vmatpush2.bf16.msra.mxu0 0
    %3486 = vmatprep.subr.bf16.mxu0 0
    %3487 = vmatpush2.bf16.msra.mxu0 0
    %3488 = vmatprep.mubr.bf16.mxu0 0
    %3489 = vmatmul.mubr.bf16.gmra.mxu0 %v3385
    %v3490 = vpop.f32.mrf.mxu0
    %v3491 = vadd.f32 %v3407, %v3490
    %v3492 = vpop.f32.mrf.mxu0
    %v3493 = vpop.f32.mrf.mxu0
    %v3494 = vadd.f32 %v3407, %v3493
    %v3495 = vpop.f32.mrf.mxu0
    %3496 = vmatprep.mubr.bf16.mxu0 0
    %3497 = vmatmul.mubr.bf16.gmra.mxu0 %v3386
    %v3498 = vpop.f32.mrf.mxu0
    %v3499 = vadd.f32 %v3407, %v3498
    %v3500 = vpop.f32.mrf.mxu0
    %v3501 = vpop.f32.mrf.mxu0
    %v3502 = vadd.f32 %v3407, %v3501
    %v3503 = vpop.f32.mrf.mxu0
    %3504 = vmatprep.mubr.bf16.mxu0 0
    %3505 = vmatmul.mubr.bf16.gmra.mxu0 %v3387
    %v3506 = vpop.f32.mrf.mxu0
    %v3507 = vadd.f32 %v3407, %v3506
    %v3508 = vpop.f32.mrf.mxu0
    %v3509 = vpop.f32.mrf.mxu0
    %v3510 = vadd.f32 %v3407, %v3509
    %v3511 = vpop.f32.mrf.mxu0
    %3512 = vdwg.mxu0
    %v3513 = vadd.f32 %v3281, %v3491
    %v3514 = vadd.f32 %v3282, %v3494
    %v3515 = vadd.f32 %v3283, %v3499
    %v3516 = vadd.f32 %v3284, %v3502
    %v3517 = vadd.f32 %v3285, %v3507
    %v3518 = vadd.f32 %v3286, %v3510
    %v3519 = vsel %vm99, %v3513, 0.0
    %3520 = vadd.xlane.f32.xlu0 %v3519
    %v3521 = vpop.xlane.xlu0 %3520
    %v3522 = vsel %vm99, %v3514, 0.0
    %3523 = vadd.xlane.f32.xlu0 %v3522
    %v3524 = vpop.xlane.xlu0 %3523
    %v3525 = vsel %vm99, %v3515, 0.0
    %3526 = vadd.xlane.f32.xlu0 %v3525
    %v3527 = vpop.xlane.xlu0 %3526
    %v3528 = vsel %vm99, %v3516, 0.0
    %3529 = vadd.xlane.f32.xlu0 %v3528
    %v3530 = vpop.xlane.xlu0 %3529
    %v3531 = vsel %vm99, %v3517, 0.0
    %3532 = vadd.xlane.f32.xlu0 %v3531
    %v3533 = vpop.xlane.xlu0 %3532
    %v3534 = vsel %vm99, %v3518, 0.0
    %3535 = vadd.xlane.f32.xlu0 %v3534
    %v3536 = vpop.xlane.xlu0 %3535
    %v3537 = vmul.f32 %v3521, %v3206
    %v3538 = vmul.f32 %v3524, %v3206
    %v3539 = vmul.f32 %v3527, %v3206
    %v3540 = vmul.f32 %v3530, %v3206
    %v3541 = vmul.f32 %v3533, %v3206
    %v3542 = vmul.f32 %v3536, %v3206
    %v3543 = vsub.f32 %v3513, %v3537
    %v3544 = vsub.f32 %v3514, %v3538
    %v3545 = vsub.f32 %v3515, %v3539
    %v3546 = vsub.f32 %v3516, %v3540
    %v3547 = vsub.f32 %v3517, %v3541
    %v3548 = vsub.f32 %v3518, %v3542
    %v3549 = vmul.f32 %v3543, %v3543
    %v3550 = vmul.f32 %v3544, %v3544
    %v3551 = vmul.f32 %v3545, %v3545
    %v3552 = vmul.f32 %v3546, %v3546
    %v3553 = vmul.f32 %v3547, %v3547
    %v3554 = vmul.f32 %v3548, %v3548
    %v3555 = vsel %vm99, %v3549, 0.0
    %3556 = vadd.xlane.f32.xlu0 %v3555
    %v3557 = vpop.xlane.xlu0 %3556
    %v3558 = vsel %vm99, %v3550, 0.0
    %3559 = vadd.xlane.f32.xlu0 %v3558
    %v3560 = vpop.xlane.xlu0 %3559
    %v3561 = vsel %vm99, %v3551, 0.0
    %3562 = vadd.xlane.f32.xlu0 %v3561
    %v3563 = vpop.xlane.xlu0 %3562
    %v3564 = vsel %vm99, %v3552, 0.0
    %3565 = vadd.xlane.f32.xlu0 %v3564
    %v3566 = vpop.xlane.xlu0 %3565
    %v3567 = vsel %vm99, %v3553, 0.0
    %3568 = vadd.xlane.f32.xlu0 %v3567
    %v3569 = vpop.xlane.xlu0 %3568
    %v3570 = vsel %vm99, %v3554, 0.0
    %3571 = vadd.xlane.f32.xlu0 %v3570
    %v3572 = vpop.xlane.xlu0 %3571
    %v3573 = vmul.f32 %v3557, %v3206
    %v3574 = vmul.f32 %v3560, %v3206
    %v3575 = vmul.f32 %v3563, %v3206
    %v3576 = vmul.f32 %v3566, %v3206
    %v3577 = vmul.f32 %v3569, %v3206
    %v3578 = vmul.f32 %v3572, %v3206
    %v3579 = vadd.f32 %v3573, 1e-05
    %v3580 = vadd.f32 %v3574, 1e-05
    %v3581 = vadd.f32 %v3575, 1e-05
    %v3582 = vadd.f32 %v3576, 1e-05
    %v3583 = vadd.f32 %v3577, 1e-05
    %v3584 = vadd.f32 %v3578, 1e-05
    %v3585 = vrsqrt.pop %v3579
    %v3586 = vrsqrt.pop %v3580
    %v3587 = vrsqrt.pop %v3581
    %v3588 = vrsqrt.pop %v3582
    %v3589 = vrsqrt.pop %v3583
    %v3590 = vrsqrt.pop %v3584
    %v3591 = vmul.f32 %v3543, %v3585
    %v3592 = vmul.f32 %v3544, %v3586
    %v3593 = vmul.f32 %v3545, %v3587
    %v3594 = vmul.f32 %v3546, %v3588
    %v3595 = vmul.f32 %v3547, %v3589
    %v3596 = vmul.f32 %v3548, %v3590
    %v3597 = vlaneseq
    %v3598 = vshrl.u32 %v3597, 7
    %v3599 = vsub.s32 3, %v3598
    %v3600 = vrot.slane %v3000, %v3599
    %v3601 = vmul.f32 %v3591, %v3600
    %v3602 = vmul.f32 %v3592, %v3600
    %v3603 = vmul.f32 %v3593, %v3600
    %v3604 = vmul.f32 %v3594, %v3600
    %v3605 = vmul.f32 %v3595, %v3600
    %v3606 = vmul.f32 %v3596, %v3600
    %v3607 = vlaneseq
    %v3608 = vshrl.u32 %v3607, 7
    %v3609 = vsub.s32 4, %v3608
    %v3610 = vrot.slane %v3000, %v3609
    %v3611 = vadd.f32 %v3601, %v3610
    %v3612 = vadd.f32 %v3602, %v3610
    %v3613 = vadd.f32 %v3603, %v3610
    %v3614 = vadd.f32 %v3604, %v3610
    %v3615 = vadd.f32 %v3605, %v3610
    %v3616 = vadd.f32 %v3606, %v3610
    %v3617 = vadd.f32 %v3611, %v67
    %v3618 = vadd.f32 %v3612, %v68
    %v3619 = vadd.f32 %v3613, %v69
    %v3620 = vadd.f32 %v3614, %v70
    %v3621 = vadd.f32 %v3615, %v71
    %v3622 = vadd.f32 %v3616, %v72
    %v3623 = vadd.f32 %v3617, %v3281
    %v3624 = vadd.f32 %v3618, %v3282
    %v3625 = vadd.f32 %v3619, %v3283
    %v3626 = vadd.f32 %v3620, %v3284
    %v3627 = vadd.f32 %v3621, %v3285
    %v3628 = vadd.f32 %v3622, %v3286
    %3629 = vst.msk [vmem:[#allocation7] sm:$0xff] %vm99, %v3623
    %3630 = vst.msk [vmem:[#allocation7 + $0x8] sm:$0xff] %vm99, %v3624
    %3631 = vst.msk [vmem:[#allocation7 + $0x10] sm:$0xff] %vm99, %v3625
    %3632 = vst.msk [vmem:[#allocation7 + $0x18] sm:$0xff] %vm99, %v3626
    %3633 = vst.msk [vmem:[#allocation7 + $0x20] sm:$0xff] %vm99, %v3627
    %3634 = vst.msk [vmem:[#allocation7 + $0x28] sm:$0xff] %vm99, %v3628
    // Predicated region
    $region46: #{tpu_custom_call.1} parent=1 // pred_check
      _
    $region47: #{tpu_custom_call.1} parent=1 // pred_check_branch
      %3636 = sbr.rel (0) target = $region49
    $region48: #{tpu_custom_call.1} parent=1 // pred_region
      %s3638 = ssub.s32 768, 768
      %3639 = vsyncadd [#allocation4], %s3638
      %s3640 = sshll.u32 [#allocation7], 4
      %s3641 = int_to_ptr.vmem [resolvable:$true] %s3640
      %3646 = dma.vmem_to_hbm [thread:$0]  %s3641, 768, %s9, [#allocation4], 128, 128, 8
    $region49: #{tpu_custom_call.1} parent=1 // pred_fallthru
      _
    // Predicated region
    $region50: #{tpu_custom_call.1} parent=1 // pred_check
      _
    $region51: #{tpu_custom_call.1} parent=1 // pred_check_branch
      %3648 = sbr.rel (0) target = $region53
    $region52: #{tpu_custom_call.1} parent=1 // pred_region
      %3649 = dma.done [#allocation4], 768
    $region53: #{tpu_custom_call.1} parent=1 // pred_fallthru
      _
    %3650 = vsyncpa [#allocation3], 1
    %3651 = vsyncpa [#allocation6], 1
    %3652 = vsyncpa [#allocation4], 1

</llo_original>
